<compile_context>
chip_gen: v7x
topology: tpu7x:2x2x1
jax: 0.10.0
libtpu: 0.0.40
codegen_flags: <defaults>
</compile_context>

<pallas_src>
import functools

import jax
import jax.numpy as jnp
from jax.experimental import pallas as pl
from jax.experimental.pallas import tpu as pltpu


# ----------------------------------------------------------------------------
# Fused kernel: GATConv (heads=1, slope=0.2, self-loops) + global mean pool
#               + LSTM input projection + unrolled LSTM + fc(cat([h, z])).
# ----------------------------------------------------------------------------
def generator_kernel(x_ref, adj_ref, w_ref, wad_ref, was_ref, bgat_ref,
                     wih_ref, blstm_ref, whh_ref, z_ref, wfch_ref, wfcz_ref,
                     bfc_ref, out_ref, *, batch, window, hidden_dim):
    G, N, F = x_ref.shape
    H = hidden_dim
    B, W = batch, window

    x3 = x_ref[...]                                    # (G, N, F)
    x2 = x3.reshape(G * N, F)

    # h = x @ W (GATConv linear has no bias) -- one 2D MXU push for all graphs.
    h2 = jnp.dot(x2, w_ref[...], preferred_element_type=jnp.float32)   # (G*N, H)
    h3 = h2.reshape(G, N, H)

    # Attention logits with the attention vectors folded into x-side weights:
    #   a_dst[g,i] = <h[g,i], a_dst> = x[g,i] @ (W a_dst^T)
    #   a_src[g,j] = <h[g,j], a_src> = x[g,j] @ (W a_src^T)
    a_d = jnp.dot(x2, wad_ref[...],
                  preferred_element_type=jnp.float32).reshape(G, N, 1)   # (G,N,1)
    was_b = jnp.broadcast_to(was_ref[...].reshape(1, 1, F), (G, 1, F))
    a_s = jnp.einsum('gof,gnf->gon', was_b, x3,
                     preferred_element_type=jnp.float32)                 # (G,1,N)

    # e[g,i,j] = LeakyReLU(a_dst[g,i] + a_src[g,j]), masked by adjacency.
    e = a_d + a_s                                      # (G, N, N)
    e = jnp.where(e > 0.0, e, 0.2 * e)
    e = jnp.where(adj_ref[...] > 0.0, e, -1e30)

    # softmax over incoming neighbors j (self-loops keep the row max finite)
    e = e - jnp.max(e, axis=-1, keepdims=True)
    p = jnp.exp(e)
    p = p * pl.reciprocal(jnp.sum(p, axis=-1, keepdims=True), approx=True)

    # mean-pool before aggregation (linear):  pooled = (mean_i p) @ h + b
    p_mean = jnp.mean(p, axis=1, keepdims=True)        # (G, 1, N)
    pooled = jnp.einsum('goj,gjh->goh', p_mean, h3,
                        preferred_element_type=jnp.float32).reshape(G, H)
    pooled = pooled + bgat_ref[...]                    # (G, H)

    # LSTM input projection for ALL timesteps at once (off the serial path).
    gx = (jnp.dot(pooled, wih_ref[...], preferred_element_type=jnp.float32)
          + blstm_ref[...])                            # (G, 4H), g = t*B + b

    whh = whh_ref[...]                                 # (H, 4H)
    h = jnp.zeros((B, H), jnp.float32)
    c = jnp.zeros((B, H), jnp.float32)

    # Statically unrolled recurrence: whole serial chain visible to the
    # scheduler; only h @ w_hh + gate nonlinearities are on the critical path.
    for t in range(W):
        gates = gx[t * B:(t + 1) * B, :] + jnp.dot(
            h, whh, preferred_element_type=jnp.float32)          # (B, 4H)
        i_g = jax.nn.sigmoid(gates[:, 0 * H:1 * H])
        f_g = jax.nn.sigmoid(gates[:, 1 * H:2 * H])
        g_g = jnp.tanh(gates[:, 2 * H:3 * H])
        o_g = jax.nn.sigmoid(gates[:, 3 * H:4 * H])
        c = f_g * c + i_g * g_g
        h = o_g * jnp.tanh(c)

    # Dropout is identity in eval mode; fc([h, z]) = h @ Wfc_h + z @ Wfc_z + b
    out_ref[...] = (jnp.dot(h, wfch_ref[...], preferred_element_type=jnp.float32)
                    + jnp.dot(z_ref[...], wfcz_ref[...], preferred_element_type=jnp.float32)
                    + bfc_ref[...])


def generator_forward(x_all, adj_all, z, params, *, batch, window):
    G, N, F = x_all.shape
    H = params["w_gat"].shape[1]
    H4 = params["w_ih"].shape[1]
    C = params["wfc_h"].shape[1]

    w_gat = params["w_gat"]
    # Fold attention vectors into x-side weights (tiny one-time matmuls).
    w_ad = w_gat @ params["a_dst"].T                   # (F, 1)
    w_as = (w_gat @ params["a_src"].T).T               # (1, F)

    kernel = functools.partial(generator_kernel, batch=batch, window=window,
                               hidden_dim=H)
    return pl.pallas_call(
        kernel,
        out_shape=jax.ShapeDtypeStruct((batch, C), jnp.float32),
        grid_spec=pltpu.PrefetchScalarGridSpec(
            num_scalar_prefetch=0,
            grid=(1,),
            in_specs=[
                pl.BlockSpec((G, N, F), lambda i: (0, 0, 0)),
                pl.BlockSpec((G, N, N), lambda i: (0, 0, 0)),
                pl.BlockSpec((F, H), lambda i: (0, 0)),
                pl.BlockSpec((F, 1), lambda i: (0, 0)),
                pl.BlockSpec((1, F), lambda i: (0, 0)),
                pl.BlockSpec((1, H), lambda i: (0, 0)),
                pl.BlockSpec((H, H4), lambda i: (0, 0)),
                pl.BlockSpec((1, H4), lambda i: (0, 0)),
                pl.BlockSpec((H, H4), lambda i: (0, 0)),
                pl.BlockSpec((batch, H), lambda i: (0, 0)),
                pl.BlockSpec((H, C), lambda i: (0, 0)),
                pl.BlockSpec((H, C), lambda i: (0, 0)),
                pl.BlockSpec((1, C), lambda i: (0, 0)),
            ],
            out_specs=pl.BlockSpec((batch, C), lambda i: (0, 0)),
        ),
        compiler_params=pltpu.CompilerParams(dimension_semantics=("arbitrary",)),
    )(x_all, adj_all, w_gat, w_ad, w_as, params["b_gat"],
      params["w_ih"], params["b_lstm"], params["w_hh"], z,
      params["wfc_h"], params["wfc_z"], params["b_fc"])


# ----------------------------------------------------------------------------
# Pure-JAX reference for a correctness check (window-major graph order).
# ----------------------------------------------------------------------------
def reference_forward(x_all, adj_all, z, params, *, batch, window):
    H = params["w_gat"].shape[1]
    h = jnp.einsum("gnf,fh->gnh", x_all, params["w_gat"])
    a_s = jnp.einsum("gnh,h->gn", h, params["a_src"][0])
    a_d = jnp.einsum("gnh,h->gn", h, params["a_dst"][0])
    e = a_d[:, :, None] + a_s[:, None, :]
    e = jnp.where(e > 0, e, 0.2 * e)
    e = jnp.where(adj_all > 0, e, -1e30)
    p = jax.nn.softmax(e, axis=-1)
    out = jnp.einsum("gij,gjh->gih", p, h) + params["b_gat"][0]
    pooled = out.mean(axis=1).reshape(window, batch, H)   # g = w*B + b

    def step(carry, x_t):
        hh, cc = carry
        gates = x_t @ params["w_ih"] + hh @ params["w_hh"] + params["b_lstm"][0]
        i = jax.nn.sigmoid(gates[:, :H])
        f = jax.nn.sigmoid(gates[:, H:2 * H])
        g = jnp.tanh(gates[:, 2 * H:3 * H])
        o = jax.nn.sigmoid(gates[:, 3 * H:])
        cc = f * cc + i * g
        hh = o * jnp.tanh(cc)
        return (hh, cc), None

    B = batch
    (hh, _), _ = jax.lax.scan(step,
                              (jnp.zeros((B, H)), jnp.zeros((B, H))),
                              pooled)
    return hh @ params["wfc_h"] + z @ params["wfc_z"] + params["b_fc"][0]


if __name__ == "__main__":
    # Small, module-consistent shapes.
    node_feature_dim = 8
    hidden_dim = 32
    window_size = 8
    num_classes = 4
    batch = 2
    num_nodes = 16
    G = batch * window_size          # graph g = w*batch + b (window-major)

    key = jax.random.PRNGKey(0)
    ks = jax.random.split(key, 12)

    # Inputs: dense node features + adjacency (with self-loops) per graph, noise z.
    x_all = jax.random.normal(ks[0], (G, num_nodes, node_feature_dim), jnp.float32)
    adj = (jax.random.uniform(ks[1], (G, num_nodes, num_nodes)) < 0.3).astype(jnp.float32)
    adj = jnp.maximum(adj, jnp.eye(num_nodes, dtype=jnp.float32)[None])  # add self-loops
    z = jax.random.normal(ks[2], (batch, hidden_dim), jnp.float32)

    s = 0.1
    params = {
        # GATConv(node_feature_dim, hidden_dim): lin weight, att_src, att_dst, bias
        "w_gat": s * jax.random.normal(ks[3], (node_feature_dim, hidden_dim), jnp.float32),
        "a_src": s * jax.random.normal(ks[4], (1, hidden_dim), jnp.float32),
        "a_dst": s * jax.random.normal(ks[5], (1, hidden_dim), jnp.float32),
        "b_gat": s * jax.random.normal(ks[6], (1, hidden_dim), jnp.float32),
        # LSTM(hidden_dim, hidden_dim): gate order i, f, g, o (PyTorch convention)
        "w_ih": s * jax.random.normal(ks[7], (hidden_dim, 4 * hidden_dim), jnp.float32),
        "w_hh": s * jax.random.normal(ks[8], (hidden_dim, 4 * hidden_dim), jnp.float32),
        "b_lstm": s * jax.random.normal(ks[9], (1, 4 * hidden_dim), jnp.float32),
        # Linear(2 * hidden_dim, num_classes), split into [hidden | z] halves
        "wfc_h": s * jax.random.normal(ks[10], (hidden_dim, num_classes), jnp.float32),
        "wfc_z": s * jax.random.normal(ks[11], (hidden_dim, num_classes), jnp.float32),
        "b_fc": s * jax.random.normal(ks[0], (1, num_classes), jnp.float32),
    }

    fake_labels = generator_forward(x_all, adj, z, params,
                                    batch=batch, window=window_size)
    fake_labels = jax.block_until_ready(fake_labels)

    ref = reference_forward(x_all, adj, z, params, batch=batch, window=window_size)
    ref = jax.block_until_ready(ref)

    assert fake_labels.shape == (batch, num_classes)
    # approx=True softmax reciprocal -> allow slightly looser tolerance than exact.
    assert jnp.max(jnp.abs(fake_labels - ref)) < 1e-3, "mismatch vs JAX reference"
    print("KERNEL_OK")
</pallas_src>

<mosaic_0001>
module attributes {stable_mosaic.version = 11 : i64} {
  func.func @generator_kernel(%arg0: i32, %arg1: memref<16x16x8xf32, #tpu.memory_space<vmem>>, %arg2: memref<16x16x16xf32, #tpu.memory_space<vmem>>, %arg3: memref<8x32xf32, #tpu.memory_space<vmem>>, %arg4: memref<8x1xf32, #tpu.memory_space<vmem>>, %arg5: memref<1x8xf32, #tpu.memory_space<vmem>>, %arg6: memref<1x32xf32, #tpu.memory_space<vmem>>, %arg7: memref<32x128xf32, #tpu.memory_space<vmem>>, %arg8: memref<1x128xf32, #tpu.memory_space<vmem>>, %arg9: memref<32x128xf32, #tpu.memory_space<vmem>>, %arg10: memref<2x32xf32, #tpu.memory_space<vmem>>, %arg11: memref<32x4xf32, #tpu.memory_space<vmem>>, %arg12: memref<32x4xf32, #tpu.memory_space<vmem>>, %arg13: memref<1x4xf32, #tpu.memory_space<vmem>>, %arg14: memref<2x4xf32, #tpu.memory_space<vmem>>) attributes {dimension_semantics = [#tpu.dimension_semantics<arbitrary>], iteration_bounds = array<i64: 1>, scalar_prefetch = 0 : i64, scratch_operands = 0 : i64, tpu.core_type = #tpu.core_type<tc>, window_params = [{pipeline_mode = #tpu.pipeline_mode<synchronous>, transform_indices = @transform_0, window_bounds = array<i64: 16, 16, 8>}, {pipeline_mode = #tpu.pipeline_mode<synchronous>, transform_indices = @transform_1, window_bounds = array<i64: 16, 16, 16>}, {pipeline_mode = #tpu.pipeline_mode<synchronous>, transform_indices = @transform_2, window_bounds = array<i64: 8, 32>}, {pipeline_mode = #tpu.pipeline_mode<synchronous>, transform_indices = @transform_3, window_bounds = array<i64: 8, 1>}, {pipeline_mode = #tpu.pipeline_mode<synchronous>, transform_indices = @transform_4, window_bounds = array<i64: 1, 8>}, {pipeline_mode = #tpu.pipeline_mode<synchronous>, transform_indices = @transform_5, window_bounds = array<i64: 1, 32>}, {pipeline_mode = #tpu.pipeline_mode<synchronous>, transform_indices = @transform_6, window_bounds = array<i64: 32, 128>}, {pipeline_mode = #tpu.pipeline_mode<synchronous>, transform_indices = @transform_7, window_bounds = array<i64: 1, 128>}, {pipeline_mode = #tpu.pipeline_mode<synchronous>, transform_indices = @transform_8, window_bounds = array<i64: 32, 128>}, {pipeline_mode = #tpu.pipeline_mode<synchronous>, transform_indices = @transform_9, window_bounds = array<i64: 2, 32>}, {pipeline_mode = #tpu.pipeline_mode<synchronous>, transform_indices = @transform_10, window_bounds = array<i64: 32, 4>}, {pipeline_mode = #tpu.pipeline_mode<synchronous>, transform_indices = @transform_11, window_bounds = array<i64: 32, 4>}, {pipeline_mode = #tpu.pipeline_mode<synchronous>, transform_indices = @transform_12, window_bounds = array<i64: 1, 4>}, {pipeline_mode = #tpu.pipeline_mode<synchronous>, transform_indices = @transform_13, window_bounds = array<i64: 2, 4>}]} {
    %c0 = arith.constant 0 : index
    %c0_0 = arith.constant 0 : index
    %c0_1 = arith.constant 0 : index
    %0 = vector.load %arg1[%c0, %c0_0, %c0_1] : memref<16x16x8xf32, #tpu.memory_space<vmem>>, vector<16x16x8xf32>
    %1 = vector.shape_cast %0 : vector<16x16x8xf32> to vector<256x8xf32>
    %c0_2 = arith.constant 0 : index
    %c0_3 = arith.constant 0 : index
    %2 = vector.load %arg3[%c0_2, %c0_3] : memref<8x32xf32, #tpu.memory_space<vmem>>, vector<8x32xf32>
    %cst = arith.constant dense<0.000000e+00> : vector<256x32xf32>
    %3 = tpu.matmul %1, %2, %cst {dimension_numbers = #tpu.dot_dimension_numbers<[1], [0], [0], [1], [0, 0, 1, 1], [], []>} : vector<256x8xf32>, vector<8x32xf32>, vector<256x32xf32> -> vector<256x32xf32>
    %4 = vector.shape_cast %3 : vector<256x32xf32> to vector<16x16x32xf32>
    %c0_4 = arith.constant 0 : index
    %c0_5 = arith.constant 0 : index
    %5 = vector.load %arg4[%c0_4, %c0_5] : memref<8x1xf32, #tpu.memory_space<vmem>>, vector<8x1xf32>
    %cst_6 = arith.constant dense<0.000000e+00> : vector<256x1xf32>
    %6 = tpu.matmul %1, %5, %cst_6 {dimension_numbers = #tpu.dot_dimension_numbers<[1], [0], [0], [1], [0, 0, 1, 1], [], []>} : vector<256x8xf32>, vector<8x1xf32>, vector<256x1xf32> -> vector<256x1xf32>
    %7 = vector.shape_cast %6 : vector<256x1xf32> to vector<16x16x1xf32>
    %c0_7 = arith.constant 0 : index
    %c0_8 = arith.constant 0 : index
    %8 = vector.load %arg5[%c0_7, %c0_8] : memref<1x8xf32, #tpu.memory_space<vmem>>, vector<1x8xf32>
    %9 = vector.shape_cast %8 : vector<1x8xf32> to vector<1x1x8xf32>
    %10 = vector.shape_cast %9 : vector<1x1x8xf32> to vector<1x1x8xf32>
    %11 = vector.broadcast %10 : vector<1x1x8xf32> to vector<16x1x8xf32>
    "tpu.trace_start"() <{level = 10 : i32, message = "gof,gnf->gon"}> : () -> ()
    %cst_9 = arith.constant dense<0.000000e+00> : vector<16x1x16xf32>
    %12 = tpu.matmul %11, %0, %cst_9 {dimension_numbers = #tpu.dot_dimension_numbers<[2], [2], [1], [1], [0, 0, 0, 1, 1, 1], [0], [0]>} : vector<16x1x8xf32>, vector<16x16x8xf32>, vector<16x1x16xf32> -> vector<16x1x16xf32>
    "tpu.trace_stop"() : () -> ()
    %13 = vector.broadcast %7 : vector<16x16x1xf32> to vector<16x16x16xf32>
    %14 = vector.broadcast %12 : vector<16x1x16xf32> to vector<16x16x16xf32>
    %15 = arith.addf %13, %14 : vector<16x16x16xf32>
    %cst_10 = arith.constant 0.000000e+00 : f32
    %16 = vector.broadcast %cst_10 : f32 to vector<16x16x16xf32>
    %17 = arith.cmpf ogt, %15, %16 : vector<16x16x16xf32>
    %cst_11 = arith.constant 2.000000e-01 : f32
    %18 = vector.broadcast %cst_11 : f32 to vector<16x16x16xf32>
    %19 = arith.mulf %18, %15 : vector<16x16x16xf32>
    %20 = arith.select %17, %15, %19 : vector<16x16x16xi1>, vector<16x16x16xf32>
    %c0_12 = arith.constant 0 : index
    %c0_13 = arith.constant 0 : index
    %c0_14 = arith.constant 0 : index
    %21 = vector.load %arg2[%c0_12, %c0_13, %c0_14] : memref<16x16x16xf32, #tpu.memory_space<vmem>>, vector<16x16x16xf32>
    %cst_15 = arith.constant 0.000000e+00 : f32
    %22 = vector.broadcast %cst_15 : f32 to vector<16x16x16xf32>
    %23 = arith.cmpf ogt, %21, %22 : vector<16x16x16xf32>
    %cst_16 = arith.constant -1.000000e+30 : f32
    %24 = vector.broadcast %cst_16 : f32 to vector<16x16x16xf32>
    %25 = arith.select %23, %20, %24 : vector<16x16x16xi1>, vector<16x16x16xf32>
    %cst_17 = arith.constant dense<0xFF800000> : vector<16x16xf32>
    %26 = vector.multi_reduction <maximumf>, %25, %cst_17 [2] : vector<16x16x16xf32> to vector<16x16xf32>
    %27 = vector.shape_cast %26 : vector<16x16xf32> to vector<16x16x1xf32>
    %28 = vector.broadcast %27 : vector<16x16x1xf32> to vector<16x16x16xf32>
    %29 = arith.subf %25, %28 : vector<16x16x16xf32>
    %30 = math.exp %29 : vector<16x16x16xf32>
    %cst_18 = arith.constant dense<0.000000e+00> : vector<16x16xf32>
    %31 = vector.multi_reduction <add>, %30, %cst_18 [2] : vector<16x16x16xf32> to vector<16x16xf32>
    %32 = vector.shape_cast %31 : vector<16x16xf32> to vector<16x16x1xf32>
    %33 = tpu.reciprocal %32 {approx = true} : vector<16x16x1xf32> -> vector<16x16x1xf32>
    %34 = vector.broadcast %33 : vector<16x16x1xf32> to vector<16x16x16xf32>
    %35 = arith.mulf %30, %34 : vector<16x16x16xf32>
    %cst_19 = arith.constant dense<0.000000e+00> : vector<16x16xf32>
    %36 = vector.multi_reduction <add>, %35, %cst_19 [1] : vector<16x16x16xf32> to vector<16x16xf32>
    %37 = vector.shape_cast %36 : vector<16x16xf32> to vector<16x1x16xf32>
    %cst_20 = arith.constant 1.600000e+01 : f32
    %38 = vector.broadcast %cst_20 : f32 to vector<16x1x16xf32>
    %39 = arith.divf %37, %38 : vector<16x1x16xf32>
    "tpu.trace_start"() <{level = 10 : i32, message = "goj,gjh->goh"}> : () -> ()
    %cst_21 = arith.constant dense<0.000000e+00> : vector<16x1x32xf32>
    %40 = tpu.matmul %39, %4, %cst_21 {dimension_numbers = #tpu.dot_dimension_numbers<[2], [1], [1], [2], [0, 0, 0, 1, 1, 2], [0], [0]>} : vector<16x1x16xf32>, vector<16x16x32xf32>, vector<16x1x32xf32> -> vector<16x1x32xf32>
    "tpu.trace_stop"() : () -> ()
    %41 = vector.shape_cast %40 : vector<16x1x32xf32> to vector<16x32xf32>
    %c0_22 = arith.constant 0 : index
    %c0_23 = arith.constant 0 : index
    %42 = vector.load %arg6[%c0_22, %c0_23] : memref<1x32xf32, #tpu.memory_space<vmem>>, vector<1x32xf32>
    %43 = vector.broadcast %42 : vector<1x32xf32> to vector<16x32xf32>
    %44 = arith.addf %41, %43 : vector<16x32xf32>
    %c0_24 = arith.constant 0 : index
    %c0_25 = arith.constant 0 : index
    %45 = vector.load %arg7[%c0_24, %c0_25] : memref<32x128xf32, #tpu.memory_space<vmem>>, vector<32x128xf32>
    %cst_26 = arith.constant dense<0.000000e+00> : vector<16x128xf32>
    %46 = tpu.matmul %44, %45, %cst_26 {dimension_numbers = #tpu.dot_dimension_numbers<[1], [0], [0], [1], [0, 0, 1, 1], [], []>} : vector<16x32xf32>, vector<32x128xf32>, vector<16x128xf32> -> vector<16x128xf32>
    %c0_27 = arith.constant 0 : index
    %c0_28 = arith.constant 0 : index
    %47 = vector.load %arg8[%c0_27, %c0_28] : memref<1x128xf32, #tpu.memory_space<vmem>>, vector<1x128xf32>
    %48 = vector.broadcast %47 : vector<1x128xf32> to vector<16x128xf32>
    %49 = arith.addf %46, %48 : vector<16x128xf32>
    %c0_29 = arith.constant 0 : index
    %c0_30 = arith.constant 0 : index
    %50 = vector.load %arg9[%c0_29, %c0_30] : memref<32x128xf32, #tpu.memory_space<vmem>>, vector<32x128xf32>
    %cst_31 = arith.constant 0.000000e+00 : f32
    %51 = vector.broadcast %cst_31 : f32 to vector<2x32xf32>
    %cst_32 = arith.constant 0.000000e+00 : f32
    %52 = vector.broadcast %cst_32 : f32 to vector<2x32xf32>
    %53 = vector.extract_strided_slice %49 {offsets = [0, 0], sizes = [2, 128], strides = [1, 1]} : vector<16x128xf32> to vector<2x128xf32>
    %cst_33 = arith.constant dense<0.000000e+00> : vector<2x128xf32>
    %54 = tpu.matmul %51, %50, %cst_33 {dimension_numbers = #tpu.dot_dimension_numbers<[1], [0], [0], [1], [0, 0, 1, 1], [], []>} : vector<2x32xf32>, vector<32x128xf32>, vector<2x128xf32> -> vector<2x128xf32>
    %55 = arith.addf %53, %54 : vector<2x128xf32>
    %56 = vector.extract_strided_slice %55 {offsets = [0, 0], sizes = [2, 32], strides = [1, 1]} : vector<2x128xf32> to vector<2x32xf32>
    %57 = arith.negf %56 : vector<2x32xf32>
    %58 = math.exp %57 : vector<2x32xf32>
    %cst_34 = arith.constant 1.000000e+00 : f32
    %59 = vector.broadcast %cst_34 : f32 to vector<2x32xf32>
    %60 = arith.addf %59, %58 : vector<2x32xf32>
    %61 = arith.divf %59, %60 : vector<2x32xf32>
    %62 = vector.extract_strided_slice %55 {offsets = [0, 32], sizes = [2, 32], strides = [1, 1]} : vector<2x128xf32> to vector<2x32xf32>
    %63 = arith.negf %62 : vector<2x32xf32>
    %64 = math.exp %63 : vector<2x32xf32>
    %cst_35 = arith.constant 1.000000e+00 : f32
    %65 = vector.broadcast %cst_35 : f32 to vector<2x32xf32>
    %66 = arith.addf %65, %64 : vector<2x32xf32>
    %67 = arith.divf %65, %66 : vector<2x32xf32>
    %68 = vector.extract_strided_slice %55 {offsets = [0, 64], sizes = [2, 32], strides = [1, 1]} : vector<2x128xf32> to vector<2x32xf32>
    %69 = math.tanh %68 : vector<2x32xf32>
    %70 = vector.extract_strided_slice %55 {offsets = [0, 96], sizes = [2, 32], strides = [1, 1]} : vector<2x128xf32> to vector<2x32xf32>
    %71 = arith.negf %70 : vector<2x32xf32>
    %72 = math.exp %71 : vector<2x32xf32>
    %cst_36 = arith.constant 1.000000e+00 : f32
    %73 = vector.broadcast %cst_36 : f32 to vector<2x32xf32>
    %74 = arith.addf %73, %72 : vector<2x32xf32>
    %75 = arith.divf %73, %74 : vector<2x32xf32>
    %76 = arith.mulf %67, %52 : vector<2x32xf32>
    %77 = arith.mulf %61, %69 : vector<2x32xf32>
    %78 = arith.addf %76, %77 : vector<2x32xf32>
    %79 = math.tanh %78 : vector<2x32xf32>
    %80 = arith.mulf %75, %79 : vector<2x32xf32>
    %81 = vector.extract_strided_slice %49 {offsets = [2, 0], sizes = [2, 128], strides = [1, 1]} : vector<16x128xf32> to vector<2x128xf32>
    %cst_37 = arith.constant dense<0.000000e+00> : vector<2x128xf32>
    %82 = tpu.matmul %80, %50, %cst_37 {dimension_numbers = #tpu.dot_dimension_numbers<[1], [0], [0], [1], [0, 0, 1, 1], [], []>} : vector<2x32xf32>, vector<32x128xf32>, vector<2x128xf32> -> vector<2x128xf32>
    %83 = arith.addf %81, %82 : vector<2x128xf32>
    %84 = vector.extract_strided_slice %83 {offsets = [0, 0], sizes = [2, 32], strides = [1, 1]} : vector<2x128xf32> to vector<2x32xf32>
    %85 = arith.negf %84 : vector<2x32xf32>
    %86 = math.exp %85 : vector<2x32xf32>
    %cst_38 = arith.constant 1.000000e+00 : f32
    %87 = vector.broadcast %cst_38 : f32 to vector<2x32xf32>
    %88 = arith.addf %87, %86 : vector<2x32xf32>
    %89 = arith.divf %87, %88 : vector<2x32xf32>
    %90 = vector.extract_strided_slice %83 {offsets = [0, 32], sizes = [2, 32], strides = [1, 1]} : vector<2x128xf32> to vector<2x32xf32>
    %91 = arith.negf %90 : vector<2x32xf32>
    %92 = math.exp %91 : vector<2x32xf32>
    %cst_39 = arith.constant 1.000000e+00 : f32
    %93 = vector.broadcast %cst_39 : f32 to vector<2x32xf32>
    %94 = arith.addf %93, %92 : vector<2x32xf32>
    %95 = arith.divf %93, %94 : vector<2x32xf32>
    %96 = vector.extract_strided_slice %83 {offsets = [0, 64], sizes = [2, 32], strides = [1, 1]} : vector<2x128xf32> to vector<2x32xf32>
    %97 = math.tanh %96 : vector<2x32xf32>
    %98 = vector.extract_strided_slice %83 {offsets = [0, 96], sizes = [2, 32], strides = [1, 1]} : vector<2x128xf32> to vector<2x32xf32>
    %99 = arith.negf %98 : vector<2x32xf32>
    %100 = math.exp %99 : vector<2x32xf32>
    %cst_40 = arith.constant 1.000000e+00 : f32
    %101 = vector.broadcast %cst_40 : f32 to vector<2x32xf32>
    %102 = arith.addf %101, %100 : vector<2x32xf32>
    %103 = arith.divf %101, %102 : vector<2x32xf32>
    %104 = arith.mulf %95, %78 : vector<2x32xf32>
    %105 = arith.mulf %89, %97 : vector<2x32xf32>
    %106 = arith.addf %104, %105 : vector<2x32xf32>
    %107 = math.tanh %106 : vector<2x32xf32>
    %108 = arith.mulf %103, %107 : vector<2x32xf32>
    %109 = vector.extract_strided_slice %49 {offsets = [4, 0], sizes = [2, 128], strides = [1, 1]} : vector<16x128xf32> to vector<2x128xf32>
    %cst_41 = arith.constant dense<0.000000e+00> : vector<2x128xf32>
    %110 = tpu.matmul %108, %50, %cst_41 {dimension_numbers = #tpu.dot_dimension_numbers<[1], [0], [0], [1], [0, 0, 1, 1], [], []>} : vector<2x32xf32>, vector<32x128xf32>, vector<2x128xf32> -> vector<2x128xf32>
    %111 = arith.addf %109, %110 : vector<2x128xf32>
    %112 = vector.extract_strided_slice %111 {offsets = [0, 0], sizes = [2, 32], strides = [1, 1]} : vector<2x128xf32> to vector<2x32xf32>
    %113 = arith.negf %112 : vector<2x32xf32>
    %114 = math.exp %113 : vector<2x32xf32>
    %cst_42 = arith.constant 1.000000e+00 : f32
    %115 = vector.broadcast %cst_42 : f32 to vector<2x32xf32>
    %116 = arith.addf %115, %114 : vector<2x32xf32>
    %117 = arith.divf %115, %116 : vector<2x32xf32>
    %118 = vector.extract_strided_slice %111 {offsets = [0, 32], sizes = [2, 32], strides = [1, 1]} : vector<2x128xf32> to vector<2x32xf32>
    %119 = arith.negf %118 : vector<2x32xf32>
    %120 = math.exp %119 : vector<2x32xf32>
    %cst_43 = arith.constant 1.000000e+00 : f32
    %121 = vector.broadcast %cst_43 : f32 to vector<2x32xf32>
    %122 = arith.addf %121, %120 : vector<2x32xf32>
    %123 = arith.divf %121, %122 : vector<2x32xf32>
    %124 = vector.extract_strided_slice %111 {offsets = [0, 64], sizes = [2, 32], strides = [1, 1]} : vector<2x128xf32> to vector<2x32xf32>
    %125 = math.tanh %124 : vector<2x32xf32>
    %126 = vector.extract_strided_slice %111 {offsets = [0, 96], sizes = [2, 32], strides = [1, 1]} : vector<2x128xf32> to vector<2x32xf32>
    %127 = arith.negf %126 : vector<2x32xf32>
    %128 = math.exp %127 : vector<2x32xf32>
    %cst_44 = arith.constant 1.000000e+00 : f32
    %129 = vector.broadcast %cst_44 : f32 to vector<2x32xf32>
    %130 = arith.addf %129, %128 : vector<2x32xf32>
    %131 = arith.divf %129, %130 : vector<2x32xf32>
    %132 = arith.mulf %123, %106 : vector<2x32xf32>
    %133 = arith.mulf %117, %125 : vector<2x32xf32>
    %134 = arith.addf %132, %133 : vector<2x32xf32>
    %135 = math.tanh %134 : vector<2x32xf32>
    %136 = arith.mulf %131, %135 : vector<2x32xf32>
    %137 = vector.extract_strided_slice %49 {offsets = [6, 0], sizes = [2, 128], strides = [1, 1]} : vector<16x128xf32> to vector<2x128xf32>
    %cst_45 = arith.constant dense<0.000000e+00> : vector<2x128xf32>
    %138 = tpu.matmul %136, %50, %cst_45 {dimension_numbers = #tpu.dot_dimension_numbers<[1], [0], [0], [1], [0, 0, 1, 1], [], []>} : vector<2x32xf32>, vector<32x128xf32>, vector<2x128xf32> -> vector<2x128xf32>
    %139 = arith.addf %137, %138 : vector<2x128xf32>
    %140 = vector.extract_strided_slice %139 {offsets = [0, 0], sizes = [2, 32], strides = [1, 1]} : vector<2x128xf32> to vector<2x32xf32>
    %141 = arith.negf %140 : vector<2x32xf32>
    %142 = math.exp %141 : vector<2x32xf32>
    %cst_46 = arith.constant 1.000000e+00 : f32
    %143 = vector.broadcast %cst_46 : f32 to vector<2x32xf32>
    %144 = arith.addf %143, %142 : vector<2x32xf32>
    %145 = arith.divf %143, %144 : vector<2x32xf32>
    %146 = vector.extract_strided_slice %139 {offsets = [0, 32], sizes = [2, 32], strides = [1, 1]} : vector<2x128xf32> to vector<2x32xf32>
    %147 = arith.negf %146 : vector<2x32xf32>
    %148 = math.exp %147 : vector<2x32xf32>
    %cst_47 = arith.constant 1.000000e+00 : f32
    %149 = vector.broadcast %cst_47 : f32 to vector<2x32xf32>
    %150 = arith.addf %149, %148 : vector<2x32xf32>
    %151 = arith.divf %149, %150 : vector<2x32xf32>
    %152 = vector.extract_strided_slice %139 {offsets = [0, 64], sizes = [2, 32], strides = [1, 1]} : vector<2x128xf32> to vector<2x32xf32>
    %153 = math.tanh %152 : vector<2x32xf32>
    %154 = vector.extract_strided_slice %139 {offsets = [0, 96], sizes = [2, 32], strides = [1, 1]} : vector<2x128xf32> to vector<2x32xf32>
    %155 = arith.negf %154 : vector<2x32xf32>
    %156 = math.exp %155 : vector<2x32xf32>
    %cst_48 = arith.constant 1.000000e+00 : f32
    %157 = vector.broadcast %cst_48 : f32 to vector<2x32xf32>
    %158 = arith.addf %157, %156 : vector<2x32xf32>
    %159 = arith.divf %157, %158 : vector<2x32xf32>
    %160 = arith.mulf %151, %134 : vector<2x32xf32>
    %161 = arith.mulf %145, %153 : vector<2x32xf32>
    %162 = arith.addf %160, %161 : vector<2x32xf32>
    %163 = math.tanh %162 : vector<2x32xf32>
    %164 = arith.mulf %159, %163 : vector<2x32xf32>
    %165 = vector.extract_strided_slice %49 {offsets = [8, 0], sizes = [2, 128], strides = [1, 1]} : vector<16x128xf32> to vector<2x128xf32>
    %cst_49 = arith.constant dense<0.000000e+00> : vector<2x128xf32>
    %166 = tpu.matmul %164, %50, %cst_49 {dimension_numbers = #tpu.dot_dimension_numbers<[1], [0], [0], [1], [0, 0, 1, 1], [], []>} : vector<2x32xf32>, vector<32x128xf32>, vector<2x128xf32> -> vector<2x128xf32>
    %167 = arith.addf %165, %166 : vector<2x128xf32>
    %168 = vector.extract_strided_slice %167 {offsets = [0, 0], sizes = [2, 32], strides = [1, 1]} : vector<2x128xf32> to vector<2x32xf32>
    %169 = arith.negf %168 : vector<2x32xf32>
    %170 = math.exp %169 : vector<2x32xf32>
    %cst_50 = arith.constant 1.000000e+00 : f32
    %171 = vector.broadcast %cst_50 : f32 to vector<2x32xf32>
    %172 = arith.addf %171, %170 : vector<2x32xf32>
    %173 = arith.divf %171, %172 : vector<2x32xf32>
    %174 = vector.extract_strided_slice %167 {offsets = [0, 32], sizes = [2, 32], strides = [1, 1]} : vector<2x128xf32> to vector<2x32xf32>
    %175 = arith.negf %174 : vector<2x32xf32>
    %176 = math.exp %175 : vector<2x32xf32>
    %cst_51 = arith.constant 1.000000e+00 : f32
    %177 = vector.broadcast %cst_51 : f32 to vector<2x32xf32>
    %178 = arith.addf %177, %176 : vector<2x32xf32>
    %179 = arith.divf %177, %178 : vector<2x32xf32>
    %180 = vector.extract_strided_slice %167 {offsets = [0, 64], sizes = [2, 32], strides = [1, 1]} : vector<2x128xf32> to vector<2x32xf32>
    %181 = math.tanh %180 : vector<2x32xf32>
    %182 = vector.extract_strided_slice %167 {offsets = [0, 96], sizes = [2, 32], strides = [1, 1]} : vector<2x128xf32> to vector<2x32xf32>
    %183 = arith.negf %182 : vector<2x32xf32>
    %184 = math.exp %183 : vector<2x32xf32>
    %cst_52 = arith.constant 1.000000e+00 : f32
    %185 = vector.broadcast %cst_52 : f32 to vector<2x32xf32>
    %186 = arith.addf %185, %184 : vector<2x32xf32>
    %187 = arith.divf %185, %186 : vector<2x32xf32>
    %188 = arith.mulf %179, %162 : vector<2x32xf32>
    %189 = arith.mulf %173, %181 : vector<2x32xf32>
    %190 = arith.addf %188, %189 : vector<2x32xf32>
    %191 = math.tanh %190 : vector<2x32xf32>
    %192 = arith.mulf %187, %191 : vector<2x32xf32>
    %193 = vector.extract_strided_slice %49 {offsets = [10, 0], sizes = [2, 128], strides = [1, 1]} : vector<16x128xf32> to vector<2x128xf32>
    %cst_53 = arith.constant dense<0.000000e+00> : vector<2x128xf32>
    %194 = tpu.matmul %192, %50, %cst_53 {dimension_numbers = #tpu.dot_dimension_numbers<[1], [0], [0], [1], [0, 0, 1, 1], [], []>} : vector<2x32xf32>, vector<32x128xf32>, vector<2x128xf32> -> vector<2x128xf32>
    %195 = arith.addf %193, %194 : vector<2x128xf32>
    %196 = vector.extract_strided_slice %195 {offsets = [0, 0], sizes = [2, 32], strides = [1, 1]} : vector<2x128xf32> to vector<2x32xf32>
    %197 = arith.negf %196 : vector<2x32xf32>
    %198 = math.exp %197 : vector<2x32xf32>
    %cst_54 = arith.constant 1.000000e+00 : f32
    %199 = vector.broadcast %cst_54 : f32 to vector<2x32xf32>
    %200 = arith.addf %199, %198 : vector<2x32xf32>
    %201 = arith.divf %199, %200 : vector<2x32xf32>
    %202 = vector.extract_strided_slice %195 {offsets = [0, 32], sizes = [2, 32], strides = [1, 1]} : vector<2x128xf32> to vector<2x32xf32>
    %203 = arith.negf %202 : vector<2x32xf32>
    %204 = math.exp %203 : vector<2x32xf32>
    %cst_55 = arith.constant 1.000000e+00 : f32
    %205 = vector.broadcast %cst_55 : f32 to vector<2x32xf32>
    %206 = arith.addf %205, %204 : vector<2x32xf32>
    %207 = arith.divf %205, %206 : vector<2x32xf32>
    %208 = vector.extract_strided_slice %195 {offsets = [0, 64], sizes = [2, 32], strides = [1, 1]} : vector<2x128xf32> to vector<2x32xf32>
    %209 = math.tanh %208 : vector<2x32xf32>
    %210 = vector.extract_strided_slice %195 {offsets = [0, 96], sizes = [2, 32], strides = [1, 1]} : vector<2x128xf32> to vector<2x32xf32>
    %211 = arith.negf %210 : vector<2x32xf32>
    %212 = math.exp %211 : vector<2x32xf32>
    %cst_56 = arith.constant 1.000000e+00 : f32
    %213 = vector.broadcast %cst_56 : f32 to vector<2x32xf32>
    %214 = arith.addf %213, %212 : vector<2x32xf32>
    %215 = arith.divf %213, %214 : vector<2x32xf32>
    %216 = arith.mulf %207, %190 : vector<2x32xf32>
    %217 = arith.mulf %201, %209 : vector<2x32xf32>
    %218 = arith.addf %216, %217 : vector<2x32xf32>
    %219 = math.tanh %218 : vector<2x32xf32>
    %220 = arith.mulf %215, %219 : vector<2x32xf32>
    %221 = vector.extract_strided_slice %49 {offsets = [12, 0], sizes = [2, 128], strides = [1, 1]} : vector<16x128xf32> to vector<2x128xf32>
    %cst_57 = arith.constant dense<0.000000e+00> : vector<2x128xf32>
    %222 = tpu.matmul %220, %50, %cst_57 {dimension_numbers = #tpu.dot_dimension_numbers<[1], [0], [0], [1], [0, 0, 1, 1], [], []>} : vector<2x32xf32>, vector<32x128xf32>, vector<2x128xf32> -> vector<2x128xf32>
    %223 = arith.addf %221, %222 : vector<2x128xf32>
    %224 = vector.extract_strided_slice %223 {offsets = [0, 0], sizes = [2, 32], strides = [1, 1]} : vector<2x128xf32> to vector<2x32xf32>
    %225 = arith.negf %224 : vector<2x32xf32>
    %226 = math.exp %225 : vector<2x32xf32>
    %cst_58 = arith.constant 1.000000e+00 : f32
    %227 = vector.broadcast %cst_58 : f32 to vector<2x32xf32>
    %228 = arith.addf %227, %226 : vector<2x32xf32>
    %229 = arith.divf %227, %228 : vector<2x32xf32>
    %230 = vector.extract_strided_slice %223 {offsets = [0, 32], sizes = [2, 32], strides = [1, 1]} : vector<2x128xf32> to vector<2x32xf32>
    %231 = arith.negf %230 : vector<2x32xf32>
    %232 = math.exp %231 : vector<2x32xf32>
    %cst_59 = arith.constant 1.000000e+00 : f32
    %233 = vector.broadcast %cst_59 : f32 to vector<2x32xf32>
    %234 = arith.addf %233, %232 : vector<2x32xf32>
    %235 = arith.divf %233, %234 : vector<2x32xf32>
    %236 = vector.extract_strided_slice %223 {offsets = [0, 64], sizes = [2, 32], strides = [1, 1]} : vector<2x128xf32> to vector<2x32xf32>
    %237 = math.tanh %236 : vector<2x32xf32>
    %238 = vector.extract_strided_slice %223 {offsets = [0, 96], sizes = [2, 32], strides = [1, 1]} : vector<2x128xf32> to vector<2x32xf32>
    %239 = arith.negf %238 : vector<2x32xf32>
    %240 = math.exp %239 : vector<2x32xf32>
    %cst_60 = arith.constant 1.000000e+00 : f32
    %241 = vector.broadcast %cst_60 : f32 to vector<2x32xf32>
    %242 = arith.addf %241, %240 : vector<2x32xf32>
    %243 = arith.divf %241, %242 : vector<2x32xf32>
    %244 = arith.mulf %235, %218 : vector<2x32xf32>
    %245 = arith.mulf %229, %237 : vector<2x32xf32>
    %246 = arith.addf %244, %245 : vector<2x32xf32>
    %247 = math.tanh %246 : vector<2x32xf32>
    %248 = arith.mulf %243, %247 : vector<2x32xf32>
    %249 = vector.extract_strided_slice %49 {offsets = [14, 0], sizes = [2, 128], strides = [1, 1]} : vector<16x128xf32> to vector<2x128xf32>
    %cst_61 = arith.constant dense<0.000000e+00> : vector<2x128xf32>
    %250 = tpu.matmul %248, %50, %cst_61 {dimension_numbers = #tpu.dot_dimension_numbers<[1], [0], [0], [1], [0, 0, 1, 1], [], []>} : vector<2x32xf32>, vector<32x128xf32>, vector<2x128xf32> -> vector<2x128xf32>
    %251 = arith.addf %249, %250 : vector<2x128xf32>
    %252 = vector.extract_strided_slice %251 {offsets = [0, 0], sizes = [2, 32], strides = [1, 1]} : vector<2x128xf32> to vector<2x32xf32>
    %253 = arith.negf %252 : vector<2x32xf32>
    %254 = math.exp %253 : vector<2x32xf32>
    %cst_62 = arith.constant 1.000000e+00 : f32
    %255 = vector.broadcast %cst_62 : f32 to vector<2x32xf32>
    %256 = arith.addf %255, %254 : vector<2x32xf32>
    %257 = arith.divf %255, %256 : vector<2x32xf32>
    %258 = vector.extract_strided_slice %251 {offsets = [0, 32], sizes = [2, 32], strides = [1, 1]} : vector<2x128xf32> to vector<2x32xf32>
    %259 = arith.negf %258 : vector<2x32xf32>
    %260 = math.exp %259 : vector<2x32xf32>
    %cst_63 = arith.constant 1.000000e+00 : f32
    %261 = vector.broadcast %cst_63 : f32 to vector<2x32xf32>
    %262 = arith.addf %261, %260 : vector<2x32xf32>
    %263 = arith.divf %261, %262 : vector<2x32xf32>
    %264 = vector.extract_strided_slice %251 {offsets = [0, 64], sizes = [2, 32], strides = [1, 1]} : vector<2x128xf32> to vector<2x32xf32>
    %265 = math.tanh %264 : vector<2x32xf32>
    %266 = vector.extract_strided_slice %251 {offsets = [0, 96], sizes = [2, 32], strides = [1, 1]} : vector<2x128xf32> to vector<2x32xf32>
    %267 = arith.negf %266 : vector<2x32xf32>
    %268 = math.exp %267 : vector<2x32xf32>
    %cst_64 = arith.constant 1.000000e+00 : f32
    %269 = vector.broadcast %cst_64 : f32 to vector<2x32xf32>
    %270 = arith.addf %269, %268 : vector<2x32xf32>
    %271 = arith.divf %269, %270 : vector<2x32xf32>
    %272 = arith.mulf %263, %246 : vector<2x32xf32>
    %273 = arith.mulf %257, %265 : vector<2x32xf32>
    %274 = arith.addf %272, %273 : vector<2x32xf32>
    %275 = math.tanh %274 : vector<2x32xf32>
    %276 = arith.mulf %271, %275 : vector<2x32xf32>
    %c0_65 = arith.constant 0 : index
    %c0_66 = arith.constant 0 : index
    %277 = vector.load %arg11[%c0_65, %c0_66] : memref<32x4xf32, #tpu.memory_space<vmem>>, vector<32x4xf32>
    %cst_67 = arith.constant dense<0.000000e+00> : vector<2x4xf32>
    %278 = tpu.matmul %276, %277, %cst_67 {dimension_numbers = #tpu.dot_dimension_numbers<[1], [0], [0], [1], [0, 0, 1, 1], [], []>} : vector<2x32xf32>, vector<32x4xf32>, vector<2x4xf32> -> vector<2x4xf32>
    %c0_68 = arith.constant 0 : index
    %c0_69 = arith.constant 0 : index
    %279 = vector.load %arg10[%c0_68, %c0_69] : memref<2x32xf32, #tpu.memory_space<vmem>>, vector<2x32xf32>
    %c0_70 = arith.constant 0 : index
    %c0_71 = arith.constant 0 : index
    %280 = vector.load %arg12[%c0_70, %c0_71] : memref<32x4xf32, #tpu.memory_space<vmem>>, vector<32x4xf32>
    %cst_72 = arith.constant dense<0.000000e+00> : vector<2x4xf32>
    %281 = tpu.matmul %279, %280, %cst_72 {dimension_numbers = #tpu.dot_dimension_numbers<[1], [0], [0], [1], [0, 0, 1, 1], [], []>} : vector<2x32xf32>, vector<32x4xf32>, vector<2x4xf32> -> vector<2x4xf32>
    %282 = arith.addf %278, %281 : vector<2x4xf32>
    %c0_73 = arith.constant 0 : index
    %c0_74 = arith.constant 0 : index
    %283 = vector.load %arg13[%c0_73, %c0_74] : memref<1x4xf32, #tpu.memory_space<vmem>>, vector<1x4xf32>
    %284 = vector.broadcast %283 : vector<1x4xf32> to vector<2x4xf32>
    %285 = arith.addf %282, %284 : vector<2x4xf32>
    %c0_75 = arith.constant 0 : index
    %c0_76 = arith.constant 0 : index
    %286 = vector.load %arg14[%c0_75, %c0_76] : memref<2x4xf32, #tpu.memory_space<vmem>>, vector<2x4xf32>
    tpu.vector_store %arg14[%c0_75, %c0_76], %285 {strides = array<i32>} : memref<2x4xf32, #tpu.memory_space<vmem>>, vector<2x4xf32>,
    return
  }
  func.func @transform_0(%arg0: i32) -> (i32, i32, i32) {
    %c0_i32 = arith.constant 0 : i32
    %c0_i32_0 = arith.constant 0 : i32
    %c0_i32_1 = arith.constant 0 : i32
    %c0_i32_2 = arith.constant 0 : i32
    return %c0_i32, %c0_i32_0, %c0_i32_1 : i32, i32, i32
  }
  func.func @transform_1(%arg0: i32) -> (i32, i32, i32) {
    %c0_i32 = arith.constant 0 : i32
    %c0_i32_0 = arith.constant 0 : i32
    %c0_i32_1 = arith.constant 0 : i32
    %c0_i32_2 = arith.constant 0 : i32
    return %c0_i32, %c0_i32_0, %c0_i32_1 : i32, i32, i32
  }
  func.func @transform_2(%arg0: i32) -> (i32, i32) {
    %c0_i32 = arith.constant 0 : i32
    %c0_i32_0 = arith.constant 0 : i32
    %c0_i32_1 = arith.constant 0 : i32
    return %c0_i32, %c0_i32_0 : i32, i32
  }
  func.func @transform_3(%arg0: i32) -> (i32, i32) {
    %c0_i32 = arith.constant 0 : i32
    %c0_i32_0 = arith.constant 0 : i32
    %c0_i32_1 = arith.constant 0 : i32
    return %c0_i32, %c0_i32_0 : i32, i32
  }
  func.func @transform_4(%arg0: i32) -> (i32, i32) {
    %c0_i32 = arith.constant 0 : i32
    %c0_i32_0 = arith.constant 0 : i32
    %c0_i32_1 = arith.constant 0 : i32
    return %c0_i32, %c0_i32_0 : i32, i32
  }
  func.func @transform_5(%arg0: i32) -> (i32, i32) {
    %c0_i32 = arith.constant 0 : i32
    %c0_i32_0 = arith.constant 0 : i32
    %c0_i32_1 = arith.constant 0 : i32
    return %c0_i32, %c0_i32_0 : i32, i32
  }
  func.func @transform_6(%arg0: i32) -> (i32, i32) {
    %c0_i32 = arith.constant 0 : i32
    %c0_i32_0 = arith.constant 0 : i32
    %c0_i32_1 = arith.constant 0 : i32
    return %c0_i32, %c0_i32_0 : i32, i32
  }
  func.func @transform_7(%arg0: i32) -> (i32, i32) {
    %c0_i32 = arith.constant 0 : i32
    %c0_i32_0 = arith.constant 0 : i32
    %c0_i32_1 = arith.constant 0 : i32
    return %c0_i32, %c0_i32_0 : i32, i32
  }
  func.func @transform_8(%arg0: i32) -> (i32, i32) {
    %c0_i32 = arith.constant 0 : i32
    %c0_i32_0 = arith.constant 0 : i32
    %c0_i32_1 = arith.constant 0 : i32
    return %c0_i32, %c0_i32_0 : i32, i32
  }
  func.func @transform_9(%arg0: i32) -> (i32, i32) {
    %c0_i32 = arith.constant 0 : i32
    %c0_i32_0 = arith.constant 0 : i32
    %c0_i32_1 = arith.constant 0 : i32
    return %c0_i32, %c0_i32_0 : i32, i32
  }
  func.func @transform_10(%arg0: i32) -> (i32, i32) {
    %c0_i32 = arith.constant 0 : i32
    %c0_i32_0 = arith.constant 0 : i32
    %c0_i32_1 = arith.constant 0 : i32
    return %c0_i32, %c0_i32_0 : i32, i32
  }
  func.func @transform_11(%arg0: i32) -> (i32, i32) {
    %c0_i32 = arith.constant 0 : i32
    %c0_i32_0 = arith.constant 0 : i32
    %c0_i32_1 = arith.constant 0 : i32
    return %c0_i32, %c0_i32_0 : i32, i32
  }
  func.func @transform_12(%arg0: i32) -> (i32, i32) {
    %c0_i32 = arith.constant 0 : i32
    %c0_i32_0 = arith.constant 0 : i32
    %c0_i32_1 = arith.constant 0 : i32
    return %c0_i32, %c0_i32_0 : i32, i32
  }
  func.func @transform_13(%arg0: i32) -> (i32, i32) {
    %c0_i32 = arith.constant 0 : i32
    %c0_i32_0 = arith.constant 0 : i32
    %c0_i32_1 = arith.constant 0 : i32
    return %c0_i32, %c0_i32_0 : i32, i32
  }
}

</mosaic_0001>

<llo_original>
// kernel: tpu_custom_call.1
$region0: #{tpu_custom_call.1}
  #allocation0 [shape = 'u32[]', space=smem, size = 0x4, offset = 0x4, fixed_abs, tag = 'smem constant byte address 0x4 - core index']
  #allocation1 [shape = 'u32[144,128]{1,0:T(1,128)}', space=vmem, size = 0x12000, scoped, tag = 'internal scratch']
  %s0 = inlined_call_operand.vmem [shape: f32[16,16,8], index: 0, kind: input, shape index: {}]
  %s1 = inlined_call_operand.vmem [shape: f32[16,16,16], index: 1, kind: input, shape index: {}]
  %s2 = inlined_call_operand.vmem [shape: f32[8,32], index: 2, kind: input, shape index: {}]
  %s3 = inlined_call_operand.vmem [shape: f32[8,1], index: 3, kind: input, shape index: {}]
  %s4 = inlined_call_operand.vmem [shape: f32[1,8], index: 4, kind: input, shape index: {}]
  %s5 = inlined_call_operand.vmem [shape: f32[1,32], index: 5, kind: input, shape index: {}]
  %s6 = inlined_call_operand.vmem [shape: f32[32,128], index: 6, kind: input, shape index: {}]
  %s7 = inlined_call_operand.vmem [shape: f32[1,128], index: 7, kind: input, shape index: {}]
  %s8 = inlined_call_operand.vmem [shape: f32[32,128], index: 8, kind: input, shape index: {}]
  %s9 = inlined_call_operand.vmem [shape: f32[2,32], index: 9, kind: input, shape index: {}]
  %s10 = inlined_call_operand.vmem [shape: f32[32,4], index: 10, kind: input, shape index: {}]
  %s11 = inlined_call_operand.vmem [shape: f32[32,4], index: 11, kind: input, shape index: {}]
  %s12 = inlined_call_operand.vmem [shape: f32[1,4], index: 12, kind: input, shape index: {}]
  %s13 = inlined_call_operand.hbm [shape: f32[2,4], index: 13, kind: output, shape index: {}]
  %s14 = sld [smem:[#allocation0]]
  $region62: #{tpu_custom_call.1} parent=0
    _
  %s16 = ssub.s32 1, %s14
  %s17 = scalar_select 0, %s16, %s14
  $region1: #{tpu_custom_call.1} parent=0
    #allocation2 [shape = 'u8[1024]{0}', space=vmem, size = 0x400, scoped, tag = 'output window, operand 0, single buffered']
    #allocation3 [shape = 's32[1]{0}', space=sflag, size = 0x4, scoped, tag = 'scoped memory for tpu_custom_call.1']
    %18 = vsyncpa [#allocation3], 0
    // Predicated region
    $region2: #{tpu_custom_call.1} parent=1 // pred_check
      _
    $region3: #{tpu_custom_call.1} parent=1 // pred_check_branch
      %20 = sbr.rel (0) target = $region5
    $region4: #{tpu_custom_call.1} parent=1 // pred_region
      _
    $region5: #{tpu_custom_call.1} parent=1 // pred_fallthru
      _
    // Predicated region
    $region6: #{tpu_custom_call.1} parent=1 // pred_check
      _
    $region7: #{tpu_custom_call.1} parent=1 // pred_check_branch
      %22 = sbr.rel (0) target = $region9
    $region8: #{tpu_custom_call.1} parent=1 // pred_region
      _
    $region9: #{tpu_custom_call.1} parent=1 // pred_fallthru
      _
    // Predicated region
    $region10: #{tpu_custom_call.1} parent=1 // pred_check
      _
    $region11: #{tpu_custom_call.1} parent=1 // pred_check_branch
      %24 = sbr.rel (0) target = $region13
    $region12: #{tpu_custom_call.1} parent=1 // pred_region
      _
    $region13: #{tpu_custom_call.1} parent=1 // pred_fallthru
      _
    // Predicated region
    $region14: #{tpu_custom_call.1} parent=1 // pred_check
      _
    $region15: #{tpu_custom_call.1} parent=1 // pred_check_branch
      %26 = sbr.rel (0) target = $region17
    $region16: #{tpu_custom_call.1} parent=1 // pred_region
      _
    $region17: #{tpu_custom_call.1} parent=1 // pred_fallthru
      _
    // Predicated region
    $region18: #{tpu_custom_call.1} parent=1 // pred_check
      _
    $region19: #{tpu_custom_call.1} parent=1 // pred_check_branch
      %28 = sbr.rel (0) target = $region21
    $region20: #{tpu_custom_call.1} parent=1 // pred_region
      _
    $region21: #{tpu_custom_call.1} parent=1 // pred_fallthru
      _
    // Predicated region
    $region22: #{tpu_custom_call.1} parent=1 // pred_check
      _
    $region23: #{tpu_custom_call.1} parent=1 // pred_check_branch
      %30 = sbr.rel (0) target = $region25
    $region24: #{tpu_custom_call.1} parent=1 // pred_region
      _
    $region25: #{tpu_custom_call.1} parent=1 // pred_fallthru
      _
    // Predicated region
    $region26: #{tpu_custom_call.1} parent=1 // pred_check
      _
    $region27: #{tpu_custom_call.1} parent=1 // pred_check_branch
      %32 = sbr.rel (0) target = $region29
    $region28: #{tpu_custom_call.1} parent=1 // pred_region
      _
    $region29: #{tpu_custom_call.1} parent=1 // pred_fallthru
      _
    // Predicated region
    $region30: #{tpu_custom_call.1} parent=1 // pred_check
      _
    $region31: #{tpu_custom_call.1} parent=1 // pred_check_branch
      %34 = sbr.rel (0) target = $region33
    $region32: #{tpu_custom_call.1} parent=1 // pred_region
      _
    $region33: #{tpu_custom_call.1} parent=1 // pred_fallthru
      _
    // Predicated region
    $region34: #{tpu_custom_call.1} parent=1 // pred_check
      _
    $region35: #{tpu_custom_call.1} parent=1 // pred_check_branch
      %36 = sbr.rel (0) target = $region37
    $region36: #{tpu_custom_call.1} parent=1 // pred_region
      _
    $region37: #{tpu_custom_call.1} parent=1 // pred_fallthru
      _
    // Predicated region
    $region38: #{tpu_custom_call.1} parent=1 // pred_check
      _
    $region39: #{tpu_custom_call.1} parent=1 // pred_check_branch
      %38 = sbr.rel (0) target = $region41
    $region40: #{tpu_custom_call.1} parent=1 // pred_region
      _
    $region41: #{tpu_custom_call.1} parent=1 // pred_fallthru
      _
    // Predicated region
    $region42: #{tpu_custom_call.1} parent=1 // pred_check
      _
    $region43: #{tpu_custom_call.1} parent=1 // pred_check_branch
      %40 = sbr.rel (0) target = $region45
    $region44: #{tpu_custom_call.1} parent=1 // pred_region
      _
    $region45: #{tpu_custom_call.1} parent=1 // pred_fallthru
      _
    // Predicated region
    $region46: #{tpu_custom_call.1} parent=1 // pred_check
      _
    $region47: #{tpu_custom_call.1} parent=1 // pred_check_branch
      %42 = sbr.rel (0) target = $region49
    $region48: #{tpu_custom_call.1} parent=1 // pred_region
      _
    $region49: #{tpu_custom_call.1} parent=1 // pred_fallthru
      _
    // Predicated region
    $region50: #{tpu_custom_call.1} parent=1 // pred_check
      _
    $region51: #{tpu_custom_call.1} parent=1 // pred_check_branch
      %44 = sbr.rel (0) target = $region53
    $region52: #{tpu_custom_call.1} parent=1 // pred_region
      _
    $region53: #{tpu_custom_call.1} parent=1 // pred_fallthru
      _
    %v45 = vld [vmem:[%s0] sm:$0xff]
    %v46 = vld [vmem:[%s0 + $0x8] sm:$0xff]
    %v47 = vld [vmem:[%s0 + $0x10] sm:$0xff]
    %v48 = vld [vmem:[%s0 + $0x18] sm:$0xff]
    %v49 = vld [vmem:[%s0 + $0x20] sm:$0xff]
    %v50 = vld [vmem:[%s0 + $0x28] sm:$0xff]
    %v51 = vld [vmem:[%s0 + $0x30] sm:$0xff]
    %v52 = vld [vmem:[%s0 + $0x38] sm:$0xff]
    %v53 = vld [vmem:[%s0 + $0x40] sm:$0xff]
    %v54 = vld [vmem:[%s0 + $0x48] sm:$0xff]
    %v55 = vld [vmem:[%s0 + $0x50] sm:$0xff]
    %v56 = vld [vmem:[%s0 + $0x58] sm:$0xff]
    %v57 = vld [vmem:[%s0 + $0x60] sm:$0xff]
    %v58 = vld [vmem:[%s0 + $0x68] sm:$0xff]
    %v59 = vld [vmem:[%s0 + $0x70] sm:$0xff]
    %v60 = vld [vmem:[%s0 + $0x78] sm:$0xff]
    %v61 = vld [vmem:[%s0 + $0x80] sm:$0xff]
    %v62 = vld [vmem:[%s0 + $0x88] sm:$0xff]
    %v63 = vld [vmem:[%s0 + $0x90] sm:$0xff]
    %v64 = vld [vmem:[%s0 + $0x98] sm:$0xff]
    %v65 = vld [vmem:[%s0 + $0xa0] sm:$0xff]
    %v66 = vld [vmem:[%s0 + $0xa8] sm:$0xff]
    %v67 = vld [vmem:[%s0 + $0xb0] sm:$0xff]
    %v68 = vld [vmem:[%s0 + $0xb8] sm:$0xff]
    %v69 = vld [vmem:[%s0 + $0xc0] sm:$0xff]
    %v70 = vld [vmem:[%s0 + $0xc8] sm:$0xff]
    %v71 = vld [vmem:[%s0 + $0xd0] sm:$0xff]
    %v72 = vld [vmem:[%s0 + $0xd8] sm:$0xff]
    %v73 = vld [vmem:[%s0 + $0xe0] sm:$0xff]
    %v74 = vld [vmem:[%s0 + $0xe8] sm:$0xff]
    %v75 = vld [vmem:[%s0 + $0xf0] sm:$0xff]
    %v76 = vld [vmem:[%s0 + $0xf8] sm:$0xff]
    %v77 = vld [vmem:[%s2] sm:$0xff]
    %vm78 = vcmask 64512
    %v80 = vsel %vm78, %v45, 0
    %v83 = vsel %vm78, %v46, 0
    %v86 = vsel %vm78, %v47, 0
    %v89 = vsel %vm78, %v48, 0
    %v92 = vsel %vm78, %v49, 0
    %v95 = vsel %vm78, %v50, 0
    %v98 = vsel %vm78, %v51, 0
    %v101 = vsel %vm78, %v52, 0
    %v104 = vsel %vm78, %v53, 0
    %v107 = vsel %vm78, %v54, 0
    %v110 = vsel %vm78, %v55, 0
    %v113 = vsel %vm78, %v56, 0
    %v116 = vsel %vm78, %v57, 0
    %v119 = vsel %vm78, %v58, 0
    %v122 = vsel %vm78, %v59, 0
    %v125 = vsel %vm78, %v60, 0
    %v128 = vsel %vm78, %v61, 0
    %v131 = vsel %vm78, %v62, 0
    %v134 = vsel %vm78, %v63, 0
    %v137 = vsel %vm78, %v64, 0
    %v140 = vsel %vm78, %v65, 0
    %v143 = vsel %vm78, %v66, 0
    %v146 = vsel %vm78, %v67, 0
    %v149 = vsel %vm78, %v68, 0
    %v152 = vsel %vm78, %v69, 0
    %v155 = vsel %vm78, %v70, 0
    %v158 = vsel %vm78, %v71, 0
    %v161 = vsel %vm78, %v72, 0
    %v164 = vsel %vm78, %v73, 0
    %v167 = vsel %vm78, %v74, 0
    %v170 = vsel %vm78, %v75, 0
    %v173 = vsel %vm78, %v76, 0
    %175 = vmatprep.subr.mxu0 0.0
    %176 = vmatpush1.msra.mxu0 %v77
    %177 = vmatprep.subr.mxu0 0.0
    %178 = vmatpush1.msra.mxu0 0.0
    %179 = vmatprep.subr.mxu0 0.0
    %180 = vmatpush1.msra.mxu0 0.0
    %181 = vmatprep.subr.mxu0 0.0
    %182 = vmatpush1.msra.mxu0 0.0
    %183 = vmatprep.subr.mxu0 0.0
    %184 = vmatpush1.msra.mxu0 0.0
    %185 = vmatprep.subr.mxu0 0.0
    %186 = vmatpush1.msra.mxu0 0.0
    %187 = vmatprep.subr.mxu0 0.0
    %188 = vmatpush1.msra.mxu0 0.0
    %189 = vmatprep.subr.mxu0 0.0
    %190 = vmatpush1.msra.mxu0 0.0
    %191 = vmatprep.subr.mxu0 0.0
    %192 = vmatpush1.msra.mxu0 0.0
    %193 = vmatprep.subr.mxu0 0.0
    %194 = vmatpush1.msra.mxu0 0.0
    %195 = vmatprep.subr.mxu0 0.0
    %196 = vmatpush1.msra.mxu0 0.0
    %197 = vmatprep.subr.mxu0 0.0
    %198 = vmatpush1.msra.mxu0 0.0
    %199 = vmatprep.subr.mxu0 0.0
    %200 = vmatpush1.msra.mxu0 0.0
    %201 = vmatprep.subr.mxu0 0.0
    %202 = vmatpush1.msra.mxu0 0.0
    %203 = vmatprep.subr.mxu0 0.0
    %204 = vmatpush1.msra.mxu0 0.0
    %205 = vmatprep.subr.mxu0 0.0
    %206 = vmatpush1.msra.mxu0 0.0
    %207 = vmatprep.subr.mxu0 0.0
    %208 = vmatpush1.msra.mxu0 0.0
    %209 = vmatprep.subr.mxu0 0.0
    %210 = vmatpush1.msra.mxu0 0.0
    %211 = vmatprep.subr.mxu0 0.0
    %212 = vmatpush1.msra.mxu0 0.0
    %213 = vmatprep.subr.mxu0 0.0
    %214 = vmatpush1.msra.mxu0 0.0
    %215 = vmatprep.subr.mxu0 0.0
    %216 = vmatpush1.msra.mxu0 0.0
    %217 = vmatprep.subr.mxu0 0.0
    %218 = vmatpush1.msra.mxu0 0.0
    %219 = vmatprep.subr.mxu0 0.0
    %220 = vmatpush1.msra.mxu0 0.0
    %221 = vmatprep.subr.mxu0 0.0
    %222 = vmatpush1.msra.mxu0 0.0
    %223 = vmatprep.subr.mxu0 0.0
    %224 = vmatpush1.msra.mxu0 0.0
    %225 = vmatprep.subr.mxu0 0.0
    %226 = vmatpush1.msra.mxu0 0.0
    %227 = vmatprep.subr.mxu0 0.0
    %228 = vmatpush1.msra.mxu0 0.0
    %229 = vmatprep.subr.mxu0 0.0
    %230 = vmatpush1.msra.mxu0 0.0
    %231 = vmatprep.subr.mxu0 0.0
    %232 = vmatpush1.msra.mxu0 0.0
    %233 = vmatprep.subr.mxu0 0.0
    %234 = vmatpush1.msra.mxu0 0.0
    %235 = vmatprep.subr.mxu0 0.0
    %236 = vmatpush1.msra.mxu0 0.0
    %237 = vmatprep.subr.mxu0 0.0
    %238 = vmatpush1.msra.mxu0 0.0
    %239 = vmatprep.mubr.f32.mxu0 0.0
    %240 = vmatmul.mubr.f32.gmra.mrb[0].mxu0 %v80
    %v241 = vpop.f32.mrb[0].mxu0
    %v242 = vadd.f32 0.0, %v241
    %v243 = vpop.f32.mrb[0].mxu0
    %244 = vmatprep.mubr.f32.mxu0 0.0
    %245 = vmatmul.mubr.f32.gmra.mrb[0].mxu0 %v83
    %v246 = vpop.f32.mrb[0].mxu0
    %v247 = vadd.f32 0.0, %v246
    %v248 = vpop.f32.mrb[0].mxu0
    %249 = vmatprep.mubr.f32.mxu0 0.0
    %250 = vmatmul.mubr.f32.gmra.mrb[0].mxu0 %v86
    %v251 = vpop.f32.mrb[0].mxu0
    %v252 = vadd.f32 0.0, %v251
    %v253 = vpop.f32.mrb[0].mxu0
    %254 = vmatprep.mubr.f32.mxu0 0.0
    %255 = vmatmul.mubr.f32.gmra.mrb[0].mxu0 %v89
    %v256 = vpop.f32.mrb[0].mxu0
    %v257 = vadd.f32 0.0, %v256
    %v258 = vpop.f32.mrb[0].mxu0
    %259 = vmatprep.mubr.f32.mxu0 0.0
    %260 = vmatmul.mubr.f32.gmra.mrb[0].mxu0 %v92
    %v261 = vpop.f32.mrb[0].mxu0
    %v262 = vadd.f32 0.0, %v261
    %v263 = vpop.f32.mrb[0].mxu0
    %264 = vmatprep.mubr.f32.mxu0 0.0
    %265 = vmatmul.mubr.f32.gmra.mrb[0].mxu0 %v95
    %v266 = vpop.f32.mrb[0].mxu0
    %v267 = vadd.f32 0.0, %v266
    %v268 = vpop.f32.mrb[0].mxu0
    %269 = vmatprep.mubr.f32.mxu0 0.0
    %270 = vmatmul.mubr.f32.gmra.mrb[0].mxu0 %v98
    %v271 = vpop.f32.mrb[0].mxu0
    %v272 = vadd.f32 0.0, %v271
    %v273 = vpop.f32.mrb[0].mxu0
    %274 = vmatprep.mubr.f32.mxu0 0.0
    %275 = vmatmul.mubr.f32.gmra.mrb[0].mxu0 %v101
    %v276 = vpop.f32.mrb[0].mxu0
    %v277 = vadd.f32 0.0, %v276
    %v278 = vpop.f32.mrb[0].mxu0
    %279 = vmatprep.mubr.f32.mxu0 0.0
    %280 = vmatmul.mubr.f32.gmra.mrb[0].mxu0 %v104
    %v281 = vpop.f32.mrb[0].mxu0
    %v282 = vadd.f32 0.0, %v281
    %v283 = vpop.f32.mrb[0].mxu0
    %284 = vmatprep.mubr.f32.mxu0 0.0
    %285 = vmatmul.mubr.f32.gmra.mrb[0].mxu0 %v107
    %v286 = vpop.f32.mrb[0].mxu0
    %v287 = vadd.f32 0.0, %v286
    %v288 = vpop.f32.mrb[0].mxu0
    %289 = vmatprep.mubr.f32.mxu0 0.0
    %290 = vmatmul.mubr.f32.gmra.mrb[0].mxu0 %v110
    %v291 = vpop.f32.mrb[0].mxu0
    %v292 = vadd.f32 0.0, %v291
    %v293 = vpop.f32.mrb[0].mxu0
    %294 = vmatprep.mubr.f32.mxu0 0.0
    %295 = vmatmul.mubr.f32.gmra.mrb[0].mxu0 %v113
    %v296 = vpop.f32.mrb[0].mxu0
    %v297 = vadd.f32 0.0, %v296
    %v298 = vpop.f32.mrb[0].mxu0
    %299 = vmatprep.mubr.f32.mxu0 0.0
    %300 = vmatmul.mubr.f32.gmra.mrb[0].mxu0 %v116
    %v301 = vpop.f32.mrb[0].mxu0
    %v302 = vadd.f32 0.0, %v301
    %v303 = vpop.f32.mrb[0].mxu0
    %304 = vmatprep.mubr.f32.mxu0 0.0
    %305 = vmatmul.mubr.f32.gmra.mrb[0].mxu0 %v119
    %v306 = vpop.f32.mrb[0].mxu0
    %v307 = vadd.f32 0.0, %v306
    %v308 = vpop.f32.mrb[0].mxu0
    %309 = vmatprep.mubr.f32.mxu0 0.0
    %310 = vmatmul.mubr.f32.gmra.mrb[0].mxu0 %v122
    %v311 = vpop.f32.mrb[0].mxu0
    %v312 = vadd.f32 0.0, %v311
    %v313 = vpop.f32.mrb[0].mxu0
    %314 = vmatprep.mubr.f32.mxu0 0.0
    %315 = vmatmul.mubr.f32.gmra.mrb[0].mxu0 %v125
    %v316 = vpop.f32.mrb[0].mxu0
    %v317 = vadd.f32 0.0, %v316
    %v318 = vpop.f32.mrb[0].mxu0
    %319 = vmatprep.mubr.f32.mxu0 0.0
    %320 = vmatmul.mubr.f32.gmra.mrb[0].mxu0 %v128
    %v321 = vpop.f32.mrb[0].mxu0
    %v322 = vadd.f32 0.0, %v321
    %v323 = vpop.f32.mrb[0].mxu0
    %324 = vmatprep.mubr.f32.mxu0 0.0
    %325 = vmatmul.mubr.f32.gmra.mrb[0].mxu0 %v131
    %v326 = vpop.f32.mrb[0].mxu0
    %v327 = vadd.f32 0.0, %v326
    %v328 = vpop.f32.mrb[0].mxu0
    %329 = vmatprep.mubr.f32.mxu0 0.0
    %330 = vmatmul.mubr.f32.gmra.mrb[0].mxu0 %v134
    %v331 = vpop.f32.mrb[0].mxu0
    %v332 = vadd.f32 0.0, %v331
    %v333 = vpop.f32.mrb[0].mxu0
    %334 = vmatprep.mubr.f32.mxu0 0.0
    %335 = vmatmul.mubr.f32.gmra.mrb[0].mxu0 %v137
    %v336 = vpop.f32.mrb[0].mxu0
    %v337 = vadd.f32 0.0, %v336
    %v338 = vpop.f32.mrb[0].mxu0
    %339 = vmatprep.mubr.f32.mxu0 0.0
    %340 = vmatmul.mubr.f32.gmra.mrb[0].mxu0 %v140
    %v341 = vpop.f32.mrb[0].mxu0
    %v342 = vadd.f32 0.0, %v341
    %v343 = vpop.f32.mrb[0].mxu0
    %344 = vmatprep.mubr.f32.mxu0 0.0
    %345 = vmatmul.mubr.f32.gmra.mrb[0].mxu0 %v143
    %v346 = vpop.f32.mrb[0].mxu0
    %v347 = vadd.f32 0.0, %v346
    %v348 = vpop.f32.mrb[0].mxu0
    %349 = vmatprep.mubr.f32.mxu0 0.0
    %350 = vmatmul.mubr.f32.gmra.mrb[0].mxu0 %v146
    %v351 = vpop.f32.mrb[0].mxu0
    %v352 = vadd.f32 0.0, %v351
    %v353 = vpop.f32.mrb[0].mxu0
    %354 = vmatprep.mubr.f32.mxu0 0.0
    %355 = vmatmul.mubr.f32.gmra.mrb[0].mxu0 %v149
    %v356 = vpop.f32.mrb[0].mxu0
    %v357 = vadd.f32 0.0, %v356
    %v358 = vpop.f32.mrb[0].mxu0
    %359 = vmatprep.mubr.f32.mxu0 0.0
    %360 = vmatmul.mubr.f32.gmra.mrb[0].mxu0 %v152
    %v361 = vpop.f32.mrb[0].mxu0
    %v362 = vadd.f32 0.0, %v361
    %v363 = vpop.f32.mrb[0].mxu0
    %364 = vmatprep.mubr.f32.mxu0 0.0
    %365 = vmatmul.mubr.f32.gmra.mrb[0].mxu0 %v155
    %v366 = vpop.f32.mrb[0].mxu0
    %v367 = vadd.f32 0.0, %v366
    %v368 = vpop.f32.mrb[0].mxu0
    %369 = vmatprep.mubr.f32.mxu0 0.0
    %370 = vmatmul.mubr.f32.gmra.mrb[0].mxu0 %v158
    %v371 = vpop.f32.mrb[0].mxu0
    %v372 = vadd.f32 0.0, %v371
    %v373 = vpop.f32.mrb[0].mxu0
    %374 = vmatprep.mubr.f32.mxu0 0.0
    %375 = vmatmul.mubr.f32.gmra.mrb[0].mxu0 %v161
    %v376 = vpop.f32.mrb[0].mxu0
    %v377 = vadd.f32 0.0, %v376
    %v378 = vpop.f32.mrb[0].mxu0
    %379 = vmatprep.mubr.f32.mxu0 0.0
    %380 = vmatmul.mubr.f32.gmra.mrb[0].mxu0 %v164
    %v381 = vpop.f32.mrb[0].mxu0
    %v382 = vadd.f32 0.0, %v381
    %v383 = vpop.f32.mrb[0].mxu0
    %384 = vmatprep.mubr.f32.mxu0 0.0
    %385 = vmatmul.mubr.f32.gmra.mrb[0].mxu0 %v167
    %v386 = vpop.f32.mrb[0].mxu0
    %v387 = vadd.f32 0.0, %v386
    %v388 = vpop.f32.mrb[0].mxu0
    %389 = vmatprep.mubr.f32.mxu0 0.0
    %390 = vmatmul.mubr.f32.gmra.mrb[0].mxu0 %v170
    %v391 = vpop.f32.mrb[0].mxu0
    %v392 = vadd.f32 0.0, %v391
    %v393 = vpop.f32.mrb[0].mxu0
    %394 = vmatprep.mubr.f32.mxu0 0.0
    %395 = vmatmul.mubr.f32.gmra.mrb[0].mxu0 %v173
    %v396 = vpop.f32.mrb[0].mxu0
    %v397 = vadd.f32 0.0, %v396
    %v398 = vpop.f32.mrb[0].mxu0
    %399 = vdwg.mxu0
    %v400 = vld [vmem:[%s3] sm:$0xff]
    %401 = vmatprep.subr.mxu0 0.0
    %402 = vmatpush1.msra.mxu0 %v400
    %403 = vmatprep.subr.mxu0 0.0
    %404 = vmatpush1.msra.mxu0 0.0
    %405 = vmatprep.subr.mxu0 0.0
    %406 = vmatpush1.msra.mxu0 0.0
    %407 = vmatprep.subr.mxu0 0.0
    %408 = vmatpush1.msra.mxu0 0.0
    %409 = vmatprep.subr.mxu0 0.0
    %410 = vmatpush1.msra.mxu0 0.0
    %411 = vmatprep.subr.mxu0 0.0
    %412 = vmatpush1.msra.mxu0 0.0
    %413 = vmatprep.subr.mxu0 0.0
    %414 = vmatpush1.msra.mxu0 0.0
    %415 = vmatprep.subr.mxu0 0.0
    %416 = vmatpush1.msra.mxu0 0.0
    %417 = vmatprep.subr.mxu0 0.0
    %418 = vmatpush1.msra.mxu0 0.0
    %419 = vmatprep.subr.mxu0 0.0
    %420 = vmatpush1.msra.mxu0 0.0
    %421 = vmatprep.subr.mxu0 0.0
    %422 = vmatpush1.msra.mxu0 0.0
    %423 = vmatprep.subr.mxu0 0.0
    %424 = vmatpush1.msra.mxu0 0.0
    %425 = vmatprep.subr.mxu0 0.0
    %426 = vmatpush1.msra.mxu0 0.0
    %427 = vmatprep.subr.mxu0 0.0
    %428 = vmatpush1.msra.mxu0 0.0
    %429 = vmatprep.subr.mxu0 0.0
    %430 = vmatpush1.msra.mxu0 0.0
    %431 = vmatprep.subr.mxu0 0.0
    %432 = vmatpush1.msra.mxu0 0.0
    %433 = vmatprep.subr.mxu0 0.0
    %434 = vmatpush1.msra.mxu0 0.0
    %435 = vmatprep.subr.mxu0 0.0
    %436 = vmatpush1.msra.mxu0 0.0
    %437 = vmatprep.subr.mxu0 0.0
    %438 = vmatpush1.msra.mxu0 0.0
    %439 = vmatprep.subr.mxu0 0.0
    %440 = vmatpush1.msra.mxu0 0.0
    %441 = vmatprep.subr.mxu0 0.0
    %442 = vmatpush1.msra.mxu0 0.0
    %443 = vmatprep.subr.mxu0 0.0
    %444 = vmatpush1.msra.mxu0 0.0
    %445 = vmatprep.subr.mxu0 0.0
    %446 = vmatpush1.msra.mxu0 0.0
    %447 = vmatprep.subr.mxu0 0.0
    %448 = vmatpush1.msra.mxu0 0.0
    %449 = vmatprep.subr.mxu0 0.0
    %450 = vmatpush1.msra.mxu0 0.0
    %451 = vmatprep.subr.mxu0 0.0
    %452 = vmatpush1.msra.mxu0 0.0
    %453 = vmatprep.subr.mxu0 0.0
    %454 = vmatpush1.msra.mxu0 0.0
    %455 = vmatprep.subr.mxu0 0.0
    %456 = vmatpush1.msra.mxu0 0.0
    %457 = vmatprep.subr.mxu0 0.0
    %458 = vmatpush1.msra.mxu0 0.0
    %459 = vmatprep.subr.mxu0 0.0
    %460 = vmatpush1.msra.mxu0 0.0
    %461 = vmatprep.subr.mxu0 0.0
    %462 = vmatpush1.msra.mxu0 0.0
    %463 = vmatprep.subr.mxu0 0.0
    %464 = vmatpush1.msra.mxu0 0.0
    %465 = vmatprep.mubr.f32.mxu0 0.0
    %466 = vmatmul.mubr.f32.gmra.mrb[0].mxu0 %v80
    %v467 = vpop.f32.mrb[0].mxu0
    %v468 = vadd.f32 0.0, %v467
    %v469 = vpop.f32.mrb[0].mxu0
    %470 = vmatprep.mubr.f32.mxu0 0.0
    %471 = vmatmul.mubr.f32.gmra.mrb[0].mxu0 %v83
    %v472 = vpop.f32.mrb[0].mxu0
    %v473 = vadd.f32 0.0, %v472
    %v474 = vpop.f32.mrb[0].mxu0
    %475 = vmatprep.mubr.f32.mxu0 0.0
    %476 = vmatmul.mubr.f32.gmra.mrb[0].mxu0 %v86
    %v477 = vpop.f32.mrb[0].mxu0
    %v478 = vadd.f32 0.0, %v477
    %v479 = vpop.f32.mrb[0].mxu0
    %480 = vmatprep.mubr.f32.mxu0 0.0
    %481 = vmatmul.mubr.f32.gmra.mrb[0].mxu0 %v89
    %v482 = vpop.f32.mrb[0].mxu0
    %v483 = vadd.f32 0.0, %v482
    %v484 = vpop.f32.mrb[0].mxu0
    %485 = vmatprep.mubr.f32.mxu0 0.0
    %486 = vmatmul.mubr.f32.gmra.mrb[0].mxu0 %v92
    %v487 = vpop.f32.mrb[0].mxu0
    %v488 = vadd.f32 0.0, %v487
    %v489 = vpop.f32.mrb[0].mxu0
    %490 = vmatprep.mubr.f32.mxu0 0.0
    %491 = vmatmul.mubr.f32.gmra.mrb[0].mxu0 %v95
    %v492 = vpop.f32.mrb[0].mxu0
    %v493 = vadd.f32 0.0, %v492
    %v494 = vpop.f32.mrb[0].mxu0
    %495 = vmatprep.mubr.f32.mxu0 0.0
    %496 = vmatmul.mubr.f32.gmra.mrb[0].mxu0 %v98
    %v497 = vpop.f32.mrb[0].mxu0
    %v498 = vadd.f32 0.0, %v497
    %v499 = vpop.f32.mrb[0].mxu0
    %500 = vmatprep.mubr.f32.mxu0 0.0
    %501 = vmatmul.mubr.f32.gmra.mrb[0].mxu0 %v101
    %v502 = vpop.f32.mrb[0].mxu0
    %v503 = vadd.f32 0.0, %v502
    %v504 = vpop.f32.mrb[0].mxu0
    %505 = vmatprep.mubr.f32.mxu0 0.0
    %506 = vmatmul.mubr.f32.gmra.mrb[0].mxu0 %v104
    %v507 = vpop.f32.mrb[0].mxu0
    %v508 = vadd.f32 0.0, %v507
    %v509 = vpop.f32.mrb[0].mxu0
    %510 = vmatprep.mubr.f32.mxu0 0.0
    %511 = vmatmul.mubr.f32.gmra.mrb[0].mxu0 %v107
    %v512 = vpop.f32.mrb[0].mxu0
    %v513 = vadd.f32 0.0, %v512
    %v514 = vpop.f32.mrb[0].mxu0
    %515 = vmatprep.mubr.f32.mxu0 0.0
    %516 = vmatmul.mubr.f32.gmra.mrb[0].mxu0 %v110
    %v517 = vpop.f32.mrb[0].mxu0
    %v518 = vadd.f32 0.0, %v517
    %v519 = vpop.f32.mrb[0].mxu0
    %520 = vmatprep.mubr.f32.mxu0 0.0
    %521 = vmatmul.mubr.f32.gmra.mrb[0].mxu0 %v113
    %v522 = vpop.f32.mrb[0].mxu0
    %v523 = vadd.f32 0.0, %v522
    %v524 = vpop.f32.mrb[0].mxu0
    %525 = vmatprep.mubr.f32.mxu0 0.0
    %526 = vmatmul.mubr.f32.gmra.mrb[0].mxu0 %v116
    %v527 = vpop.f32.mrb[0].mxu0
    %v528 = vadd.f32 0.0, %v527
    %v529 = vpop.f32.mrb[0].mxu0
    %530 = vmatprep.mubr.f32.mxu0 0.0
    %531 = vmatmul.mubr.f32.gmra.mrb[0].mxu0 %v119
    %v532 = vpop.f32.mrb[0].mxu0
    %v533 = vadd.f32 0.0, %v532
    %v534 = vpop.f32.mrb[0].mxu0
    %535 = vmatprep.mubr.f32.mxu0 0.0
    %536 = vmatmul.mubr.f32.gmra.mrb[0].mxu0 %v122
    %v537 = vpop.f32.mrb[0].mxu0
    %v538 = vadd.f32 0.0, %v537
    %v539 = vpop.f32.mrb[0].mxu0
    %540 = vmatprep.mubr.f32.mxu0 0.0
    %541 = vmatmul.mubr.f32.gmra.mrb[0].mxu0 %v125
    %v542 = vpop.f32.mrb[0].mxu0
    %v543 = vadd.f32 0.0, %v542
    %v544 = vpop.f32.mrb[0].mxu0
    %545 = vmatprep.mubr.f32.mxu0 0.0
    %546 = vmatmul.mubr.f32.gmra.mrb[0].mxu0 %v128
    %v547 = vpop.f32.mrb[0].mxu0
    %v548 = vadd.f32 0.0, %v547
    %v549 = vpop.f32.mrb[0].mxu0
    %550 = vmatprep.mubr.f32.mxu0 0.0
    %551 = vmatmul.mubr.f32.gmra.mrb[0].mxu0 %v131
    %v552 = vpop.f32.mrb[0].mxu0
    %v553 = vadd.f32 0.0, %v552
    %v554 = vpop.f32.mrb[0].mxu0
    %555 = vmatprep.mubr.f32.mxu0 0.0
    %556 = vmatmul.mubr.f32.gmra.mrb[0].mxu0 %v134
    %v557 = vpop.f32.mrb[0].mxu0
    %v558 = vadd.f32 0.0, %v557
    %v559 = vpop.f32.mrb[0].mxu0
    %560 = vmatprep.mubr.f32.mxu0 0.0
    %561 = vmatmul.mubr.f32.gmra.mrb[0].mxu0 %v137
    %v562 = vpop.f32.mrb[0].mxu0
    %v563 = vadd.f32 0.0, %v562
    %v564 = vpop.f32.mrb[0].mxu0
    %565 = vmatprep.mubr.f32.mxu0 0.0
    %566 = vmatmul.mubr.f32.gmra.mrb[0].mxu0 %v140
    %v567 = vpop.f32.mrb[0].mxu0
    %v568 = vadd.f32 0.0, %v567
    %v569 = vpop.f32.mrb[0].mxu0
    %570 = vmatprep.mubr.f32.mxu0 0.0
    %571 = vmatmul.mubr.f32.gmra.mrb[0].mxu0 %v143
    %v572 = vpop.f32.mrb[0].mxu0
    %v573 = vadd.f32 0.0, %v572
    %v574 = vpop.f32.mrb[0].mxu0
    %575 = vmatprep.mubr.f32.mxu0 0.0
    %576 = vmatmul.mubr.f32.gmra.mrb[0].mxu0 %v146
    %v577 = vpop.f32.mrb[0].mxu0
    %v578 = vadd.f32 0.0, %v577
    %v579 = vpop.f32.mrb[0].mxu0
    %580 = vmatprep.mubr.f32.mxu0 0.0
    %581 = vmatmul.mubr.f32.gmra.mrb[0].mxu0 %v149
    %v582 = vpop.f32.mrb[0].mxu0
    %v583 = vadd.f32 0.0, %v582
    %v584 = vpop.f32.mrb[0].mxu0
    %585 = vmatprep.mubr.f32.mxu0 0.0
    %586 = vmatmul.mubr.f32.gmra.mrb[0].mxu0 %v152
    %v587 = vpop.f32.mrb[0].mxu0
    %v588 = vadd.f32 0.0, %v587
    %v589 = vpop.f32.mrb[0].mxu0
    %590 = vmatprep.mubr.f32.mxu0 0.0
    %591 = vmatmul.mubr.f32.gmra.mrb[0].mxu0 %v155
    %v592 = vpop.f32.mrb[0].mxu0
    %v593 = vadd.f32 0.0, %v592
    %v594 = vpop.f32.mrb[0].mxu0
    %595 = vmatprep.mubr.f32.mxu0 0.0
    %596 = vmatmul.mubr.f32.gmra.mrb[0].mxu0 %v158
    %v597 = vpop.f32.mrb[0].mxu0
    %v598 = vadd.f32 0.0, %v597
    %v599 = vpop.f32.mrb[0].mxu0
    %600 = vmatprep.mubr.f32.mxu0 0.0
    %601 = vmatmul.mubr.f32.gmra.mrb[0].mxu0 %v161
    %v602 = vpop.f32.mrb[0].mxu0
    %v603 = vadd.f32 0.0, %v602
    %v604 = vpop.f32.mrb[0].mxu0
    %605 = vmatprep.mubr.f32.mxu0 0.0
    %606 = vmatmul.mubr.f32.gmra.mrb[0].mxu0 %v164
    %v607 = vpop.f32.mrb[0].mxu0
    %v608 = vadd.f32 0.0, %v607
    %v609 = vpop.f32.mrb[0].mxu0
    %610 = vmatprep.mubr.f32.mxu0 0.0
    %611 = vmatmul.mubr.f32.gmra.mrb[0].mxu0 %v167
    %v612 = vpop.f32.mrb[0].mxu0
    %v613 = vadd.f32 0.0, %v612
    %v614 = vpop.f32.mrb[0].mxu0
    %615 = vmatprep.mubr.f32.mxu0 0.0
    %616 = vmatmul.mubr.f32.gmra.mrb[0].mxu0 %v170
    %v617 = vpop.f32.mrb[0].mxu0
    %v618 = vadd.f32 0.0, %v617
    %v619 = vpop.f32.mrb[0].mxu0
    %620 = vmatprep.mubr.f32.mxu0 0.0
    %621 = vmatmul.mubr.f32.gmra.mrb[0].mxu0 %v173
    %v622 = vpop.f32.mrb[0].mxu0
    %v623 = vadd.f32 0.0, %v622
    %v624 = vpop.f32.mrb[0].mxu0
    %625 = vdwg.mxu0
    %v626 = vld [vmem:[%s4] sm:$0x1]
    %v628 = vsel %vm78, %v626, 0
    %630 = vmatprep.subr.mxu0 0.0
    %631 = vmatpush1.xpose.msra.mxu0 %v80
    %632 = vmatprep.subr.mxu0 0.0
    %633 = vmatpush1.xpose.msra.mxu0 %v83
    %634 = vmatprep.subr.mxu0 0.0
    %635 = vmatpush1.xpose.msra.mxu0 0.0
    %636 = vmatprep.subr.mxu0 0.0
    %637 = vmatpush1.xpose.msra.mxu0 0.0
    %638 = vmatprep.subr.mxu0 0.0
    %639 = vmatpush1.xpose.msra.mxu0 0.0
    %640 = vmatprep.subr.mxu0 0.0
    %641 = vmatpush1.xpose.msra.mxu0 0.0
    %642 = vmatprep.subr.mxu0 0.0
    %643 = vmatpush1.xpose.msra.mxu0 0.0
    %644 = vmatprep.subr.mxu0 0.0
    %645 = vmatpush1.xpose.msra.mxu0 0.0
    %646 = vmatprep.subr.mxu0 0.0
    %647 = vmatpush1.xpose.msra.mxu0 0.0
    %648 = vmatprep.subr.mxu0 0.0
    %649 = vmatpush1.xpose.msra.mxu0 0.0
    %650 = vmatprep.subr.mxu0 0.0
    %651 = vmatpush1.xpose.msra.mxu0 0.0
    %652 = vmatprep.subr.mxu0 0.0
    %653 = vmatpush1.xpose.msra.mxu0 0.0
    %654 = vmatprep.subr.mxu0 0.0
    %655 = vmatpush1.xpose.msra.mxu0 0.0
    %656 = vmatprep.subr.mxu0 0.0
    %657 = vmatpush1.xpose.msra.mxu0 0.0
    %658 = vmatprep.subr.mxu0 0.0
    %659 = vmatpush1.xpose.msra.mxu0 0.0
    %660 = vmatprep.subr.mxu0 0.0
    %661 = vmatpush1.xpose.msra.mxu0 0.0
    %662 = vmatprep.subr.mxu0 0.0
    %663 = vmatpush1.xpose.msra.mxu0 0.0
    %664 = vmatprep.subr.mxu0 0.0
    %665 = vmatpush1.xpose.msra.mxu0 0.0
    %666 = vmatprep.subr.mxu0 0.0
    %667 = vmatpush1.xpose.msra.mxu0 0.0
    %668 = vmatprep.subr.mxu0 0.0
    %669 = vmatpush1.xpose.msra.mxu0 0.0
    %670 = vmatprep.subr.mxu0 0.0
    %671 = vmatpush1.xpose.msra.mxu0 0.0
    %672 = vmatprep.subr.mxu0 0.0
    %673 = vmatpush1.xpose.msra.mxu0 0.0
    %674 = vmatprep.subr.mxu0 0.0
    %675 = vmatpush1.xpose.msra.mxu0 0.0
    %676 = vmatprep.subr.mxu0 0.0
    %677 = vmatpush1.xpose.msra.mxu0 0.0
    %678 = vmatprep.subr.mxu0 0.0
    %679 = vmatpush1.xpose.msra.mxu0 0.0
    %680 = vmatprep.subr.mxu0 0.0
    %681 = vmatpush1.xpose.msra.mxu0 0.0
    %682 = vmatprep.subr.mxu0 0.0
    %683 = vmatpush1.xpose.msra.mxu0 0.0
    %684 = vmatprep.subr.mxu0 0.0
    %685 = vmatpush1.xpose.msra.mxu0 0.0
    %686 = vmatprep.subr.mxu0 0.0
    %687 = vmatpush1.xpose.msra.mxu0 0.0
    %688 = vmatprep.subr.mxu0 0.0
    %689 = vmatpush1.xpose.msra.mxu0 0.0
    %690 = vmatprep.subr.mxu0 0.0
    %691 = vmatpush1.xpose.msra.mxu0 0.0
    %692 = vmatprep.subr.mxu0 0.0
    %693 = vmatpush1.xpose.msra.mxu0 0.0
    %694 = vmatprep.mubr.f32.mxu0 0.0
    %695 = vmatmul.mubr.f32.gmra.mrb[0].mxu0 %v628
    %v696 = vpop.f32.mrb[0].mxu0
    %v697 = vadd.f32 0.0, %v696
    %v698 = vpop.f32.mrb[0].mxu0
    %699 = vdwg.mxu0
    %700 = vmatprep.subr.mxu0 0.0
    %701 = vmatpush1.xpose.msra.mxu0 %v86
    %702 = vmatprep.subr.mxu0 0.0
    %703 = vmatpush1.xpose.msra.mxu0 %v89
    %704 = vmatprep.subr.mxu0 0.0
    %705 = vmatpush1.xpose.msra.mxu0 0.0
    %706 = vmatprep.subr.mxu0 0.0
    %707 = vmatpush1.xpose.msra.mxu0 0.0
    %708 = vmatprep.subr.mxu0 0.0
    %709 = vmatpush1.xpose.msra.mxu0 0.0
    %710 = vmatprep.subr.mxu0 0.0
    %711 = vmatpush1.xpose.msra.mxu0 0.0
    %712 = vmatprep.subr.mxu0 0.0
    %713 = vmatpush1.xpose.msra.mxu0 0.0
    %714 = vmatprep.subr.mxu0 0.0
    %715 = vmatpush1.xpose.msra.mxu0 0.0
    %716 = vmatprep.subr.mxu0 0.0
    %717 = vmatpush1.xpose.msra.mxu0 0.0
    %718 = vmatprep.subr.mxu0 0.0
    %719 = vmatpush1.xpose.msra.mxu0 0.0
    %720 = vmatprep.subr.mxu0 0.0
    %721 = vmatpush1.xpose.msra.mxu0 0.0
    %722 = vmatprep.subr.mxu0 0.0
    %723 = vmatpush1.xpose.msra.mxu0 0.0
    %724 = vmatprep.subr.mxu0 0.0
    %725 = vmatpush1.xpose.msra.mxu0 0.0
    %726 = vmatprep.subr.mxu0 0.0
    %727 = vmatpush1.xpose.msra.mxu0 0.0
    %728 = vmatprep.subr.mxu0 0.0
    %729 = vmatpush1.xpose.msra.mxu0 0.0
    %730 = vmatprep.subr.mxu0 0.0
    %731 = vmatpush1.xpose.msra.mxu0 0.0
    %732 = vmatprep.subr.mxu0 0.0
    %733 = vmatpush1.xpose.msra.mxu0 0.0
    %734 = vmatprep.subr.mxu0 0.0
    %735 = vmatpush1.xpose.msra.mxu0 0.0
    %736 = vmatprep.subr.mxu0 0.0
    %737 = vmatpush1.xpose.msra.mxu0 0.0
    %738 = vmatprep.subr.mxu0 0.0
    %739 = vmatpush1.xpose.msra.mxu0 0.0
    %740 = vmatprep.subr.mxu0 0.0
    %741 = vmatpush1.xpose.msra.mxu0 0.0
    %742 = vmatprep.subr.mxu0 0.0
    %743 = vmatpush1.xpose.msra.mxu0 0.0
    %744 = vmatprep.subr.mxu0 0.0
    %745 = vmatpush1.xpose.msra.mxu0 0.0
    %746 = vmatprep.subr.mxu0 0.0
    %747 = vmatpush1.xpose.msra.mxu0 0.0
    %748 = vmatprep.subr.mxu0 0.0
    %749 = vmatpush1.xpose.msra.mxu0 0.0
    %750 = vmatprep.subr.mxu0 0.0
    %751 = vmatpush1.xpose.msra.mxu0 0.0
    %752 = vmatprep.subr.mxu0 0.0
    %753 = vmatpush1.xpose.msra.mxu0 0.0
    %754 = vmatprep.subr.mxu0 0.0
    %755 = vmatpush1.xpose.msra.mxu0 0.0
    %756 = vmatprep.subr.mxu0 0.0
    %757 = vmatpush1.xpose.msra.mxu0 0.0
    %758 = vmatprep.subr.mxu0 0.0
    %759 = vmatpush1.xpose.msra.mxu0 0.0
    %760 = vmatprep.subr.mxu0 0.0
    %761 = vmatpush1.xpose.msra.mxu0 0.0
    %762 = vmatprep.subr.mxu0 0.0
    %763 = vmatpush1.xpose.msra.mxu0 0.0
    %764 = vmatprep.mubr.f32.mxu0 0.0
    %765 = vmatmul.mubr.f32.gmra.mrb[0].mxu0 %v628
    %v766 = vpop.f32.mrb[0].mxu0
    %v767 = vadd.f32 0.0, %v766
    %v768 = vpop.f32.mrb[0].mxu0
    %769 = vdwg.mxu0
    %770 = vmatprep.subr.mxu0 0.0
    %771 = vmatpush1.xpose.msra.mxu0 %v92
    %772 = vmatprep.subr.mxu0 0.0
    %773 = vmatpush1.xpose.msra.mxu0 %v95
    %774 = vmatprep.subr.mxu0 0.0
    %775 = vmatpush1.xpose.msra.mxu0 0.0
    %776 = vmatprep.subr.mxu0 0.0
    %777 = vmatpush1.xpose.msra.mxu0 0.0
    %778 = vmatprep.subr.mxu0 0.0
    %779 = vmatpush1.xpose.msra.mxu0 0.0
    %780 = vmatprep.subr.mxu0 0.0
    %781 = vmatpush1.xpose.msra.mxu0 0.0
    %782 = vmatprep.subr.mxu0 0.0
    %783 = vmatpush1.xpose.msra.mxu0 0.0
    %784 = vmatprep.subr.mxu0 0.0
    %785 = vmatpush1.xpose.msra.mxu0 0.0
    %786 = vmatprep.subr.mxu0 0.0
    %787 = vmatpush1.xpose.msra.mxu0 0.0
    %788 = vmatprep.subr.mxu0 0.0
    %789 = vmatpush1.xpose.msra.mxu0 0.0
    %790 = vmatprep.subr.mxu0 0.0
    %791 = vmatpush1.xpose.msra.mxu0 0.0
    %792 = vmatprep.subr.mxu0 0.0
    %793 = vmatpush1.xpose.msra.mxu0 0.0
    %794 = vmatprep.subr.mxu0 0.0
    %795 = vmatpush1.xpose.msra.mxu0 0.0
    %796 = vmatprep.subr.mxu0 0.0
    %797 = vmatpush1.xpose.msra.mxu0 0.0
    %798 = vmatprep.subr.mxu0 0.0
    %799 = vmatpush1.xpose.msra.mxu0 0.0
    %800 = vmatprep.subr.mxu0 0.0
    %801 = vmatpush1.xpose.msra.mxu0 0.0
    %802 = vmatprep.subr.mxu0 0.0
    %803 = vmatpush1.xpose.msra.mxu0 0.0
    %804 = vmatprep.subr.mxu0 0.0
    %805 = vmatpush1.xpose.msra.mxu0 0.0
    %806 = vmatprep.subr.mxu0 0.0
    %807 = vmatpush1.xpose.msra.mxu0 0.0
    %808 = vmatprep.subr.mxu0 0.0
    %809 = vmatpush1.xpose.msra.mxu0 0.0
    %810 = vmatprep.subr.mxu0 0.0
    %811 = vmatpush1.xpose.msra.mxu0 0.0
    %812 = vmatprep.subr.mxu0 0.0
    %813 = vmatpush1.xpose.msra.mxu0 0.0
    %814 = vmatprep.subr.mxu0 0.0
    %815 = vmatpush1.xpose.msra.mxu0 0.0
    %816 = vmatprep.subr.mxu0 0.0
    %817 = vmatpush1.xpose.msra.mxu0 0.0
    %818 = vmatprep.subr.mxu0 0.0
    %819 = vmatpush1.xpose.msra.mxu0 0.0
    %820 = vmatprep.subr.mxu0 0.0
    %821 = vmatpush1.xpose.msra.mxu0 0.0
    %822 = vmatprep.subr.mxu0 0.0
    %823 = vmatpush1.xpose.msra.mxu0 0.0
    %824 = vmatprep.subr.mxu0 0.0
    %825 = vmatpush1.xpose.msra.mxu0 0.0
    %826 = vmatprep.subr.mxu0 0.0
    %827 = vmatpush1.xpose.msra.mxu0 0.0
    %828 = vmatprep.subr.mxu0 0.0
    %829 = vmatpush1.xpose.msra.mxu0 0.0
    %830 = vmatprep.subr.mxu0 0.0
    %831 = vmatpush1.xpose.msra.mxu0 0.0
    %832 = vmatprep.subr.mxu0 0.0
    %833 = vmatpush1.xpose.msra.mxu0 0.0
    %834 = vmatprep.mubr.f32.mxu0 0.0
    %835 = vmatmul.mubr.f32.gmra.mrb[0].mxu0 %v628
    %v836 = vpop.f32.mrb[0].mxu0
    %v837 = vadd.f32 0.0, %v836
    %v838 = vpop.f32.mrb[0].mxu0
    %839 = vdwg.mxu0
    %840 = vmatprep.subr.mxu0 0.0
    %841 = vmatpush1.xpose.msra.mxu0 %v98
    %842 = vmatprep.subr.mxu0 0.0
    %843 = vmatpush1.xpose.msra.mxu0 %v101
    %844 = vmatprep.subr.mxu0 0.0
    %845 = vmatpush1.xpose.msra.mxu0 0.0
    %846 = vmatprep.subr.mxu0 0.0
    %847 = vmatpush1.xpose.msra.mxu0 0.0
    %848 = vmatprep.subr.mxu0 0.0
    %849 = vmatpush1.xpose.msra.mxu0 0.0
    %850 = vmatprep.subr.mxu0 0.0
    %851 = vmatpush1.xpose.msra.mxu0 0.0
    %852 = vmatprep.subr.mxu0 0.0
    %853 = vmatpush1.xpose.msra.mxu0 0.0
    %854 = vmatprep.subr.mxu0 0.0
    %855 = vmatpush1.xpose.msra.mxu0 0.0
    %856 = vmatprep.subr.mxu0 0.0
    %857 = vmatpush1.xpose.msra.mxu0 0.0
    %858 = vmatprep.subr.mxu0 0.0
    %859 = vmatpush1.xpose.msra.mxu0 0.0
    %860 = vmatprep.subr.mxu0 0.0
    %861 = vmatpush1.xpose.msra.mxu0 0.0
    %862 = vmatprep.subr.mxu0 0.0
    %863 = vmatpush1.xpose.msra.mxu0 0.0
    %864 = vmatprep.subr.mxu0 0.0
    %865 = vmatpush1.xpose.msra.mxu0 0.0
    %866 = vmatprep.subr.mxu0 0.0
    %867 = vmatpush1.xpose.msra.mxu0 0.0
    %868 = vmatprep.subr.mxu0 0.0
    %869 = vmatpush1.xpose.msra.mxu0 0.0
    %870 = vmatprep.subr.mxu0 0.0
    %871 = vmatpush1.xpose.msra.mxu0 0.0
    %872 = vmatprep.subr.mxu0 0.0
    %873 = vmatpush1.xpose.msra.mxu0 0.0
    %874 = vmatprep.subr.mxu0 0.0
    %875 = vmatpush1.xpose.msra.mxu0 0.0
    %876 = vmatprep.subr.mxu0 0.0
    %877 = vmatpush1.xpose.msra.mxu0 0.0
    %878 = vmatprep.subr.mxu0 0.0
    %879 = vmatpush1.xpose.msra.mxu0 0.0
    %880 = vmatprep.subr.mxu0 0.0
    %881 = vmatpush1.xpose.msra.mxu0 0.0
    %882 = vmatprep.subr.mxu0 0.0
    %883 = vmatpush1.xpose.msra.mxu0 0.0
    %884 = vmatprep.subr.mxu0 0.0
    %885 = vmatpush1.xpose.msra.mxu0 0.0
    %886 = vmatprep.subr.mxu0 0.0
    %887 = vmatpush1.xpose.msra.mxu0 0.0
    %888 = vmatprep.subr.mxu0 0.0
    %889 = vmatpush1.xpose.msra.mxu0 0.0
    %890 = vmatprep.subr.mxu0 0.0
    %891 = vmatpush1.xpose.msra.mxu0 0.0
    %892 = vmatprep.subr.mxu0 0.0
    %893 = vmatpush1.xpose.msra.mxu0 0.0
    %894 = vmatprep.subr.mxu0 0.0
    %895 = vmatpush1.xpose.msra.mxu0 0.0
    %896 = vmatprep.subr.mxu0 0.0
    %897 = vmatpush1.xpose.msra.mxu0 0.0
    %898 = vmatprep.subr.mxu0 0.0
    %899 = vmatpush1.xpose.msra.mxu0 0.0
    %900 = vmatprep.subr.mxu0 0.0
    %901 = vmatpush1.xpose.msra.mxu0 0.0
    %902 = vmatprep.subr.mxu0 0.0
    %903 = vmatpush1.xpose.msra.mxu0 0.0
    %904 = vmatprep.mubr.f32.mxu0 0.0
    %905 = vmatmul.mubr.f32.gmra.mrb[0].mxu0 %v628
    %v906 = vpop.f32.mrb[0].mxu0
    %v907 = vadd.f32 0.0, %v906
    %v908 = vpop.f32.mrb[0].mxu0
    %909 = vdwg.mxu0
    %910 = vmatprep.subr.mxu0 0.0
    %911 = vmatpush1.xpose.msra.mxu0 %v104
    %912 = vmatprep.subr.mxu0 0.0
    %913 = vmatpush1.xpose.msra.mxu0 %v107
    %914 = vmatprep.subr.mxu0 0.0
    %915 = vmatpush1.xpose.msra.mxu0 0.0
    %916 = vmatprep.subr.mxu0 0.0
    %917 = vmatpush1.xpose.msra.mxu0 0.0
    %918 = vmatprep.subr.mxu0 0.0
    %919 = vmatpush1.xpose.msra.mxu0 0.0
    %920 = vmatprep.subr.mxu0 0.0
    %921 = vmatpush1.xpose.msra.mxu0 0.0
    %922 = vmatprep.subr.mxu0 0.0
    %923 = vmatpush1.xpose.msra.mxu0 0.0
    %924 = vmatprep.subr.mxu0 0.0
    %925 = vmatpush1.xpose.msra.mxu0 0.0
    %926 = vmatprep.subr.mxu0 0.0
    %927 = vmatpush1.xpose.msra.mxu0 0.0
    %928 = vmatprep.subr.mxu0 0.0
    %929 = vmatpush1.xpose.msra.mxu0 0.0
    %930 = vmatprep.subr.mxu0 0.0
    %931 = vmatpush1.xpose.msra.mxu0 0.0
    %932 = vmatprep.subr.mxu0 0.0
    %933 = vmatpush1.xpose.msra.mxu0 0.0
    %934 = vmatprep.subr.mxu0 0.0
    %935 = vmatpush1.xpose.msra.mxu0 0.0
    %936 = vmatprep.subr.mxu0 0.0
    %937 = vmatpush1.xpose.msra.mxu0 0.0
    %938 = vmatprep.subr.mxu0 0.0
    %939 = vmatpush1.xpose.msra.mxu0 0.0
    %940 = vmatprep.subr.mxu0 0.0
    %941 = vmatpush1.xpose.msra.mxu0 0.0
    %942 = vmatprep.subr.mxu0 0.0
    %943 = vmatpush1.xpose.msra.mxu0 0.0
    %944 = vmatprep.subr.mxu0 0.0
    %945 = vmatpush1.xpose.msra.mxu0 0.0
    %946 = vmatprep.subr.mxu0 0.0
    %947 = vmatpush1.xpose.msra.mxu0 0.0
    %948 = vmatprep.subr.mxu0 0.0
    %949 = vmatpush1.xpose.msra.mxu0 0.0
    %950 = vmatprep.subr.mxu0 0.0
    %951 = vmatpush1.xpose.msra.mxu0 0.0
    %952 = vmatprep.subr.mxu0 0.0
    %953 = vmatpush1.xpose.msra.mxu0 0.0
    %954 = vmatprep.subr.mxu0 0.0
    %955 = vmatpush1.xpose.msra.mxu0 0.0
    %956 = vmatprep.subr.mxu0 0.0
    %957 = vmatpush1.xpose.msra.mxu0 0.0
    %958 = vmatprep.subr.mxu0 0.0
    %959 = vmatpush1.xpose.msra.mxu0 0.0
    %960 = vmatprep.subr.mxu0 0.0
    %961 = vmatpush1.xpose.msra.mxu0 0.0
    %962 = vmatprep.subr.mxu0 0.0
    %963 = vmatpush1.xpose.msra.mxu0 0.0
    %964 = vmatprep.subr.mxu0 0.0
    %965 = vmatpush1.xpose.msra.mxu0 0.0
    %966 = vmatprep.subr.mxu0 0.0
    %967 = vmatpush1.xpose.msra.mxu0 0.0
    %968 = vmatprep.subr.mxu0 0.0
    %969 = vmatpush1.xpose.msra.mxu0 0.0
    %970 = vmatprep.subr.mxu0 0.0
    %971 = vmatpush1.xpose.msra.mxu0 0.0
    %972 = vmatprep.subr.mxu0 0.0
    %973 = vmatpush1.xpose.msra.mxu0 0.0
    %974 = vmatprep.mubr.f32.mxu0 0.0
    %975 = vmatmul.mubr.f32.gmra.mrb[0].mxu0 %v628
    %v976 = vpop.f32.mrb[0].mxu0
    %v977 = vadd.f32 0.0, %v976
    %v978 = vpop.f32.mrb[0].mxu0
    %979 = vdwg.mxu0
    %980 = vmatprep.subr.mxu0 0.0
    %981 = vmatpush1.xpose.msra.mxu0 %v110
    %982 = vmatprep.subr.mxu0 0.0
    %983 = vmatpush1.xpose.msra.mxu0 %v113
    %984 = vmatprep.subr.mxu0 0.0
    %985 = vmatpush1.xpose.msra.mxu0 0.0
    %986 = vmatprep.subr.mxu0 0.0
    %987 = vmatpush1.xpose.msra.mxu0 0.0
    %988 = vmatprep.subr.mxu0 0.0
    %989 = vmatpush1.xpose.msra.mxu0 0.0
    %990 = vmatprep.subr.mxu0 0.0
    %991 = vmatpush1.xpose.msra.mxu0 0.0
    %992 = vmatprep.subr.mxu0 0.0
    %993 = vmatpush1.xpose.msra.mxu0 0.0
    %994 = vmatprep.subr.mxu0 0.0
    %995 = vmatpush1.xpose.msra.mxu0 0.0
    %996 = vmatprep.subr.mxu0 0.0
    %997 = vmatpush1.xpose.msra.mxu0 0.0
    %998 = vmatprep.subr.mxu0 0.0
    %999 = vmatpush1.xpose.msra.mxu0 0.0
    %1000 = vmatprep.subr.mxu0 0.0
    %1001 = vmatpush1.xpose.msra.mxu0 0.0
    %1002 = vmatprep.subr.mxu0 0.0
    %1003 = vmatpush1.xpose.msra.mxu0 0.0
    %1004 = vmatprep.subr.mxu0 0.0
    %1005 = vmatpush1.xpose.msra.mxu0 0.0
    %1006 = vmatprep.subr.mxu0 0.0
    %1007 = vmatpush1.xpose.msra.mxu0 0.0
    %1008 = vmatprep.subr.mxu0 0.0
    %1009 = vmatpush1.xpose.msra.mxu0 0.0
    %1010 = vmatprep.subr.mxu0 0.0
    %1011 = vmatpush1.xpose.msra.mxu0 0.0
    %1012 = vmatprep.subr.mxu0 0.0
    %1013 = vmatpush1.xpose.msra.mxu0 0.0
    %1014 = vmatprep.subr.mxu0 0.0
    %1015 = vmatpush1.xpose.msra.mxu0 0.0
    %1016 = vmatprep.subr.mxu0 0.0
    %1017 = vmatpush1.xpose.msra.mxu0 0.0
    %1018 = vmatprep.subr.mxu0 0.0
    %1019 = vmatpush1.xpose.msra.mxu0 0.0
    %1020 = vmatprep.subr.mxu0 0.0
    %1021 = vmatpush1.xpose.msra.mxu0 0.0
    %1022 = vmatprep.subr.mxu0 0.0
    %1023 = vmatpush1.xpose.msra.mxu0 0.0
    %1024 = vmatprep.subr.mxu0 0.0
    %1025 = vmatpush1.xpose.msra.mxu0 0.0
    %1026 = vmatprep.subr.mxu0 0.0
    %1027 = vmatpush1.xpose.msra.mxu0 0.0
    %1028 = vmatprep.subr.mxu0 0.0
    %1029 = vmatpush1.xpose.msra.mxu0 0.0
    %1030 = vmatprep.subr.mxu0 0.0
    %1031 = vmatpush1.xpose.msra.mxu0 0.0
    %1032 = vmatprep.subr.mxu0 0.0
    %1033 = vmatpush1.xpose.msra.mxu0 0.0
    %1034 = vmatprep.subr.mxu0 0.0
    %1035 = vmatpush1.xpose.msra.mxu0 0.0
    %1036 = vmatprep.subr.mxu0 0.0
    %1037 = vmatpush1.xpose.msra.mxu0 0.0
    %1038 = vmatprep.subr.mxu0 0.0
    %1039 = vmatpush1.xpose.msra.mxu0 0.0
    %1040 = vmatprep.subr.mxu0 0.0
    %1041 = vmatpush1.xpose.msra.mxu0 0.0
    %1042 = vmatprep.subr.mxu0 0.0
    %1043 = vmatpush1.xpose.msra.mxu0 0.0
    %1044 = vmatprep.mubr.f32.mxu0 0.0
    %1045 = vmatmul.mubr.f32.gmra.mrb[0].mxu0 %v628
    %v1046 = vpop.f32.mrb[0].mxu0
    %v1047 = vadd.f32 0.0, %v1046
    %v1048 = vpop.f32.mrb[0].mxu0
    %1049 = vdwg.mxu0
    %1050 = vmatprep.subr.mxu0 0.0
    %1051 = vmatpush1.xpose.msra.mxu0 %v116
    %1052 = vmatprep.subr.mxu0 0.0
    %1053 = vmatpush1.xpose.msra.mxu0 %v119
    %1054 = vmatprep.subr.mxu0 0.0
    %1055 = vmatpush1.xpose.msra.mxu0 0.0
    %1056 = vmatprep.subr.mxu0 0.0
    %1057 = vmatpush1.xpose.msra.mxu0 0.0
    %1058 = vmatprep.subr.mxu0 0.0
    %1059 = vmatpush1.xpose.msra.mxu0 0.0
    %1060 = vmatprep.subr.mxu0 0.0
    %1061 = vmatpush1.xpose.msra.mxu0 0.0
    %1062 = vmatprep.subr.mxu0 0.0
    %1063 = vmatpush1.xpose.msra.mxu0 0.0
    %1064 = vmatprep.subr.mxu0 0.0
    %1065 = vmatpush1.xpose.msra.mxu0 0.0
    %1066 = vmatprep.subr.mxu0 0.0
    %1067 = vmatpush1.xpose.msra.mxu0 0.0
    %1068 = vmatprep.subr.mxu0 0.0
    %1069 = vmatpush1.xpose.msra.mxu0 0.0
    %1070 = vmatprep.subr.mxu0 0.0
    %1071 = vmatpush1.xpose.msra.mxu0 0.0
    %1072 = vmatprep.subr.mxu0 0.0
    %1073 = vmatpush1.xpose.msra.mxu0 0.0
    %1074 = vmatprep.subr.mxu0 0.0
    %1075 = vmatpush1.xpose.msra.mxu0 0.0
    %1076 = vmatprep.subr.mxu0 0.0
    %1077 = vmatpush1.xpose.msra.mxu0 0.0
    %1078 = vmatprep.subr.mxu0 0.0
    %1079 = vmatpush1.xpose.msra.mxu0 0.0
    %1080 = vmatprep.subr.mxu0 0.0
    %1081 = vmatpush1.xpose.msra.mxu0 0.0
    %1082 = vmatprep.subr.mxu0 0.0
    %1083 = vmatpush1.xpose.msra.mxu0 0.0
    %1084 = vmatprep.subr.mxu0 0.0
    %1085 = vmatpush1.xpose.msra.mxu0 0.0
    %1086 = vmatprep.subr.mxu0 0.0
    %1087 = vmatpush1.xpose.msra.mxu0 0.0
    %1088 = vmatprep.subr.mxu0 0.0
    %1089 = vmatpush1.xpose.msra.mxu0 0.0
    %1090 = vmatprep.subr.mxu0 0.0
    %1091 = vmatpush1.xpose.msra.mxu0 0.0
    %1092 = vmatprep.subr.mxu0 0.0
    %1093 = vmatpush1.xpose.msra.mxu0 0.0
    %1094 = vmatprep.subr.mxu0 0.0
    %1095 = vmatpush1.xpose.msra.mxu0 0.0
    %1096 = vmatprep.subr.mxu0 0.0
    %1097 = vmatpush1.xpose.msra.mxu0 0.0
    %1098 = vmatprep.subr.mxu0 0.0
    %1099 = vmatpush1.xpose.msra.mxu0 0.0
    %1100 = vmatprep.subr.mxu0 0.0
    %1101 = vmatpush1.xpose.msra.mxu0 0.0
    %1102 = vmatprep.subr.mxu0 0.0
    %1103 = vmatpush1.xpose.msra.mxu0 0.0
    %1104 = vmatprep.subr.mxu0 0.0
    %1105 = vmatpush1.xpose.msra.mxu0 0.0
    %1106 = vmatprep.subr.mxu0 0.0
    %1107 = vmatpush1.xpose.msra.mxu0 0.0
    %1108 = vmatprep.subr.mxu0 0.0
    %1109 = vmatpush1.xpose.msra.mxu0 0.0
    %1110 = vmatprep.subr.mxu0 0.0
    %1111 = vmatpush1.xpose.msra.mxu0 0.0
    %1112 = vmatprep.subr.mxu0 0.0
    %1113 = vmatpush1.xpose.msra.mxu0 0.0
    %1114 = vmatprep.mubr.f32.mxu0 0.0
    %1115 = vmatmul.mubr.f32.gmra.mrb[0].mxu0 %v628
    %v1116 = vpop.f32.mrb[0].mxu0
    %v1117 = vadd.f32 0.0, %v1116
    %v1118 = vpop.f32.mrb[0].mxu0
    %1119 = vdwg.mxu0
    %1120 = vmatprep.subr.mxu0 0.0
    %1121 = vmatpush1.xpose.msra.mxu0 %v122
    %1122 = vmatprep.subr.mxu0 0.0
    %1123 = vmatpush1.xpose.msra.mxu0 %v125
    %1124 = vmatprep.subr.mxu0 0.0
    %1125 = vmatpush1.xpose.msra.mxu0 0.0
    %1126 = vmatprep.subr.mxu0 0.0
    %1127 = vmatpush1.xpose.msra.mxu0 0.0
    %1128 = vmatprep.subr.mxu0 0.0
    %1129 = vmatpush1.xpose.msra.mxu0 0.0
    %1130 = vmatprep.subr.mxu0 0.0
    %1131 = vmatpush1.xpose.msra.mxu0 0.0
    %1132 = vmatprep.subr.mxu0 0.0
    %1133 = vmatpush1.xpose.msra.mxu0 0.0
    %1134 = vmatprep.subr.mxu0 0.0
    %1135 = vmatpush1.xpose.msra.mxu0 0.0
    %1136 = vmatprep.subr.mxu0 0.0
    %1137 = vmatpush1.xpose.msra.mxu0 0.0
    %1138 = vmatprep.subr.mxu0 0.0
    %1139 = vmatpush1.xpose.msra.mxu0 0.0
    %1140 = vmatprep.subr.mxu0 0.0
    %1141 = vmatpush1.xpose.msra.mxu0 0.0
    %1142 = vmatprep.subr.mxu0 0.0
    %1143 = vmatpush1.xpose.msra.mxu0 0.0
    %1144 = vmatprep.subr.mxu0 0.0
    %1145 = vmatpush1.xpose.msra.mxu0 0.0
    %1146 = vmatprep.subr.mxu0 0.0
    %1147 = vmatpush1.xpose.msra.mxu0 0.0
    %1148 = vmatprep.subr.mxu0 0.0
    %1149 = vmatpush1.xpose.msra.mxu0 0.0
    %1150 = vmatprep.subr.mxu0 0.0
    %1151 = vmatpush1.xpose.msra.mxu0 0.0
    %1152 = vmatprep.subr.mxu0 0.0
    %1153 = vmatpush1.xpose.msra.mxu0 0.0
    %1154 = vmatprep.subr.mxu0 0.0
    %1155 = vmatpush1.xpose.msra.mxu0 0.0
    %1156 = vmatprep.subr.mxu0 0.0
    %1157 = vmatpush1.xpose.msra.mxu0 0.0
    %1158 = vmatprep.subr.mxu0 0.0
    %1159 = vmatpush1.xpose.msra.mxu0 0.0
    %1160 = vmatprep.subr.mxu0 0.0
    %1161 = vmatpush1.xpose.msra.mxu0 0.0
    %1162 = vmatprep.subr.mxu0 0.0
    %1163 = vmatpush1.xpose.msra.mxu0 0.0
    %1164 = vmatprep.subr.mxu0 0.0
    %1165 = vmatpush1.xpose.msra.mxu0 0.0
    %1166 = vmatprep.subr.mxu0 0.0
    %1167 = vmatpush1.xpose.msra.mxu0 0.0
    %1168 = vmatprep.subr.mxu0 0.0
    %1169 = vmatpush1.xpose.msra.mxu0 0.0
    %1170 = vmatprep.subr.mxu0 0.0
    %1171 = vmatpush1.xpose.msra.mxu0 0.0
    %1172 = vmatprep.subr.mxu0 0.0
    %1173 = vmatpush1.xpose.msra.mxu0 0.0
    %1174 = vmatprep.subr.mxu0 0.0
    %1175 = vmatpush1.xpose.msra.mxu0 0.0
    %1176 = vmatprep.subr.mxu0 0.0
    %1177 = vmatpush1.xpose.msra.mxu0 0.0
    %1178 = vmatprep.subr.mxu0 0.0
    %1179 = vmatpush1.xpose.msra.mxu0 0.0
    %1180 = vmatprep.subr.mxu0 0.0
    %1181 = vmatpush1.xpose.msra.mxu0 0.0
    %1182 = vmatprep.subr.mxu0 0.0
    %1183 = vmatpush1.xpose.msra.mxu0 0.0
    %1184 = vmatprep.mubr.f32.mxu0 0.0
    %1185 = vmatmul.mubr.f32.gmra.mrb[0].mxu0 %v628
    %v1186 = vpop.f32.mrb[0].mxu0
    %v1187 = vadd.f32 0.0, %v1186
    %v1188 = vpop.f32.mrb[0].mxu0
    %1189 = vdwg.mxu0
    %1190 = vmatprep.subr.mxu0 0.0
    %1191 = vmatpush1.xpose.msra.mxu0 %v128
    %1192 = vmatprep.subr.mxu0 0.0
    %1193 = vmatpush1.xpose.msra.mxu0 %v131
    %1194 = vmatprep.subr.mxu0 0.0
    %1195 = vmatpush1.xpose.msra.mxu0 0.0
    %1196 = vmatprep.subr.mxu0 0.0
    %1197 = vmatpush1.xpose.msra.mxu0 0.0
    %1198 = vmatprep.subr.mxu0 0.0
    %1199 = vmatpush1.xpose.msra.mxu0 0.0
    %1200 = vmatprep.subr.mxu0 0.0
    %1201 = vmatpush1.xpose.msra.mxu0 0.0
    %1202 = vmatprep.subr.mxu0 0.0
    %1203 = vmatpush1.xpose.msra.mxu0 0.0
    %1204 = vmatprep.subr.mxu0 0.0
    %1205 = vmatpush1.xpose.msra.mxu0 0.0
    %1206 = vmatprep.subr.mxu0 0.0
    %1207 = vmatpush1.xpose.msra.mxu0 0.0
    %1208 = vmatprep.subr.mxu0 0.0
    %1209 = vmatpush1.xpose.msra.mxu0 0.0
    %1210 = vmatprep.subr.mxu0 0.0
    %1211 = vmatpush1.xpose.msra.mxu0 0.0
    %1212 = vmatprep.subr.mxu0 0.0
    %1213 = vmatpush1.xpose.msra.mxu0 0.0
    %1214 = vmatprep.subr.mxu0 0.0
    %1215 = vmatpush1.xpose.msra.mxu0 0.0
    %1216 = vmatprep.subr.mxu0 0.0
    %1217 = vmatpush1.xpose.msra.mxu0 0.0
    %1218 = vmatprep.subr.mxu0 0.0
    %1219 = vmatpush1.xpose.msra.mxu0 0.0
    %1220 = vmatprep.subr.mxu0 0.0
    %1221 = vmatpush1.xpose.msra.mxu0 0.0
    %1222 = vmatprep.subr.mxu0 0.0
    %1223 = vmatpush1.xpose.msra.mxu0 0.0
    %1224 = vmatprep.subr.mxu0 0.0
    %1225 = vmatpush1.xpose.msra.mxu0 0.0
    %1226 = vmatprep.subr.mxu0 0.0
    %1227 = vmatpush1.xpose.msra.mxu0 0.0
    %1228 = vmatprep.subr.mxu0 0.0
    %1229 = vmatpush1.xpose.msra.mxu0 0.0
    %1230 = vmatprep.subr.mxu0 0.0
    %1231 = vmatpush1.xpose.msra.mxu0 0.0
    %1232 = vmatprep.subr.mxu0 0.0
    %1233 = vmatpush1.xpose.msra.mxu0 0.0
    %1234 = vmatprep.subr.mxu0 0.0
    %1235 = vmatpush1.xpose.msra.mxu0 0.0
    %1236 = vmatprep.subr.mxu0 0.0
    %1237 = vmatpush1.xpose.msra.mxu0 0.0
    %1238 = vmatprep.subr.mxu0 0.0
    %1239 = vmatpush1.xpose.msra.mxu0 0.0
    %1240 = vmatprep.subr.mxu0 0.0
    %1241 = vmatpush1.xpose.msra.mxu0 0.0
    %1242 = vmatprep.subr.mxu0 0.0
    %1243 = vmatpush1.xpose.msra.mxu0 0.0
    %1244 = vmatprep.subr.mxu0 0.0
    %1245 = vmatpush1.xpose.msra.mxu0 0.0
    %1246 = vmatprep.subr.mxu0 0.0
    %1247 = vmatpush1.xpose.msra.mxu0 0.0
    %1248 = vmatprep.subr.mxu0 0.0
    %1249 = vmatpush1.xpose.msra.mxu0 0.0
    %1250 = vmatprep.subr.mxu0 0.0
    %1251 = vmatpush1.xpose.msra.mxu0 0.0
    %1252 = vmatprep.subr.mxu0 0.0
    %1253 = vmatpush1.xpose.msra.mxu0 0.0
    %1254 = vmatprep.mubr.f32.mxu0 0.0
    %1255 = vmatmul.mubr.f32.gmra.mrb[0].mxu0 %v628
    %v1256 = vpop.f32.mrb[0].mxu0
    %v1257 = vadd.f32 0.0, %v1256
    %v1258 = vpop.f32.mrb[0].mxu0
    %1259 = vdwg.mxu0
    %1260 = vmatprep.subr.mxu0 0.0
    %1261 = vmatpush1.xpose.msra.mxu0 %v134
    %1262 = vmatprep.subr.mxu0 0.0
    %1263 = vmatpush1.xpose.msra.mxu0 %v137
    %1264 = vmatprep.subr.mxu0 0.0
    %1265 = vmatpush1.xpose.msra.mxu0 0.0
    %1266 = vmatprep.subr.mxu0 0.0
    %1267 = vmatpush1.xpose.msra.mxu0 0.0
    %1268 = vmatprep.subr.mxu0 0.0
    %1269 = vmatpush1.xpose.msra.mxu0 0.0
    %1270 = vmatprep.subr.mxu0 0.0
    %1271 = vmatpush1.xpose.msra.mxu0 0.0
    %1272 = vmatprep.subr.mxu0 0.0
    %1273 = vmatpush1.xpose.msra.mxu0 0.0
    %1274 = vmatprep.subr.mxu0 0.0
    %1275 = vmatpush1.xpose.msra.mxu0 0.0
    %1276 = vmatprep.subr.mxu0 0.0
    %1277 = vmatpush1.xpose.msra.mxu0 0.0
    %1278 = vmatprep.subr.mxu0 0.0
    %1279 = vmatpush1.xpose.msra.mxu0 0.0
    %1280 = vmatprep.subr.mxu0 0.0
    %1281 = vmatpush1.xpose.msra.mxu0 0.0
    %1282 = vmatprep.subr.mxu0 0.0
    %1283 = vmatpush1.xpose.msra.mxu0 0.0
    %1284 = vmatprep.subr.mxu0 0.0
    %1285 = vmatpush1.xpose.msra.mxu0 0.0
    %1286 = vmatprep.subr.mxu0 0.0
    %1287 = vmatpush1.xpose.msra.mxu0 0.0
    %1288 = vmatprep.subr.mxu0 0.0
    %1289 = vmatpush1.xpose.msra.mxu0 0.0
    %1290 = vmatprep.subr.mxu0 0.0
    %1291 = vmatpush1.xpose.msra.mxu0 0.0
    %1292 = vmatprep.subr.mxu0 0.0
    %1293 = vmatpush1.xpose.msra.mxu0 0.0
    %1294 = vmatprep.subr.mxu0 0.0
    %1295 = vmatpush1.xpose.msra.mxu0 0.0
    %1296 = vmatprep.subr.mxu0 0.0
    %1297 = vmatpush1.xpose.msra.mxu0 0.0
    %1298 = vmatprep.subr.mxu0 0.0
    %1299 = vmatpush1.xpose.msra.mxu0 0.0
    %1300 = vmatprep.subr.mxu0 0.0
    %1301 = vmatpush1.xpose.msra.mxu0 0.0
    %1302 = vmatprep.subr.mxu0 0.0
    %1303 = vmatpush1.xpose.msra.mxu0 0.0
    %1304 = vmatprep.subr.mxu0 0.0
    %1305 = vmatpush1.xpose.msra.mxu0 0.0
    %1306 = vmatprep.subr.mxu0 0.0
    %1307 = vmatpush1.xpose.msra.mxu0 0.0
    %1308 = vmatprep.subr.mxu0 0.0
    %1309 = vmatpush1.xpose.msra.mxu0 0.0
    %1310 = vmatprep.subr.mxu0 0.0
    %1311 = vmatpush1.xpose.msra.mxu0 0.0
    %1312 = vmatprep.subr.mxu0 0.0
    %1313 = vmatpush1.xpose.msra.mxu0 0.0
    %1314 = vmatprep.subr.mxu0 0.0
    %1315 = vmatpush1.xpose.msra.mxu0 0.0
    %1316 = vmatprep.subr.mxu0 0.0
    %1317 = vmatpush1.xpose.msra.mxu0 0.0
    %1318 = vmatprep.subr.mxu0 0.0
    %1319 = vmatpush1.xpose.msra.mxu0 0.0
    %1320 = vmatprep.subr.mxu0 0.0
    %1321 = vmatpush1.xpose.msra.mxu0 0.0
    %1322 = vmatprep.subr.mxu0 0.0
    %1323 = vmatpush1.xpose.msra.mxu0 0.0
    %1324 = vmatprep.mubr.f32.mxu0 0.0
    %1325 = vmatmul.mubr.f32.gmra.mrb[0].mxu0 %v628
    %v1326 = vpop.f32.mrb[0].mxu0
    %v1327 = vadd.f32 0.0, %v1326
    %v1328 = vpop.f32.mrb[0].mxu0
    %1329 = vdwg.mxu0
    %1330 = vmatprep.subr.mxu0 0.0
    %1331 = vmatpush1.xpose.msra.mxu0 %v140
    %1332 = vmatprep.subr.mxu0 0.0
    %1333 = vmatpush1.xpose.msra.mxu0 %v143
    %1334 = vmatprep.subr.mxu0 0.0
    %1335 = vmatpush1.xpose.msra.mxu0 0.0
    %1336 = vmatprep.subr.mxu0 0.0
    %1337 = vmatpush1.xpose.msra.mxu0 0.0
    %1338 = vmatprep.subr.mxu0 0.0
    %1339 = vmatpush1.xpose.msra.mxu0 0.0
    %1340 = vmatprep.subr.mxu0 0.0
    %1341 = vmatpush1.xpose.msra.mxu0 0.0
    %1342 = vmatprep.subr.mxu0 0.0
    %1343 = vmatpush1.xpose.msra.mxu0 0.0
    %1344 = vmatprep.subr.mxu0 0.0
    %1345 = vmatpush1.xpose.msra.mxu0 0.0
    %1346 = vmatprep.subr.mxu0 0.0
    %1347 = vmatpush1.xpose.msra.mxu0 0.0
    %1348 = vmatprep.subr.mxu0 0.0
    %1349 = vmatpush1.xpose.msra.mxu0 0.0
    %1350 = vmatprep.subr.mxu0 0.0
    %1351 = vmatpush1.xpose.msra.mxu0 0.0
    %1352 = vmatprep.subr.mxu0 0.0
    %1353 = vmatpush1.xpose.msra.mxu0 0.0
    %1354 = vmatprep.subr.mxu0 0.0
    %1355 = vmatpush1.xpose.msra.mxu0 0.0
    %1356 = vmatprep.subr.mxu0 0.0
    %1357 = vmatpush1.xpose.msra.mxu0 0.0
    %1358 = vmatprep.subr.mxu0 0.0
    %1359 = vmatpush1.xpose.msra.mxu0 0.0
    %1360 = vmatprep.subr.mxu0 0.0
    %1361 = vmatpush1.xpose.msra.mxu0 0.0
    %1362 = vmatprep.subr.mxu0 0.0
    %1363 = vmatpush1.xpose.msra.mxu0 0.0
    %1364 = vmatprep.subr.mxu0 0.0
    %1365 = vmatpush1.xpose.msra.mxu0 0.0
    %1366 = vmatprep.subr.mxu0 0.0
    %1367 = vmatpush1.xpose.msra.mxu0 0.0
    %1368 = vmatprep.subr.mxu0 0.0
    %1369 = vmatpush1.xpose.msra.mxu0 0.0
    %1370 = vmatprep.subr.mxu0 0.0
    %1371 = vmatpush1.xpose.msra.mxu0 0.0
    %1372 = vmatprep.subr.mxu0 0.0
    %1373 = vmatpush1.xpose.msra.mxu0 0.0
    %1374 = vmatprep.subr.mxu0 0.0
    %1375 = vmatpush1.xpose.msra.mxu0 0.0
    %1376 = vmatprep.subr.mxu0 0.0
    %1377 = vmatpush1.xpose.msra.mxu0 0.0
    %1378 = vmatprep.subr.mxu0 0.0
    %1379 = vmatpush1.xpose.msra.mxu0 0.0
    %1380 = vmatprep.subr.mxu0 0.0
    %1381 = vmatpush1.xpose.msra.mxu0 0.0
    %1382 = vmatprep.subr.mxu0 0.0
    %1383 = vmatpush1.xpose.msra.mxu0 0.0
    %1384 = vmatprep.subr.mxu0 0.0
    %1385 = vmatpush1.xpose.msra.mxu0 0.0
    %1386 = vmatprep.subr.mxu0 0.0
    %1387 = vmatpush1.xpose.msra.mxu0 0.0
    %1388 = vmatprep.subr.mxu0 0.0
    %1389 = vmatpush1.xpose.msra.mxu0 0.0
    %1390 = vmatprep.subr.mxu0 0.0
    %1391 = vmatpush1.xpose.msra.mxu0 0.0
    %1392 = vmatprep.subr.mxu0 0.0
    %1393 = vmatpush1.xpose.msra.mxu0 0.0
    %1394 = vmatprep.mubr.f32.mxu0 0.0
    %1395 = vmatmul.mubr.f32.gmra.mrb[0].mxu0 %v628
    %v1396 = vpop.f32.mrb[0].mxu0
    %v1397 = vadd.f32 0.0, %v1396
    %v1398 = vpop.f32.mrb[0].mxu0
    %1399 = vdwg.mxu0
    %1400 = vmatprep.subr.mxu0 0.0
    %1401 = vmatpush1.xpose.msra.mxu0 %v146
    %1402 = vmatprep.subr.mxu0 0.0
    %1403 = vmatpush1.xpose.msra.mxu0 %v149
    %1404 = vmatprep.subr.mxu0 0.0
    %1405 = vmatpush1.xpose.msra.mxu0 0.0
    %1406 = vmatprep.subr.mxu0 0.0
    %1407 = vmatpush1.xpose.msra.mxu0 0.0
    %1408 = vmatprep.subr.mxu0 0.0
    %1409 = vmatpush1.xpose.msra.mxu0 0.0
    %1410 = vmatprep.subr.mxu0 0.0
    %1411 = vmatpush1.xpose.msra.mxu0 0.0
    %1412 = vmatprep.subr.mxu0 0.0
    %1413 = vmatpush1.xpose.msra.mxu0 0.0
    %1414 = vmatprep.subr.mxu0 0.0
    %1415 = vmatpush1.xpose.msra.mxu0 0.0
    %1416 = vmatprep.subr.mxu0 0.0
    %1417 = vmatpush1.xpose.msra.mxu0 0.0
    %1418 = vmatprep.subr.mxu0 0.0
    %1419 = vmatpush1.xpose.msra.mxu0 0.0
    %1420 = vmatprep.subr.mxu0 0.0
    %1421 = vmatpush1.xpose.msra.mxu0 0.0
    %1422 = vmatprep.subr.mxu0 0.0
    %1423 = vmatpush1.xpose.msra.mxu0 0.0
    %1424 = vmatprep.subr.mxu0 0.0
    %1425 = vmatpush1.xpose.msra.mxu0 0.0
    %1426 = vmatprep.subr.mxu0 0.0
    %1427 = vmatpush1.xpose.msra.mxu0 0.0
    %1428 = vmatprep.subr.mxu0 0.0
    %1429 = vmatpush1.xpose.msra.mxu0 0.0
    %1430 = vmatprep.subr.mxu0 0.0
    %1431 = vmatpush1.xpose.msra.mxu0 0.0
    %1432 = vmatprep.subr.mxu0 0.0
    %1433 = vmatpush1.xpose.msra.mxu0 0.0
    %1434 = vmatprep.subr.mxu0 0.0
    %1435 = vmatpush1.xpose.msra.mxu0 0.0
    %1436 = vmatprep.subr.mxu0 0.0
    %1437 = vmatpush1.xpose.msra.mxu0 0.0
    %1438 = vmatprep.subr.mxu0 0.0
    %1439 = vmatpush1.xpose.msra.mxu0 0.0
    %1440 = vmatprep.subr.mxu0 0.0
    %1441 = vmatpush1.xpose.msra.mxu0 0.0
    %1442 = vmatprep.subr.mxu0 0.0
    %1443 = vmatpush1.xpose.msra.mxu0 0.0
    %1444 = vmatprep.subr.mxu0 0.0
    %1445 = vmatpush1.xpose.msra.mxu0 0.0
    %1446 = vmatprep.subr.mxu0 0.0
    %1447 = vmatpush1.xpose.msra.mxu0 0.0
    %1448 = vmatprep.subr.mxu0 0.0
    %1449 = vmatpush1.xpose.msra.mxu0 0.0
    %1450 = vmatprep.subr.mxu0 0.0
    %1451 = vmatpush1.xpose.msra.mxu0 0.0
    %1452 = vmatprep.subr.mxu0 0.0
    %1453 = vmatpush1.xpose.msra.mxu0 0.0
    %1454 = vmatprep.subr.mxu0 0.0
    %1455 = vmatpush1.xpose.msra.mxu0 0.0
    %1456 = vmatprep.subr.mxu0 0.0
    %1457 = vmatpush1.xpose.msra.mxu0 0.0
    %1458 = vmatprep.subr.mxu0 0.0
    %1459 = vmatpush1.xpose.msra.mxu0 0.0
    %1460 = vmatprep.subr.mxu0 0.0
    %1461 = vmatpush1.xpose.msra.mxu0 0.0
    %1462 = vmatprep.subr.mxu0 0.0
    %1463 = vmatpush1.xpose.msra.mxu0 0.0
    %1464 = vmatprep.mubr.f32.mxu0 0.0
    %1465 = vmatmul.mubr.f32.gmra.mrb[0].mxu0 %v628
    %v1466 = vpop.f32.mrb[0].mxu0
    %v1467 = vadd.f32 0.0, %v1466
    %v1468 = vpop.f32.mrb[0].mxu0
    %1469 = vdwg.mxu0
    %1470 = vmatprep.subr.mxu0 0.0
    %1471 = vmatpush1.xpose.msra.mxu0 %v152
    %1472 = vmatprep.subr.mxu0 0.0
    %1473 = vmatpush1.xpose.msra.mxu0 %v155
    %1474 = vmatprep.subr.mxu0 0.0
    %1475 = vmatpush1.xpose.msra.mxu0 0.0
    %1476 = vmatprep.subr.mxu0 0.0
    %1477 = vmatpush1.xpose.msra.mxu0 0.0
    %1478 = vmatprep.subr.mxu0 0.0
    %1479 = vmatpush1.xpose.msra.mxu0 0.0
    %1480 = vmatprep.subr.mxu0 0.0
    %1481 = vmatpush1.xpose.msra.mxu0 0.0
    %1482 = vmatprep.subr.mxu0 0.0
    %1483 = vmatpush1.xpose.msra.mxu0 0.0
    %1484 = vmatprep.subr.mxu0 0.0
    %1485 = vmatpush1.xpose.msra.mxu0 0.0
    %1486 = vmatprep.subr.mxu0 0.0
    %1487 = vmatpush1.xpose.msra.mxu0 0.0
    %1488 = vmatprep.subr.mxu0 0.0
    %1489 = vmatpush1.xpose.msra.mxu0 0.0
    %1490 = vmatprep.subr.mxu0 0.0
    %1491 = vmatpush1.xpose.msra.mxu0 0.0
    %1492 = vmatprep.subr.mxu0 0.0
    %1493 = vmatpush1.xpose.msra.mxu0 0.0
    %1494 = vmatprep.subr.mxu0 0.0
    %1495 = vmatpush1.xpose.msra.mxu0 0.0
    %1496 = vmatprep.subr.mxu0 0.0
    %1497 = vmatpush1.xpose.msra.mxu0 0.0
    %1498 = vmatprep.subr.mxu0 0.0
    %1499 = vmatpush1.xpose.msra.mxu0 0.0
    %1500 = vmatprep.subr.mxu0 0.0
    %1501 = vmatpush1.xpose.msra.mxu0 0.0
    %1502 = vmatprep.subr.mxu0 0.0
    %1503 = vmatpush1.xpose.msra.mxu0 0.0
    %1504 = vmatprep.subr.mxu0 0.0
    %1505 = vmatpush1.xpose.msra.mxu0 0.0
    %1506 = vmatprep.subr.mxu0 0.0
    %1507 = vmatpush1.xpose.msra.mxu0 0.0
    %1508 = vmatprep.subr.mxu0 0.0
    %1509 = vmatpush1.xpose.msra.mxu0 0.0
    %1510 = vmatprep.subr.mxu0 0.0
    %1511 = vmatpush1.xpose.msra.mxu0 0.0
    %1512 = vmatprep.subr.mxu0 0.0
    %1513 = vmatpush1.xpose.msra.mxu0 0.0
    %1514 = vmatprep.subr.mxu0 0.0
    %1515 = vmatpush1.xpose.msra.mxu0 0.0
    %1516 = vmatprep.subr.mxu0 0.0
    %1517 = vmatpush1.xpose.msra.mxu0 0.0
    %1518 = vmatprep.subr.mxu0 0.0
    %1519 = vmatpush1.xpose.msra.mxu0 0.0
    %1520 = vmatprep.subr.mxu0 0.0
    %1521 = vmatpush1.xpose.msra.mxu0 0.0
    %1522 = vmatprep.subr.mxu0 0.0
    %1523 = vmatpush1.xpose.msra.mxu0 0.0
    %1524 = vmatprep.subr.mxu0 0.0
    %1525 = vmatpush1.xpose.msra.mxu0 0.0
    %1526 = vmatprep.subr.mxu0 0.0
    %1527 = vmatpush1.xpose.msra.mxu0 0.0
    %1528 = vmatprep.subr.mxu0 0.0
    %1529 = vmatpush1.xpose.msra.mxu0 0.0
    %1530 = vmatprep.subr.mxu0 0.0
    %1531 = vmatpush1.xpose.msra.mxu0 0.0
    %1532 = vmatprep.subr.mxu0 0.0
    %1533 = vmatpush1.xpose.msra.mxu0 0.0
    %1534 = vmatprep.mubr.f32.mxu0 0.0
    %1535 = vmatmul.mubr.f32.gmra.mrb[0].mxu0 %v628
    %v1536 = vpop.f32.mrb[0].mxu0
    %v1537 = vadd.f32 0.0, %v1536
    %v1538 = vpop.f32.mrb[0].mxu0
    %1539 = vdwg.mxu0
    %1540 = vmatprep.subr.mxu0 0.0
    %1541 = vmatpush1.xpose.msra.mxu0 %v158
    %1542 = vmatprep.subr.mxu0 0.0
    %1543 = vmatpush1.xpose.msra.mxu0 %v161
    %1544 = vmatprep.subr.mxu0 0.0
    %1545 = vmatpush1.xpose.msra.mxu0 0.0
    %1546 = vmatprep.subr.mxu0 0.0
    %1547 = vmatpush1.xpose.msra.mxu0 0.0
    %1548 = vmatprep.subr.mxu0 0.0
    %1549 = vmatpush1.xpose.msra.mxu0 0.0
    %1550 = vmatprep.subr.mxu0 0.0
    %1551 = vmatpush1.xpose.msra.mxu0 0.0
    %1552 = vmatprep.subr.mxu0 0.0
    %1553 = vmatpush1.xpose.msra.mxu0 0.0
    %1554 = vmatprep.subr.mxu0 0.0
    %1555 = vmatpush1.xpose.msra.mxu0 0.0
    %1556 = vmatprep.subr.mxu0 0.0
    %1557 = vmatpush1.xpose.msra.mxu0 0.0
    %1558 = vmatprep.subr.mxu0 0.0
    %1559 = vmatpush1.xpose.msra.mxu0 0.0
    %1560 = vmatprep.subr.mxu0 0.0
    %1561 = vmatpush1.xpose.msra.mxu0 0.0
    %1562 = vmatprep.subr.mxu0 0.0
    %1563 = vmatpush1.xpose.msra.mxu0 0.0
    %1564 = vmatprep.subr.mxu0 0.0
    %1565 = vmatpush1.xpose.msra.mxu0 0.0
    %1566 = vmatprep.subr.mxu0 0.0
    %1567 = vmatpush1.xpose.msra.mxu0 0.0
    %1568 = vmatprep.subr.mxu0 0.0
    %1569 = vmatpush1.xpose.msra.mxu0 0.0
    %1570 = vmatprep.subr.mxu0 0.0
    %1571 = vmatpush1.xpose.msra.mxu0 0.0
    %1572 = vmatprep.subr.mxu0 0.0
    %1573 = vmatpush1.xpose.msra.mxu0 0.0
    %1574 = vmatprep.subr.mxu0 0.0
    %1575 = vmatpush1.xpose.msra.mxu0 0.0
    %1576 = vmatprep.subr.mxu0 0.0
    %1577 = vmatpush1.xpose.msra.mxu0 0.0
    %1578 = vmatprep.subr.mxu0 0.0
    %1579 = vmatpush1.xpose.msra.mxu0 0.0
    %1580 = vmatprep.subr.mxu0 0.0
    %1581 = vmatpush1.xpose.msra.mxu0 0.0
    %1582 = vmatprep.subr.mxu0 0.0
    %1583 = vmatpush1.xpose.msra.mxu0 0.0
    %1584 = vmatprep.subr.mxu0 0.0
    %1585 = vmatpush1.xpose.msra.mxu0 0.0
    %1586 = vmatprep.subr.mxu0 0.0
    %1587 = vmatpush1.xpose.msra.mxu0 0.0
    %1588 = vmatprep.subr.mxu0 0.0
    %1589 = vmatpush1.xpose.msra.mxu0 0.0
    %1590 = vmatprep.subr.mxu0 0.0
    %1591 = vmatpush1.xpose.msra.mxu0 0.0
    %1592 = vmatprep.subr.mxu0 0.0
    %1593 = vmatpush1.xpose.msra.mxu0 0.0
    %1594 = vmatprep.subr.mxu0 0.0
    %1595 = vmatpush1.xpose.msra.mxu0 0.0
    %1596 = vmatprep.subr.mxu0 0.0
    %1597 = vmatpush1.xpose.msra.mxu0 0.0
    %1598 = vmatprep.subr.mxu0 0.0
    %1599 = vmatpush1.xpose.msra.mxu0 0.0
    %1600 = vmatprep.subr.mxu0 0.0
    %1601 = vmatpush1.xpose.msra.mxu0 0.0
    %1602 = vmatprep.subr.mxu0 0.0
    %1603 = vmatpush1.xpose.msra.mxu0 0.0
    %1604 = vmatprep.mubr.f32.mxu0 0.0
    %1605 = vmatmul.mubr.f32.gmra.mrb[0].mxu0 %v628
    %v1606 = vpop.f32.mrb[0].mxu0
    %v1607 = vadd.f32 0.0, %v1606
    %v1608 = vpop.f32.mrb[0].mxu0
    %1609 = vdwg.mxu0
    %1610 = vmatprep.subr.mxu0 0.0
    %1611 = vmatpush1.xpose.msra.mxu0 %v164
    %1612 = vmatprep.subr.mxu0 0.0
    %1613 = vmatpush1.xpose.msra.mxu0 %v167
    %1614 = vmatprep.subr.mxu0 0.0
    %1615 = vmatpush1.xpose.msra.mxu0 0.0
    %1616 = vmatprep.subr.mxu0 0.0
    %1617 = vmatpush1.xpose.msra.mxu0 0.0
    %1618 = vmatprep.subr.mxu0 0.0
    %1619 = vmatpush1.xpose.msra.mxu0 0.0
    %1620 = vmatprep.subr.mxu0 0.0
    %1621 = vmatpush1.xpose.msra.mxu0 0.0
    %1622 = vmatprep.subr.mxu0 0.0
    %1623 = vmatpush1.xpose.msra.mxu0 0.0
    %1624 = vmatprep.subr.mxu0 0.0
    %1625 = vmatpush1.xpose.msra.mxu0 0.0
    %1626 = vmatprep.subr.mxu0 0.0
    %1627 = vmatpush1.xpose.msra.mxu0 0.0
    %1628 = vmatprep.subr.mxu0 0.0
    %1629 = vmatpush1.xpose.msra.mxu0 0.0
    %1630 = vmatprep.subr.mxu0 0.0
    %1631 = vmatpush1.xpose.msra.mxu0 0.0
    %1632 = vmatprep.subr.mxu0 0.0
    %1633 = vmatpush1.xpose.msra.mxu0 0.0
    %1634 = vmatprep.subr.mxu0 0.0
    %1635 = vmatpush1.xpose.msra.mxu0 0.0
    %1636 = vmatprep.subr.mxu0 0.0
    %1637 = vmatpush1.xpose.msra.mxu0 0.0
    %1638 = vmatprep.subr.mxu0 0.0
    %1639 = vmatpush1.xpose.msra.mxu0 0.0
    %1640 = vmatprep.subr.mxu0 0.0
    %1641 = vmatpush1.xpose.msra.mxu0 0.0
    %1642 = vmatprep.subr.mxu0 0.0
    %1643 = vmatpush1.xpose.msra.mxu0 0.0
    %1644 = vmatprep.subr.mxu0 0.0
    %1645 = vmatpush1.xpose.msra.mxu0 0.0
    %1646 = vmatprep.subr.mxu0 0.0
    %1647 = vmatpush1.xpose.msra.mxu0 0.0
    %1648 = vmatprep.subr.mxu0 0.0
    %1649 = vmatpush1.xpose.msra.mxu0 0.0
    %1650 = vmatprep.subr.mxu0 0.0
    %1651 = vmatpush1.xpose.msra.mxu0 0.0
    %1652 = vmatprep.subr.mxu0 0.0
    %1653 = vmatpush1.xpose.msra.mxu0 0.0
    %1654 = vmatprep.subr.mxu0 0.0
    %1655 = vmatpush1.xpose.msra.mxu0 0.0
    %1656 = vmatprep.subr.mxu0 0.0
    %1657 = vmatpush1.xpose.msra.mxu0 0.0
    %1658 = vmatprep.subr.mxu0 0.0
    %1659 = vmatpush1.xpose.msra.mxu0 0.0
    %1660 = vmatprep.subr.mxu0 0.0
    %1661 = vmatpush1.xpose.msra.mxu0 0.0
    %1662 = vmatprep.subr.mxu0 0.0
    %1663 = vmatpush1.xpose.msra.mxu0 0.0
    %1664 = vmatprep.subr.mxu0 0.0
    %1665 = vmatpush1.xpose.msra.mxu0 0.0
    %1666 = vmatprep.subr.mxu0 0.0
    %1667 = vmatpush1.xpose.msra.mxu0 0.0
    %1668 = vmatprep.subr.mxu0 0.0
    %1669 = vmatpush1.xpose.msra.mxu0 0.0
    %1670 = vmatprep.subr.mxu0 0.0
    %1671 = vmatpush1.xpose.msra.mxu0 0.0
    %1672 = vmatprep.subr.mxu0 0.0
    %1673 = vmatpush1.xpose.msra.mxu0 0.0
    %1674 = vmatprep.mubr.f32.mxu0 0.0
    %1675 = vmatmul.mubr.f32.gmra.mrb[0].mxu0 %v628
    %v1676 = vpop.f32.mrb[0].mxu0
    %v1677 = vadd.f32 0.0, %v1676
    %v1678 = vpop.f32.mrb[0].mxu0
    %1679 = vdwg.mxu0
    %1680 = vmatprep.subr.mxu0 0.0
    %1681 = vmatpush1.xpose.msra.mxu0 %v170
    %1682 = vmatprep.subr.mxu0 0.0
    %1683 = vmatpush1.xpose.msra.mxu0 %v173
    %1684 = vmatprep.subr.mxu0 0.0
    %1685 = vmatpush1.xpose.msra.mxu0 0.0
    %1686 = vmatprep.subr.mxu0 0.0
    %1687 = vmatpush1.xpose.msra.mxu0 0.0
    %1688 = vmatprep.subr.mxu0 0.0
    %1689 = vmatpush1.xpose.msra.mxu0 0.0
    %1690 = vmatprep.subr.mxu0 0.0
    %1691 = vmatpush1.xpose.msra.mxu0 0.0
    %1692 = vmatprep.subr.mxu0 0.0
    %1693 = vmatpush1.xpose.msra.mxu0 0.0
    %1694 = vmatprep.subr.mxu0 0.0
    %1695 = vmatpush1.xpose.msra.mxu0 0.0
    %1696 = vmatprep.subr.mxu0 0.0
    %1697 = vmatpush1.xpose.msra.mxu0 0.0
    %1698 = vmatprep.subr.mxu0 0.0
    %1699 = vmatpush1.xpose.msra.mxu0 0.0
    %1700 = vmatprep.subr.mxu0 0.0
    %1701 = vmatpush1.xpose.msra.mxu0 0.0
    %1702 = vmatprep.subr.mxu0 0.0
    %1703 = vmatpush1.xpose.msra.mxu0 0.0
    %1704 = vmatprep.subr.mxu0 0.0
    %1705 = vmatpush1.xpose.msra.mxu0 0.0
    %1706 = vmatprep.subr.mxu0 0.0
    %1707 = vmatpush1.xpose.msra.mxu0 0.0
    %1708 = vmatprep.subr.mxu0 0.0
    %1709 = vmatpush1.xpose.msra.mxu0 0.0
    %1710 = vmatprep.subr.mxu0 0.0
    %1711 = vmatpush1.xpose.msra.mxu0 0.0
    %1712 = vmatprep.subr.mxu0 0.0
    %1713 = vmatpush1.xpose.msra.mxu0 0.0
    %1714 = vmatprep.subr.mxu0 0.0
    %1715 = vmatpush1.xpose.msra.mxu0 0.0
    %1716 = vmatprep.subr.mxu0 0.0
    %1717 = vmatpush1.xpose.msra.mxu0 0.0
    %1718 = vmatprep.subr.mxu0 0.0
    %1719 = vmatpush1.xpose.msra.mxu0 0.0
    %1720 = vmatprep.subr.mxu0 0.0
    %1721 = vmatpush1.xpose.msra.mxu0 0.0
    %1722 = vmatprep.subr.mxu0 0.0
    %1723 = vmatpush1.xpose.msra.mxu0 0.0
    %1724 = vmatprep.subr.mxu0 0.0
    %1725 = vmatpush1.xpose.msra.mxu0 0.0
    %1726 = vmatprep.subr.mxu0 0.0
    %1727 = vmatpush1.xpose.msra.mxu0 0.0
    %1728 = vmatprep.subr.mxu0 0.0
    %1729 = vmatpush1.xpose.msra.mxu0 0.0
    %1730 = vmatprep.subr.mxu0 0.0
    %1731 = vmatpush1.xpose.msra.mxu0 0.0
    %1732 = vmatprep.subr.mxu0 0.0
    %1733 = vmatpush1.xpose.msra.mxu0 0.0
    %1734 = vmatprep.subr.mxu0 0.0
    %1735 = vmatpush1.xpose.msra.mxu0 0.0
    %1736 = vmatprep.subr.mxu0 0.0
    %1737 = vmatpush1.xpose.msra.mxu0 0.0
    %1738 = vmatprep.subr.mxu0 0.0
    %1739 = vmatpush1.xpose.msra.mxu0 0.0
    %1740 = vmatprep.subr.mxu0 0.0
    %1741 = vmatpush1.xpose.msra.mxu0 0.0
    %1742 = vmatprep.subr.mxu0 0.0
    %1743 = vmatpush1.xpose.msra.mxu0 0.0
    %1744 = vmatprep.mubr.f32.mxu0 0.0
    %1745 = vmatmul.mubr.f32.gmra.mrb[0].mxu0 %v628
    %v1746 = vpop.f32.mrb[0].mxu0
    %v1747 = vadd.f32 0.0, %v1746
    %v1748 = vpop.f32.mrb[0].mxu0
    %1749 = vdwg.mxu0
    %1751 = vset.pattern.permute.xlu0 0
    %1752 = vperm.xlu0 %1751, %v468
    %v1753 = vpop.permute.xlu0 %1752
    %1756 = vset.pattern.permute.xlu0 0
    %1757 = vperm.xlu0 %1756, %v473
    %v1758 = vpop.permute.xlu0 %1757
    %1761 = vset.pattern.permute.xlu0 0
    %1762 = vperm.xlu0 %1761, %v478
    %v1763 = vpop.permute.xlu0 %1762
    %1766 = vset.pattern.permute.xlu0 0
    %1767 = vperm.xlu0 %1766, %v483
    %v1768 = vpop.permute.xlu0 %1767
    %1771 = vset.pattern.permute.xlu0 0
    %1772 = vperm.xlu0 %1771, %v488
    %v1773 = vpop.permute.xlu0 %1772
    %1776 = vset.pattern.permute.xlu0 0
    %1777 = vperm.xlu0 %1776, %v493
    %v1778 = vpop.permute.xlu0 %1777
    %1781 = vset.pattern.permute.xlu0 0
    %1782 = vperm.xlu0 %1781, %v498
    %v1783 = vpop.permute.xlu0 %1782
    %1786 = vset.pattern.permute.xlu0 0
    %1787 = vperm.xlu0 %1786, %v503
    %v1788 = vpop.permute.xlu0 %1787
    %1791 = vset.pattern.permute.xlu0 0
    %1792 = vperm.xlu0 %1791, %v508
    %v1793 = vpop.permute.xlu0 %1792
    %1796 = vset.pattern.permute.xlu0 0
    %1797 = vperm.xlu0 %1796, %v513
    %v1798 = vpop.permute.xlu0 %1797
    %1801 = vset.pattern.permute.xlu0 0
    %1802 = vperm.xlu0 %1801, %v518
    %v1803 = vpop.permute.xlu0 %1802
    %1806 = vset.pattern.permute.xlu0 0
    %1807 = vperm.xlu0 %1806, %v523
    %v1808 = vpop.permute.xlu0 %1807
    %1811 = vset.pattern.permute.xlu0 0
    %1812 = vperm.xlu0 %1811, %v528
    %v1813 = vpop.permute.xlu0 %1812
    %1816 = vset.pattern.permute.xlu0 0
    %1817 = vperm.xlu0 %1816, %v533
    %v1818 = vpop.permute.xlu0 %1817
    %1821 = vset.pattern.permute.xlu0 0
    %1822 = vperm.xlu0 %1821, %v538
    %v1823 = vpop.permute.xlu0 %1822
    %1826 = vset.pattern.permute.xlu0 0
    %1827 = vperm.xlu0 %1826, %v543
    %v1828 = vpop.permute.xlu0 %1827
    %1831 = vset.pattern.permute.xlu0 0
    %1832 = vperm.xlu0 %1831, %v548
    %v1833 = vpop.permute.xlu0 %1832
    %1836 = vset.pattern.permute.xlu0 0
    %1837 = vperm.xlu0 %1836, %v553
    %v1838 = vpop.permute.xlu0 %1837
    %1841 = vset.pattern.permute.xlu0 0
    %1842 = vperm.xlu0 %1841, %v558
    %v1843 = vpop.permute.xlu0 %1842
    %1846 = vset.pattern.permute.xlu0 0
    %1847 = vperm.xlu0 %1846, %v563
    %v1848 = vpop.permute.xlu0 %1847
    %1851 = vset.pattern.permute.xlu0 0
    %1852 = vperm.xlu0 %1851, %v568
    %v1853 = vpop.permute.xlu0 %1852
    %1856 = vset.pattern.permute.xlu0 0
    %1857 = vperm.xlu0 %1856, %v573
    %v1858 = vpop.permute.xlu0 %1857
    %1861 = vset.pattern.permute.xlu0 0
    %1862 = vperm.xlu0 %1861, %v578
    %v1863 = vpop.permute.xlu0 %1862
    %1866 = vset.pattern.permute.xlu0 0
    %1867 = vperm.xlu0 %1866, %v583
    %v1868 = vpop.permute.xlu0 %1867
    %1871 = vset.pattern.permute.xlu0 0
    %1872 = vperm.xlu0 %1871, %v588
    %v1873 = vpop.permute.xlu0 %1872
    %1876 = vset.pattern.permute.xlu0 0
    %1877 = vperm.xlu0 %1876, %v593
    %v1878 = vpop.permute.xlu0 %1877
    %1881 = vset.pattern.permute.xlu0 0
    %1882 = vperm.xlu0 %1881, %v598
    %v1883 = vpop.permute.xlu0 %1882
    %1886 = vset.pattern.permute.xlu0 0
    %1887 = vperm.xlu0 %1886, %v603
    %v1888 = vpop.permute.xlu0 %1887
    %1891 = vset.pattern.permute.xlu0 0
    %1892 = vperm.xlu0 %1891, %v608
    %v1893 = vpop.permute.xlu0 %1892
    %1896 = vset.pattern.permute.xlu0 0
    %1897 = vperm.xlu0 %1896, %v613
    %v1898 = vpop.permute.xlu0 %1897
    %1901 = vset.pattern.permute.xlu0 0
    %1902 = vperm.xlu0 %1901, %v618
    %v1903 = vpop.permute.xlu0 %1902
    %1906 = vset.pattern.permute.xlu0 0
    %1907 = vperm.xlu0 %1906, %v623
    %v1908 = vpop.permute.xlu0 %1907
    %v1910 = vlaneseq
    %v1911 = vshrl.u32 %v1910, 7
    %v1912 = vsub.s32 0, %v1911
    %v1913 = vrot.slane %v697, %v1912
    %v1914 = vlaneseq
    %v1915 = vshrl.u32 %v1914, 7
    %v1916 = vsub.s32 0, %v1915
    %v1917 = vrot.slane %v767, %v1916
    %v1918 = vlaneseq
    %v1919 = vshrl.u32 %v1918, 7
    %v1920 = vsub.s32 0, %v1919
    %v1921 = vrot.slane %v837, %v1920
    %v1922 = vlaneseq
    %v1923 = vshrl.u32 %v1922, 7
    %v1924 = vsub.s32 0, %v1923
    %v1925 = vrot.slane %v907, %v1924
    %v1926 = vlaneseq
    %v1927 = vshrl.u32 %v1926, 7
    %v1928 = vsub.s32 0, %v1927
    %v1929 = vrot.slane %v977, %v1928
    %v1930 = vlaneseq
    %v1931 = vshrl.u32 %v1930, 7
    %v1932 = vsub.s32 0, %v1931
    %v1933 = vrot.slane %v1047, %v1932
    %v1934 = vlaneseq
    %v1935 = vshrl.u32 %v1934, 7
    %v1936 = vsub.s32 0, %v1935
    %v1937 = vrot.slane %v1117, %v1936
    %v1938 = vlaneseq
    %v1939 = vshrl.u32 %v1938, 7
    %v1940 = vsub.s32 0, %v1939
    %v1941 = vrot.slane %v1187, %v1940
    %v1942 = vlaneseq
    %v1943 = vshrl.u32 %v1942, 7
    %v1944 = vsub.s32 0, %v1943
    %v1945 = vrot.slane %v1257, %v1944
    %v1946 = vlaneseq
    %v1947 = vshrl.u32 %v1946, 7
    %v1948 = vsub.s32 0, %v1947
    %v1949 = vrot.slane %v1327, %v1948
    %v1950 = vlaneseq
    %v1951 = vshrl.u32 %v1950, 7
    %v1952 = vsub.s32 0, %v1951
    %v1953 = vrot.slane %v1397, %v1952
    %v1954 = vlaneseq
    %v1955 = vshrl.u32 %v1954, 7
    %v1956 = vsub.s32 0, %v1955
    %v1957 = vrot.slane %v1467, %v1956
    %v1958 = vlaneseq
    %v1959 = vshrl.u32 %v1958, 7
    %v1960 = vsub.s32 0, %v1959
    %v1961 = vrot.slane %v1537, %v1960
    %v1962 = vlaneseq
    %v1963 = vshrl.u32 %v1962, 7
    %v1964 = vsub.s32 0, %v1963
    %v1965 = vrot.slane %v1607, %v1964
    %v1966 = vlaneseq
    %v1967 = vshrl.u32 %v1966, 7
    %v1968 = vsub.s32 0, %v1967
    %v1969 = vrot.slane %v1677, %v1968
    %v1970 = vlaneseq
    %v1971 = vshrl.u32 %v1970, 7
    %v1972 = vsub.s32 0, %v1971
    %v1973 = vrot.slane %v1747, %v1972
    %v1974 = vadd.f32 %v1753, %v1913
    %v1975 = vadd.f32 %v1758, %v1913
    %v1976 = vadd.f32 %v1763, %v1917
    %v1977 = vadd.f32 %v1768, %v1917
    %v1978 = vadd.f32 %v1773, %v1921
    %v1979 = vadd.f32 %v1778, %v1921
    %v1980 = vadd.f32 %v1783, %v1925
    %v1981 = vadd.f32 %v1788, %v1925
    %v1982 = vadd.f32 %v1793, %v1929
    %v1983 = vadd.f32 %v1798, %v1929
    %v1984 = vadd.f32 %v1803, %v1933
    %v1985 = vadd.f32 %v1808, %v1933
    %v1986 = vadd.f32 %v1813, %v1937
    %v1987 = vadd.f32 %v1818, %v1937
    %v1988 = vadd.f32 %v1823, %v1941
    %v1989 = vadd.f32 %v1828, %v1941
    %v1990 = vadd.f32 %v1833, %v1945
    %v1991 = vadd.f32 %v1838, %v1945
    %v1992 = vadd.f32 %v1843, %v1949
    %v1993 = vadd.f32 %v1848, %v1949
    %v1994 = vadd.f32 %v1853, %v1953
    %v1995 = vadd.f32 %v1858, %v1953
    %v1996 = vadd.f32 %v1863, %v1957
    %v1997 = vadd.f32 %v1868, %v1957
    %v1998 = vadd.f32 %v1873, %v1961
    %v1999 = vadd.f32 %v1878, %v1961
    %v2000 = vadd.f32 %v1883, %v1965
    %v2001 = vadd.f32 %v1888, %v1965
    %v2002 = vadd.f32 %v1893, %v1969
    %v2003 = vadd.f32 %v1898, %v1969
    %v2004 = vadd.f32 %v1903, %v1973
    %v2005 = vadd.f32 %v1908, %v1973
    %vm2006 = vcmp.gt.f32.partialorder %v1974, 0.0
    %vm2007 = vcmp.gt.f32.partialorder %v1975, 0.0
    %vm2008 = vcmp.gt.f32.partialorder %v1976, 0.0
    %vm2009 = vcmp.gt.f32.partialorder %v1977, 0.0
    %vm2010 = vcmp.gt.f32.partialorder %v1978, 0.0
    %vm2011 = vcmp.gt.f32.partialorder %v1979, 0.0
    %vm2012 = vcmp.gt.f32.partialorder %v1980, 0.0
    %vm2013 = vcmp.gt.f32.partialorder %v1981, 0.0
    %vm2014 = vcmp.gt.f32.partialorder %v1982, 0.0
    %vm2015 = vcmp.gt.f32.partialorder %v1983, 0.0
    %vm2016 = vcmp.gt.f32.partialorder %v1984, 0.0
    %vm2017 = vcmp.gt.f32.partialorder %v1985, 0.0
    %vm2018 = vcmp.gt.f32.partialorder %v1986, 0.0
    %vm2019 = vcmp.gt.f32.partialorder %v1987, 0.0
    %vm2020 = vcmp.gt.f32.partialorder %v1988, 0.0
    %vm2021 = vcmp.gt.f32.partialorder %v1989, 0.0
    %vm2022 = vcmp.gt.f32.partialorder %v1990, 0.0
    %vm2023 = vcmp.gt.f32.partialorder %v1991, 0.0
    %vm2024 = vcmp.gt.f32.partialorder %v1992, 0.0
    %vm2025 = vcmp.gt.f32.partialorder %v1993, 0.0
    %vm2026 = vcmp.gt.f32.partialorder %v1994, 0.0
    %vm2027 = vcmp.gt.f32.partialorder %v1995, 0.0
    %vm2028 = vcmp.gt.f32.partialorder %v1996, 0.0
    %vm2029 = vcmp.gt.f32.partialorder %v1997, 0.0
    %vm2030 = vcmp.gt.f32.partialorder %v1998, 0.0
    %vm2031 = vcmp.gt.f32.partialorder %v1999, 0.0
    %vm2032 = vcmp.gt.f32.partialorder %v2000, 0.0
    %vm2033 = vcmp.gt.f32.partialorder %v2001, 0.0
    %vm2034 = vcmp.gt.f32.partialorder %v2002, 0.0
    %vm2035 = vcmp.gt.f32.partialorder %v2003, 0.0
    %vm2036 = vcmp.gt.f32.partialorder %v2004, 0.0
    %vm2037 = vcmp.gt.f32.partialorder %v2005, 0.0
    %v2038 = vmul.f32 %v1974, 0.2
    %v2039 = vmul.f32 %v1975, 0.2
    %v2040 = vmul.f32 %v1976, 0.2
    %v2041 = vmul.f32 %v1977, 0.2
    %v2042 = vmul.f32 %v1978, 0.2
    %v2043 = vmul.f32 %v1979, 0.2
    %v2044 = vmul.f32 %v1980, 0.2
    %v2045 = vmul.f32 %v1981, 0.2
    %v2046 = vmul.f32 %v1982, 0.2
    %v2047 = vmul.f32 %v1983, 0.2
    %v2048 = vmul.f32 %v1984, 0.2
    %v2049 = vmul.f32 %v1985, 0.2
    %v2050 = vmul.f32 %v1986, 0.2
    %v2051 = vmul.f32 %v1987, 0.2
    %v2052 = vmul.f32 %v1988, 0.2
    %v2053 = vmul.f32 %v1989, 0.2
    %v2054 = vmul.f32 %v1990, 0.2
    %v2055 = vmul.f32 %v1991, 0.2
    %v2056 = vmul.f32 %v1992, 0.2
    %v2057 = vmul.f32 %v1993, 0.2
    %v2058 = vmul.f32 %v1994, 0.2
    %v2059 = vmul.f32 %v1995, 0.2
    %v2060 = vmul.f32 %v1996, 0.2
    %v2061 = vmul.f32 %v1997, 0.2
    %v2062 = vmul.f32 %v1998, 0.2
    %v2063 = vmul.f32 %v1999, 0.2
    %v2064 = vmul.f32 %v2000, 0.2
    %v2065 = vmul.f32 %v2001, 0.2
    %v2066 = vmul.f32 %v2002, 0.2
    %v2067 = vmul.f32 %v2003, 0.2
    %v2068 = vmul.f32 %v2004, 0.2
    %v2069 = vmul.f32 %v2005, 0.2
    %v2070 = vsel %vm2006, %v1974, %v2038
    %v2071 = vsel %vm2007, %v1975, %v2039
    %v2072 = vsel %vm2008, %v1976, %v2040
    %v2073 = vsel %vm2009, %v1977, %v2041
    %v2074 = vsel %vm2010, %v1978, %v2042
    %v2075 = vsel %vm2011, %v1979, %v2043
    %v2076 = vsel %vm2012, %v1980, %v2044
    %v2077 = vsel %vm2013, %v1981, %v2045
    %v2078 = vsel %vm2014, %v1982, %v2046
    %v2079 = vsel %vm2015, %v1983, %v2047
    %v2080 = vsel %vm2016, %v1984, %v2048
    %v2081 = vsel %vm2017, %v1985, %v2049
    %v2082 = vsel %vm2018, %v1986, %v2050
    %v2083 = vsel %vm2019, %v1987, %v2051
    %v2084 = vsel %vm2020, %v1988, %v2052
    %v2085 = vsel %vm2021, %v1989, %v2053
    %v2086 = vsel %vm2022, %v1990, %v2054
    %v2087 = vsel %vm2023, %v1991, %v2055
    %v2088 = vsel %vm2024, %v1992, %v2056
    %v2089 = vsel %vm2025, %v1993, %v2057
    %v2090 = vsel %vm2026, %v1994, %v2058
    %v2091 = vsel %vm2027, %v1995, %v2059
    %v2092 = vsel %vm2028, %v1996, %v2060
    %v2093 = vsel %vm2029, %v1997, %v2061
    %v2094 = vsel %vm2030, %v1998, %v2062
    %v2095 = vsel %vm2031, %v1999, %v2063
    %v2096 = vsel %vm2032, %v2000, %v2064
    %v2097 = vsel %vm2033, %v2001, %v2065
    %v2098 = vsel %vm2034, %v2002, %v2066
    %v2099 = vsel %vm2035, %v2003, %v2067
    %v2100 = vsel %vm2036, %v2004, %v2068
    %v2101 = vsel %vm2037, %v2005, %v2069
    %v2102 = vld [vmem:[%s1] sm:$0xff]
    %v2103 = vld [vmem:[%s1 + $0x8] sm:$0xff]
    %v2104 = vld [vmem:[%s1 + $0x10] sm:$0xff]
    %v2105 = vld [vmem:[%s1 + $0x18] sm:$0xff]
    %v2106 = vld [vmem:[%s1 + $0x20] sm:$0xff]
    %v2107 = vld [vmem:[%s1 + $0x28] sm:$0xff]
    %v2108 = vld [vmem:[%s1 + $0x30] sm:$0xff]
    %v2109 = vld [vmem:[%s1 + $0x38] sm:$0xff]
    %v2110 = vld [vmem:[%s1 + $0x40] sm:$0xff]
    %v2111 = vld [vmem:[%s1 + $0x48] sm:$0xff]
    %v2112 = vld [vmem:[%s1 + $0x50] sm:$0xff]
    %v2113 = vld [vmem:[%s1 + $0x58] sm:$0xff]
    %v2114 = vld [vmem:[%s1 + $0x60] sm:$0xff]
    %v2115 = vld [vmem:[%s1 + $0x68] sm:$0xff]
    %v2116 = vld [vmem:[%s1 + $0x70] sm:$0xff]
    %v2117 = vld [vmem:[%s1 + $0x78] sm:$0xff]
    %v2118 = vld [vmem:[%s1 + $0x80] sm:$0xff]
    %v2119 = vld [vmem:[%s1 + $0x88] sm:$0xff]
    %v2120 = vld [vmem:[%s1 + $0x90] sm:$0xff]
    %v2121 = vld [vmem:[%s1 + $0x98] sm:$0xff]
    %v2122 = vld [vmem:[%s1 + $0xa0] sm:$0xff]
    %v2123 = vld [vmem:[%s1 + $0xa8] sm:$0xff]
    %v2124 = vld [vmem:[%s1 + $0xb0] sm:$0xff]
    %v2125 = vld [vmem:[%s1 + $0xb8] sm:$0xff]
    %v2126 = vld [vmem:[%s1 + $0xc0] sm:$0xff]
    %v2127 = vld [vmem:[%s1 + $0xc8] sm:$0xff]
    %v2128 = vld [vmem:[%s1 + $0xd0] sm:$0xff]
    %v2129 = vld [vmem:[%s1 + $0xd8] sm:$0xff]
    %v2130 = vld [vmem:[%s1 + $0xe0] sm:$0xff]
    %v2131 = vld [vmem:[%s1 + $0xe8] sm:$0xff]
    %v2132 = vld [vmem:[%s1 + $0xf0] sm:$0xff]
    %v2133 = vld [vmem:[%s1 + $0xf8] sm:$0xff]
    %vm2134 = vcmp.gt.f32.partialorder %v2102, 0.0
    %vm2135 = vcmp.gt.f32.partialorder %v2103, 0.0
    %vm2136 = vcmp.gt.f32.partialorder %v2104, 0.0
    %vm2137 = vcmp.gt.f32.partialorder %v2105, 0.0
    %vm2138 = vcmp.gt.f32.partialorder %v2106, 0.0
    %vm2139 = vcmp.gt.f32.partialorder %v2107, 0.0
    %vm2140 = vcmp.gt.f32.partialorder %v2108, 0.0
    %vm2141 = vcmp.gt.f32.partialorder %v2109, 0.0
    %vm2142 = vcmp.gt.f32.partialorder %v2110, 0.0
    %vm2143 = vcmp.gt.f32.partialorder %v2111, 0.0
    %vm2144 = vcmp.gt.f32.partialorder %v2112, 0.0
    %vm2145 = vcmp.gt.f32.partialorder %v2113, 0.0
    %vm2146 = vcmp.gt.f32.partialorder %v2114, 0.0
    %vm2147 = vcmp.gt.f32.partialorder %v2115, 0.0
    %vm2148 = vcmp.gt.f32.partialorder %v2116, 0.0
    %vm2149 = vcmp.gt.f32.partialorder %v2117, 0.0
    %vm2150 = vcmp.gt.f32.partialorder %v2118, 0.0
    %vm2151 = vcmp.gt.f32.partialorder %v2119, 0.0
    %vm2152 = vcmp.gt.f32.partialorder %v2120, 0.0
    %vm2153 = vcmp.gt.f32.partialorder %v2121, 0.0
    %vm2154 = vcmp.gt.f32.partialorder %v2122, 0.0
    %vm2155 = vcmp.gt.f32.partialorder %v2123, 0.0
    %vm2156 = vcmp.gt.f32.partialorder %v2124, 0.0
    %vm2157 = vcmp.gt.f32.partialorder %v2125, 0.0
    %vm2158 = vcmp.gt.f32.partialorder %v2126, 0.0
    %vm2159 = vcmp.gt.f32.partialorder %v2127, 0.0
    %vm2160 = vcmp.gt.f32.partialorder %v2128, 0.0
    %vm2161 = vcmp.gt.f32.partialorder %v2129, 0.0
    %vm2162 = vcmp.gt.f32.partialorder %v2130, 0.0
    %vm2163 = vcmp.gt.f32.partialorder %v2131, 0.0
    %vm2164 = vcmp.gt.f32.partialorder %v2132, 0.0
    %vm2165 = vcmp.gt.f32.partialorder %v2133, 0.0
    %v2166 = vsel %vm2134, %v2070, -1e+30
    %v2167 = vsel %vm2135, %v2071, -1e+30
    %v2168 = vsel %vm2136, %v2072, -1e+30
    %v2169 = vsel %vm2137, %v2073, -1e+30
    %v2170 = vsel %vm2138, %v2074, -1e+30
    %v2171 = vsel %vm2139, %v2075, -1e+30
    %v2172 = vsel %vm2140, %v2076, -1e+30
    %v2173 = vsel %vm2141, %v2077, -1e+30
    %v2174 = vsel %vm2142, %v2078, -1e+30
    %v2175 = vsel %vm2143, %v2079, -1e+30
    %v2176 = vsel %vm2144, %v2080, -1e+30
    %v2177 = vsel %vm2145, %v2081, -1e+30
    %v2178 = vsel %vm2146, %v2082, -1e+30
    %v2179 = vsel %vm2147, %v2083, -1e+30
    %v2180 = vsel %vm2148, %v2084, -1e+30
    %v2181 = vsel %vm2149, %v2085, -1e+30
    %v2182 = vsel %vm2150, %v2086, -1e+30
    %v2183 = vsel %vm2151, %v2087, -1e+30
    %v2184 = vsel %vm2152, %v2088, -1e+30
    %v2185 = vsel %vm2153, %v2089, -1e+30
    %v2186 = vsel %vm2154, %v2090, -1e+30
    %v2187 = vsel %vm2155, %v2091, -1e+30
    %v2188 = vsel %vm2156, %v2092, -1e+30
    %v2189 = vsel %vm2157, %v2093, -1e+30
    %v2190 = vsel %vm2158, %v2094, -1e+30
    %v2191 = vsel %vm2159, %v2095, -1e+30
    %v2192 = vsel %vm2160, %v2096, -1e+30
    %v2193 = vsel %vm2161, %v2097, -1e+30
    %v2194 = vsel %vm2162, %v2098, -1e+30
    %v2195 = vsel %vm2163, %v2099, -1e+30
    %v2196 = vsel %vm2164, %v2100, -1e+30
    %v2197 = vsel %vm2165, %v2101, -1e+30
    %vm2198 = vcmask 130048
    %v2199 = vsel %vm2198, %v2166, -inf
    %2200 = vmax.xlane.f32.xlu0 %v2199
    %v2201 = vpop.xlane.xlu0 %2200
    %v2202 = vsel %vm2198, %v2167, -inf
    %2203 = vmax.xlane.f32.xlu0 %v2202
    %v2204 = vpop.xlane.xlu0 %2203
    %v2205 = vsel %vm2198, %v2168, -inf
    %2206 = vmax.xlane.f32.xlu0 %v2205
    %v2207 = vpop.xlane.xlu0 %2206
    %v2208 = vsel %vm2198, %v2169, -inf
    %2209 = vmax.xlane.f32.xlu0 %v2208
    %v2210 = vpop.xlane.xlu0 %2209
    %v2211 = vsel %vm2198, %v2170, -inf
    %2212 = vmax.xlane.f32.xlu0 %v2211
    %v2213 = vpop.xlane.xlu0 %2212
    %v2214 = vsel %vm2198, %v2171, -inf
    %2215 = vmax.xlane.f32.xlu0 %v2214
    %v2216 = vpop.xlane.xlu0 %2215
    %v2217 = vsel %vm2198, %v2172, -inf
    %2218 = vmax.xlane.f32.xlu0 %v2217
    %v2219 = vpop.xlane.xlu0 %2218
    %v2220 = vsel %vm2198, %v2173, -inf
    %2221 = vmax.xlane.f32.xlu0 %v2220
    %v2222 = vpop.xlane.xlu0 %2221
    %v2223 = vsel %vm2198, %v2174, -inf
    %2224 = vmax.xlane.f32.xlu0 %v2223
    %v2225 = vpop.xlane.xlu0 %2224
    %v2226 = vsel %vm2198, %v2175, -inf
    %2227 = vmax.xlane.f32.xlu0 %v2226
    %v2228 = vpop.xlane.xlu0 %2227
    %v2229 = vsel %vm2198, %v2176, -inf
    %2230 = vmax.xlane.f32.xlu0 %v2229
    %v2231 = vpop.xlane.xlu0 %2230
    %v2232 = vsel %vm2198, %v2177, -inf
    %2233 = vmax.xlane.f32.xlu0 %v2232
    %v2234 = vpop.xlane.xlu0 %2233
    %v2235 = vsel %vm2198, %v2178, -inf
    %2236 = vmax.xlane.f32.xlu0 %v2235
    %v2237 = vpop.xlane.xlu0 %2236
    %v2238 = vsel %vm2198, %v2179, -inf
    %2239 = vmax.xlane.f32.xlu0 %v2238
    %v2240 = vpop.xlane.xlu0 %2239
    %v2241 = vsel %vm2198, %v2180, -inf
    %2242 = vmax.xlane.f32.xlu0 %v2241
    %v2243 = vpop.xlane.xlu0 %2242
    %v2244 = vsel %vm2198, %v2181, -inf
    %2245 = vmax.xlane.f32.xlu0 %v2244
    %v2246 = vpop.xlane.xlu0 %2245
    %v2247 = vsel %vm2198, %v2182, -inf
    %2248 = vmax.xlane.f32.xlu0 %v2247
    %v2249 = vpop.xlane.xlu0 %2248
    %v2250 = vsel %vm2198, %v2183, -inf
    %2251 = vmax.xlane.f32.xlu0 %v2250
    %v2252 = vpop.xlane.xlu0 %2251
    %v2253 = vsel %vm2198, %v2184, -inf
    %2254 = vmax.xlane.f32.xlu0 %v2253
    %v2255 = vpop.xlane.xlu0 %2254
    %v2256 = vsel %vm2198, %v2185, -inf
    %2257 = vmax.xlane.f32.xlu0 %v2256
    %v2258 = vpop.xlane.xlu0 %2257
    %v2259 = vsel %vm2198, %v2186, -inf
    %2260 = vmax.xlane.f32.xlu0 %v2259
    %v2261 = vpop.xlane.xlu0 %2260
    %v2262 = vsel %vm2198, %v2187, -inf
    %2263 = vmax.xlane.f32.xlu0 %v2262
    %v2264 = vpop.xlane.xlu0 %2263
    %v2265 = vsel %vm2198, %v2188, -inf
    %2266 = vmax.xlane.f32.xlu0 %v2265
    %v2267 = vpop.xlane.xlu0 %2266
    %v2268 = vsel %vm2198, %v2189, -inf
    %2269 = vmax.xlane.f32.xlu0 %v2268
    %v2270 = vpop.xlane.xlu0 %2269
    %v2271 = vsel %vm2198, %v2190, -inf
    %2272 = vmax.xlane.f32.xlu0 %v2271
    %v2273 = vpop.xlane.xlu0 %2272
    %v2274 = vsel %vm2198, %v2191, -inf
    %2275 = vmax.xlane.f32.xlu0 %v2274
    %v2276 = vpop.xlane.xlu0 %2275
    %v2277 = vsel %vm2198, %v2192, -inf
    %2278 = vmax.xlane.f32.xlu0 %v2277
    %v2279 = vpop.xlane.xlu0 %2278
    %v2280 = vsel %vm2198, %v2193, -inf
    %2281 = vmax.xlane.f32.xlu0 %v2280
    %v2282 = vpop.xlane.xlu0 %2281
    %v2283 = vsel %vm2198, %v2194, -inf
    %2284 = vmax.xlane.f32.xlu0 %v2283
    %v2285 = vpop.xlane.xlu0 %2284
    %v2286 = vsel %vm2198, %v2195, -inf
    %2287 = vmax.xlane.f32.xlu0 %v2286
    %v2288 = vpop.xlane.xlu0 %2287
    %v2289 = vsel %vm2198, %v2196, -inf
    %2290 = vmax.xlane.f32.xlu0 %v2289
    %v2291 = vpop.xlane.xlu0 %2290
    %v2292 = vsel %vm2198, %v2197, -inf
    %2293 = vmax.xlane.f32.xlu0 %v2292
    %v2294 = vpop.xlane.xlu0 %2293
    %v2295 = vsub.f32 %v2166, %v2201
    %v2296 = vsub.f32 %v2167, %v2204
    %v2297 = vsub.f32 %v2168, %v2207
    %v2298 = vsub.f32 %v2169, %v2210
    %v2299 = vsub.f32 %v2170, %v2213
    %v2300 = vsub.f32 %v2171, %v2216
    %v2301 = vsub.f32 %v2172, %v2219
    %v2302 = vsub.f32 %v2173, %v2222
    %v2303 = vsub.f32 %v2174, %v2225
    %v2304 = vsub.f32 %v2175, %v2228
    %v2305 = vsub.f32 %v2176, %v2231
    %v2306 = vsub.f32 %v2177, %v2234
    %v2307 = vsub.f32 %v2178, %v2237
    %v2308 = vsub.f32 %v2179, %v2240
    %v2309 = vsub.f32 %v2180, %v2243
    %v2310 = vsub.f32 %v2181, %v2246
    %v2311 = vsub.f32 %v2182, %v2249
    %v2312 = vsub.f32 %v2183, %v2252
    %v2313 = vsub.f32 %v2184, %v2255
    %v2314 = vsub.f32 %v2185, %v2258
    %v2315 = vsub.f32 %v2186, %v2261
    %v2316 = vsub.f32 %v2187, %v2264
    %v2317 = vsub.f32 %v2188, %v2267
    %v2318 = vsub.f32 %v2189, %v2270
    %v2319 = vsub.f32 %v2190, %v2273
    %v2320 = vsub.f32 %v2191, %v2276
    %v2321 = vsub.f32 %v2192, %v2279
    %v2322 = vsub.f32 %v2193, %v2282
    %v2323 = vsub.f32 %v2194, %v2285
    %v2324 = vsub.f32 %v2195, %v2288
    %v2325 = vsub.f32 %v2196, %v2291
    %v2326 = vsub.f32 %v2197, %v2294
    %v2327 = vmul.f32 %v2295, 1.442695
    %v2328 = vpow.pop %v2327
    %v2329 = vmul.f32 %v2296, 1.442695
    %v2330 = vpow.pop %v2329
    %v2331 = vmul.f32 %v2297, 1.442695
    %v2332 = vpow.pop %v2331
    %v2333 = vmul.f32 %v2298, 1.442695
    %v2334 = vpow.pop %v2333
    %v2335 = vmul.f32 %v2299, 1.442695
    %v2336 = vpow.pop %v2335
    %v2337 = vmul.f32 %v2300, 1.442695
    %v2338 = vpow.pop %v2337
    %v2339 = vmul.f32 %v2301, 1.442695
    %v2340 = vpow.pop %v2339
    %v2341 = vmul.f32 %v2302, 1.442695
    %v2342 = vpow.pop %v2341
    %v2343 = vmul.f32 %v2303, 1.442695
    %v2344 = vpow.pop %v2343
    %v2345 = vmul.f32 %v2304, 1.442695
    %v2346 = vpow.pop %v2345
    %v2347 = vmul.f32 %v2305, 1.442695
    %v2348 = vpow.pop %v2347
    %v2349 = vmul.f32 %v2306, 1.442695
    %v2350 = vpow.pop %v2349
    %v2351 = vmul.f32 %v2307, 1.442695
    %v2352 = vpow.pop %v2351
    %v2353 = vmul.f32 %v2308, 1.442695
    %v2354 = vpow.pop %v2353
    %v2355 = vmul.f32 %v2309, 1.442695
    %v2356 = vpow.pop %v2355
    %v2357 = vmul.f32 %v2310, 1.442695
    %v2358 = vpow.pop %v2357
    %v2359 = vmul.f32 %v2311, 1.442695
    %v2360 = vpow.pop %v2359
    %v2361 = vmul.f32 %v2312, 1.442695
    %v2362 = vpow.pop %v2361
    %v2363 = vmul.f32 %v2313, 1.442695
    %v2364 = vpow.pop %v2363
    %v2365 = vmul.f32 %v2314, 1.442695
    %v2366 = vpow.pop %v2365
    %v2367 = vmul.f32 %v2315, 1.442695
    %v2368 = vpow.pop %v2367
    %v2369 = vmul.f32 %v2316, 1.442695
    %v2370 = vpow.pop %v2369
    %v2371 = vmul.f32 %v2317, 1.442695
    %v2372 = vpow.pop %v2371
    %v2373 = vmul.f32 %v2318, 1.442695
    %v2374 = vpow.pop %v2373
    %v2375 = vmul.f32 %v2319, 1.442695
    %v2376 = vpow.pop %v2375
    %v2377 = vmul.f32 %v2320, 1.442695
    %v2378 = vpow.pop %v2377
    %v2379 = vmul.f32 %v2321, 1.442695
    %v2380 = vpow.pop %v2379
    %v2381 = vmul.f32 %v2322, 1.442695
    %v2382 = vpow.pop %v2381
    %v2383 = vmul.f32 %v2323, 1.442695
    %v2384 = vpow.pop %v2383
    %v2385 = vmul.f32 %v2324, 1.442695
    %v2386 = vpow.pop %v2385
    %v2387 = vmul.f32 %v2325, 1.442695
    %v2388 = vpow.pop %v2387
    %v2389 = vmul.f32 %v2326, 1.442695
    %v2390 = vpow.pop %v2389
    %v2391 = vsel %vm2198, %v2328, 0.0
    %2392 = vadd.xlane.f32.xlu0 %v2391
    %v2393 = vpop.xlane.xlu0 %2392
    %v2394 = vsel %vm2198, %v2330, 0.0
    %2395 = vadd.xlane.f32.xlu0 %v2394
    %v2396 = vpop.xlane.xlu0 %2395
    %v2397 = vsel %vm2198, %v2332, 0.0
    %2398 = vadd.xlane.f32.xlu0 %v2397
    %v2399 = vpop.xlane.xlu0 %2398
    %v2400 = vsel %vm2198, %v2334, 0.0
    %2401 = vadd.xlane.f32.xlu0 %v2400
    %v2402 = vpop.xlane.xlu0 %2401
    %v2403 = vsel %vm2198, %v2336, 0.0
    %2404 = vadd.xlane.f32.xlu0 %v2403
    %v2405 = vpop.xlane.xlu0 %2404
    %v2406 = vsel %vm2198, %v2338, 0.0
    %2407 = vadd.xlane.f32.xlu0 %v2406
    %v2408 = vpop.xlane.xlu0 %2407
    %v2409 = vsel %vm2198, %v2340, 0.0
    %2410 = vadd.xlane.f32.xlu0 %v2409
    %v2411 = vpop.xlane.xlu0 %2410
    %v2412 = vsel %vm2198, %v2342, 0.0
    %2413 = vadd.xlane.f32.xlu0 %v2412
    %v2414 = vpop.xlane.xlu0 %2413
    %v2415 = vsel %vm2198, %v2344, 0.0
    %2416 = vadd.xlane.f32.xlu0 %v2415
    %v2417 = vpop.xlane.xlu0 %2416
    %v2418 = vsel %vm2198, %v2346, 0.0
    %2419 = vadd.xlane.f32.xlu0 %v2418
    %v2420 = vpop.xlane.xlu0 %2419
    %v2421 = vsel %vm2198, %v2348, 0.0
    %2422 = vadd.xlane.f32.xlu0 %v2421
    %v2423 = vpop.xlane.xlu0 %2422
    %v2424 = vsel %vm2198, %v2350, 0.0
    %2425 = vadd.xlane.f32.xlu0 %v2424
    %v2426 = vpop.xlane.xlu0 %2425
    %v2427 = vsel %vm2198, %v2352, 0.0
    %2428 = vadd.xlane.f32.xlu0 %v2427
    %v2429 = vpop.xlane.xlu0 %2428
    %v2430 = vsel %vm2198, %v2354, 0.0
    %2431 = vadd.xlane.f32.xlu0 %v2430
    %v2432 = vpop.xlane.xlu0 %2431
    %v2433 = vsel %vm2198, %v2356, 0.0
    %2434 = vadd.xlane.f32.xlu0 %v2433
    %v2435 = vpop.xlane.xlu0 %2434
    %v2436 = vsel %vm2198, %v2358, 0.0
    %2437 = vadd.xlane.f32.xlu0 %v2436
    %v2438 = vpop.xlane.xlu0 %2437
    %v2439 = vsel %vm2198, %v2360, 0.0
    %2440 = vadd.xlane.f32.xlu0 %v2439
    %v2441 = vpop.xlane.xlu0 %2440
    %v2442 = vsel %vm2198, %v2362, 0.0
    %2443 = vadd.xlane.f32.xlu0 %v2442
    %v2444 = vpop.xlane.xlu0 %2443
    %v2445 = vsel %vm2198, %v2364, 0.0
    %2446 = vadd.xlane.f32.xlu0 %v2445
    %v2447 = vpop.xlane.xlu0 %2446
    %v2448 = vsel %vm2198, %v2366, 0.0
    %2449 = vadd.xlane.f32.xlu0 %v2448
    %v2450 = vpop.xlane.xlu0 %2449
    %v2451 = vsel %vm2198, %v2368, 0.0
    %2452 = vadd.xlane.f32.xlu0 %v2451
    %v2453 = vpop.xlane.xlu0 %2452
    %v2454 = vsel %vm2198, %v2370, 0.0
    %2455 = vadd.xlane.f32.xlu0 %v2454
    %v2456 = vpop.xlane.xlu0 %2455
    %v2457 = vsel %vm2198, %v2372, 0.0
    %2458 = vadd.xlane.f32.xlu0 %v2457
    %v2459 = vpop.xlane.xlu0 %2458
    %v2460 = vsel %vm2198, %v2374, 0.0
    %2461 = vadd.xlane.f32.xlu0 %v2460
    %v2462 = vpop.xlane.xlu0 %2461
    %v2463 = vsel %vm2198, %v2376, 0.0
    %2464 = vadd.xlane.f32.xlu0 %v2463
    %v2465 = vpop.xlane.xlu0 %2464
    %v2466 = vsel %vm2198, %v2378, 0.0
    %2467 = vadd.xlane.f32.xlu0 %v2466
    %v2468 = vpop.xlane.xlu0 %2467
    %v2469 = vsel %vm2198, %v2380, 0.0
    %2470 = vadd.xlane.f32.xlu0 %v2469
    %v2471 = vpop.xlane.xlu0 %2470
    %v2472 = vsel %vm2198, %v2382, 0.0
    %2473 = vadd.xlane.f32.xlu0 %v2472
    %v2474 = vpop.xlane.xlu0 %2473
    %v2475 = vsel %vm2198, %v2384, 0.0
    %2476 = vadd.xlane.f32.xlu0 %v2475
    %v2477 = vpop.xlane.xlu0 %2476
    %v2478 = vsel %vm2198, %v2386, 0.0
    %2479 = vadd.xlane.f32.xlu0 %v2478
    %v2480 = vpop.xlane.xlu0 %2479
    %v2481 = vsel %vm2198, %v2388, 0.0
    %2482 = vadd.xlane.f32.xlu0 %v2481
    %v2483 = vpop.xlane.xlu0 %2482
    %v2484 = vsel %vm2198, %v2390, 0.0
    %2485 = vadd.xlane.f32.xlu0 %v2484
    %v2486 = vpop.xlane.xlu0 %2485
    %v2487 = vrcp.pop %v2393
    %v2488 = vrcp.pop %v2396
    %v2489 = vrcp.pop %v2399
    %v2490 = vrcp.pop %v2402
    %v2491 = vrcp.pop %v2405
    %v2492 = vrcp.pop %v2408
    %v2493 = vrcp.pop %v2411
    %v2494 = vrcp.pop %v2414
    %v2495 = vrcp.pop %v2417
    %v2496 = vrcp.pop %v2420
    %v2497 = vrcp.pop %v2423
    %v2498 = vrcp.pop %v2426
    %v2499 = vrcp.pop %v2429
    %v2500 = vrcp.pop %v2432
    %v2501 = vrcp.pop %v2435
    %v2502 = vrcp.pop %v2438
    %v2503 = vrcp.pop %v2441
    %v2504 = vrcp.pop %v2444
    %v2505 = vrcp.pop %v2447
    %v2506 = vrcp.pop %v2450
    %v2507 = vrcp.pop %v2453
    %v2508 = vrcp.pop %v2456
    %v2509 = vrcp.pop %v2459
    %v2510 = vrcp.pop %v2462
    %v2511 = vrcp.pop %v2465
    %v2512 = vrcp.pop %v2468
    %v2513 = vrcp.pop %v2471
    %v2514 = vrcp.pop %v2474
    %v2515 = vrcp.pop %v2477
    %v2516 = vrcp.pop %v2480
    %v2517 = vrcp.pop %v2483
    %v2518 = vrcp.pop %v2486
    %v2519 = vmul.f32 %v2328, %v2487
    %v2520 = vmul.f32 %v2330, %v2488
    %v2521 = vmul.f32 %v2332, %v2489
    %v2522 = vmul.f32 %v2334, %v2490
    %v2523 = vmul.f32 %v2336, %v2491
    %v2524 = vmul.f32 %v2338, %v2492
    %v2525 = vmul.f32 %v2340, %v2493
    %v2526 = vmul.f32 %v2342, %v2494
    %v2527 = vmul.f32 %v2344, %v2495
    %v2528 = vmul.f32 %v2346, %v2496
    %v2529 = vmul.f32 %v2348, %v2497
    %v2530 = vmul.f32 %v2350, %v2498
    %v2531 = vmul.f32 %v2352, %v2499
    %v2532 = vmul.f32 %v2354, %v2500
    %v2533 = vmul.f32 %v2356, %v2501
    %v2534 = vmul.f32 %v2358, %v2502
    %v2535 = vmul.f32 %v2360, %v2503
    %v2536 = vmul.f32 %v2362, %v2504
    %v2537 = vmul.f32 %v2364, %v2505
    %v2538 = vmul.f32 %v2366, %v2506
    %v2539 = vmul.f32 %v2368, %v2507
    %v2540 = vmul.f32 %v2370, %v2508
    %v2541 = vmul.f32 %v2372, %v2509
    %v2542 = vmul.f32 %v2374, %v2510
    %v2543 = vmul.f32 %v2376, %v2511
    %v2544 = vmul.f32 %v2378, %v2512
    %v2545 = vmul.f32 %v2380, %v2513
    %v2546 = vmul.f32 %v2382, %v2514
    %v2547 = vmul.f32 %v2384, %v2515
    %v2548 = vmul.f32 %v2386, %v2516
    %v2549 = vmul.f32 %v2388, %v2517
    %v2550 = vmul.f32 %v2390, %v2518
    %v2551 = vsel %vm2198, %v2519, 0.0
    %v2552 = vsel %vm2198, %v2520, 0.0
    %v2553 = vadd.f32 %v2551, %v2552
    %v2554 = vrot.slane %v2553, 4
    %v2555 = vadd.f32 %v2553, %v2554
    %v2556 = vrot.slane %v2555, 2
    %v2557 = vadd.f32 %v2555, %v2556
    %v2558 = vrot.slane %v2557, 1
    %v2559 = vadd.f32 %v2557, %v2558
    %v2560 = vsel %vm2198, %v2521, 0.0
    %v2561 = vsel %vm2198, %v2522, 0.0
    %v2562 = vadd.f32 %v2560, %v2561
    %v2563 = vrot.slane %v2562, 4
    %v2564 = vadd.f32 %v2562, %v2563
    %v2565 = vrot.slane %v2564, 2
    %v2566 = vadd.f32 %v2564, %v2565
    %v2567 = vrot.slane %v2566, 1
    %v2568 = vadd.f32 %v2566, %v2567
    %v2569 = vsel %vm2198, %v2523, 0.0
    %v2570 = vsel %vm2198, %v2524, 0.0
    %v2571 = vadd.f32 %v2569, %v2570
    %v2572 = vrot.slane %v2571, 4
    %v2573 = vadd.f32 %v2571, %v2572
    %v2574 = vrot.slane %v2573, 2
    %v2575 = vadd.f32 %v2573, %v2574
    %v2576 = vrot.slane %v2575, 1
    %v2577 = vadd.f32 %v2575, %v2576
    %v2578 = vsel %vm2198, %v2525, 0.0
    %v2579 = vsel %vm2198, %v2526, 0.0
    %v2580 = vadd.f32 %v2578, %v2579
    %v2581 = vrot.slane %v2580, 4
    %v2582 = vadd.f32 %v2580, %v2581
    %v2583 = vrot.slane %v2582, 2
    %v2584 = vadd.f32 %v2582, %v2583
    %v2585 = vrot.slane %v2584, 1
    %v2586 = vadd.f32 %v2584, %v2585
    %v2587 = vsel %vm2198, %v2527, 0.0
    %v2588 = vsel %vm2198, %v2528, 0.0
    %v2589 = vadd.f32 %v2587, %v2588
    %v2590 = vrot.slane %v2589, 4
    %v2591 = vadd.f32 %v2589, %v2590
    %v2592 = vrot.slane %v2591, 2
    %v2593 = vadd.f32 %v2591, %v2592
    %v2594 = vrot.slane %v2593, 1
    %v2595 = vadd.f32 %v2593, %v2594
    %v2596 = vsel %vm2198, %v2529, 0.0
    %v2597 = vsel %vm2198, %v2530, 0.0
    %v2598 = vadd.f32 %v2596, %v2597
    %v2599 = vrot.slane %v2598, 4
    %v2600 = vadd.f32 %v2598, %v2599
    %v2601 = vrot.slane %v2600, 2
    %v2602 = vadd.f32 %v2600, %v2601
    %v2603 = vrot.slane %v2602, 1
    %v2604 = vadd.f32 %v2602, %v2603
    %v2605 = vsel %vm2198, %v2531, 0.0
    %v2606 = vsel %vm2198, %v2532, 0.0
    %v2607 = vadd.f32 %v2605, %v2606
    %v2608 = vrot.slane %v2607, 4
    %v2609 = vadd.f32 %v2607, %v2608
    %v2610 = vrot.slane %v2609, 2
    %v2611 = vadd.f32 %v2609, %v2610
    %v2612 = vrot.slane %v2611, 1
    %v2613 = vadd.f32 %v2611, %v2612
    %v2614 = vsel %vm2198, %v2533, 0.0
    %v2615 = vsel %vm2198, %v2534, 0.0
    %v2616 = vadd.f32 %v2614, %v2615
    %v2617 = vrot.slane %v2616, 4
    %v2618 = vadd.f32 %v2616, %v2617
    %v2619 = vrot.slane %v2618, 2
    %v2620 = vadd.f32 %v2618, %v2619
    %v2621 = vrot.slane %v2620, 1
    %v2622 = vadd.f32 %v2620, %v2621
    %v2623 = vsel %vm2198, %v2535, 0.0
    %v2624 = vsel %vm2198, %v2536, 0.0
    %v2625 = vadd.f32 %v2623, %v2624
    %v2626 = vrot.slane %v2625, 4
    %v2627 = vadd.f32 %v2625, %v2626
    %v2628 = vrot.slane %v2627, 2
    %v2629 = vadd.f32 %v2627, %v2628
    %v2630 = vrot.slane %v2629, 1
    %v2631 = vadd.f32 %v2629, %v2630
    %v2632 = vsel %vm2198, %v2537, 0.0
    %v2633 = vsel %vm2198, %v2538, 0.0
    %v2634 = vadd.f32 %v2632, %v2633
    %v2635 = vrot.slane %v2634, 4
    %v2636 = vadd.f32 %v2634, %v2635
    %v2637 = vrot.slane %v2636, 2
    %v2638 = vadd.f32 %v2636, %v2637
    %v2639 = vrot.slane %v2638, 1
    %v2640 = vadd.f32 %v2638, %v2639
    %v2641 = vsel %vm2198, %v2539, 0.0
    %v2642 = vsel %vm2198, %v2540, 0.0
    %v2643 = vadd.f32 %v2641, %v2642
    %v2644 = vrot.slane %v2643, 4
    %v2645 = vadd.f32 %v2643, %v2644
    %v2646 = vrot.slane %v2645, 2
    %v2647 = vadd.f32 %v2645, %v2646
    %v2648 = vrot.slane %v2647, 1
    %v2649 = vadd.f32 %v2647, %v2648
    %v2650 = vsel %vm2198, %v2541, 0.0
    %v2651 = vsel %vm2198, %v2542, 0.0
    %v2652 = vadd.f32 %v2650, %v2651
    %v2653 = vrot.slane %v2652, 4
    %v2654 = vadd.f32 %v2652, %v2653
    %v2655 = vrot.slane %v2654, 2
    %v2656 = vadd.f32 %v2654, %v2655
    %v2657 = vrot.slane %v2656, 1
    %v2658 = vadd.f32 %v2656, %v2657
    %v2659 = vsel %vm2198, %v2543, 0.0
    %v2660 = vsel %vm2198, %v2544, 0.0
    %v2661 = vadd.f32 %v2659, %v2660
    %v2662 = vrot.slane %v2661, 4
    %v2663 = vadd.f32 %v2661, %v2662
    %v2664 = vrot.slane %v2663, 2
    %v2665 = vadd.f32 %v2663, %v2664
    %v2666 = vrot.slane %v2665, 1
    %v2667 = vadd.f32 %v2665, %v2666
    %v2668 = vsel %vm2198, %v2545, 0.0
    %v2669 = vsel %vm2198, %v2546, 0.0
    %v2670 = vadd.f32 %v2668, %v2669
    %v2671 = vrot.slane %v2670, 4
    %v2672 = vadd.f32 %v2670, %v2671
    %v2673 = vrot.slane %v2672, 2
    %v2674 = vadd.f32 %v2672, %v2673
    %v2675 = vrot.slane %v2674, 1
    %v2676 = vadd.f32 %v2674, %v2675
    %v2677 = vsel %vm2198, %v2547, 0.0
    %v2678 = vsel %vm2198, %v2548, 0.0
    %v2679 = vadd.f32 %v2677, %v2678
    %v2680 = vrot.slane %v2679, 4
    %v2681 = vadd.f32 %v2679, %v2680
    %v2682 = vrot.slane %v2681, 2
    %v2683 = vadd.f32 %v2681, %v2682
    %v2684 = vrot.slane %v2683, 1
    %v2685 = vadd.f32 %v2683, %v2684
    %v2686 = vsel %vm2198, %v2549, 0.0
    %v2687 = vsel %vm2198, %v2550, 0.0
    %v2688 = vadd.f32 %v2686, %v2687
    %v2689 = vrot.slane %v2688, 4
    %v2690 = vadd.f32 %v2688, %v2689
    %v2691 = vrot.slane %v2690, 2
    %v2692 = vadd.f32 %v2690, %v2691
    %v2693 = vrot.slane %v2692, 1
    %v2694 = vadd.f32 %v2692, %v2693
    %v2695 = vrcp.pop 16.0
    %v2696 = vmul.f32 %v2559, %v2695
    %v2697 = vmul.f32 %v2568, %v2695
    %v2698 = vmul.f32 %v2577, %v2695
    %v2699 = vmul.f32 %v2586, %v2695
    %v2700 = vmul.f32 %v2595, %v2695
    %v2701 = vmul.f32 %v2604, %v2695
    %v2702 = vmul.f32 %v2613, %v2695
    %v2703 = vmul.f32 %v2622, %v2695
    %v2704 = vmul.f32 %v2631, %v2695
    %v2705 = vmul.f32 %v2640, %v2695
    %v2706 = vmul.f32 %v2649, %v2695
    %v2707 = vmul.f32 %v2658, %v2695
    %v2708 = vmul.f32 %v2667, %v2695
    %v2709 = vmul.f32 %v2676, %v2695
    %v2710 = vmul.f32 %v2685, %v2695
    %v2711 = vmul.f32 %v2694, %v2695
    %v2713 = vsel %vm2198, %v2696, 0
    %2715 = vmatprep.subr.mxu0 0.0
    %2716 = vmatpush1.msra.mxu0 %v242
    %2717 = vmatprep.subr.mxu0 0.0
    %2718 = vmatpush1.msra.mxu0 %v247
    %2719 = vmatprep.subr.mxu0 0.0
    %2720 = vmatpush1.msra.mxu0 0.0
    %2721 = vmatprep.subr.mxu0 0.0
    %2722 = vmatpush1.msra.mxu0 0.0
    %2723 = vmatprep.subr.mxu0 0.0
    %2724 = vmatpush1.msra.mxu0 0.0
    %2725 = vmatprep.subr.mxu0 0.0
    %2726 = vmatpush1.msra.mxu0 0.0
    %2727 = vmatprep.subr.mxu0 0.0
    %2728 = vmatpush1.msra.mxu0 0.0
    %2729 = vmatprep.subr.mxu0 0.0
    %2730 = vmatpush1.msra.mxu0 0.0
    %2731 = vmatprep.subr.mxu0 0.0
    %2732 = vmatpush1.msra.mxu0 0.0
    %2733 = vmatprep.subr.mxu0 0.0
    %2734 = vmatpush1.msra.mxu0 0.0
    %2735 = vmatprep.subr.mxu0 0.0
    %2736 = vmatpush1.msra.mxu0 0.0
    %2737 = vmatprep.subr.mxu0 0.0
    %2738 = vmatpush1.msra.mxu0 0.0
    %2739 = vmatprep.subr.mxu0 0.0
    %2740 = vmatpush1.msra.mxu0 0.0
    %2741 = vmatprep.subr.mxu0 0.0
    %2742 = vmatpush1.msra.mxu0 0.0
    %2743 = vmatprep.subr.mxu0 0.0
    %2744 = vmatpush1.msra.mxu0 0.0
    %2745 = vmatprep.subr.mxu0 0.0
    %2746 = vmatpush1.msra.mxu0 0.0
    %2747 = vmatprep.subr.mxu0 0.0
    %2748 = vmatpush1.msra.mxu0 0.0
    %2749 = vmatprep.subr.mxu0 0.0
    %2750 = vmatpush1.msra.mxu0 0.0
    %2751 = vmatprep.subr.mxu0 0.0
    %2752 = vmatpush1.msra.mxu0 0.0
    %2753 = vmatprep.subr.mxu0 0.0
    %2754 = vmatpush1.msra.mxu0 0.0
    %2755 = vmatprep.subr.mxu0 0.0
    %2756 = vmatpush1.msra.mxu0 0.0
    %2757 = vmatprep.subr.mxu0 0.0
    %2758 = vmatpush1.msra.mxu0 0.0
    %2759 = vmatprep.subr.mxu0 0.0
    %2760 = vmatpush1.msra.mxu0 0.0
    %2761 = vmatprep.subr.mxu0 0.0
    %2762 = vmatpush1.msra.mxu0 0.0
    %2763 = vmatprep.subr.mxu0 0.0
    %2764 = vmatpush1.msra.mxu0 0.0
    %2765 = vmatprep.subr.mxu0 0.0
    %2766 = vmatpush1.msra.mxu0 0.0
    %2767 = vmatprep.subr.mxu0 0.0
    %2768 = vmatpush1.msra.mxu0 0.0
    %2769 = vmatprep.subr.mxu0 0.0
    %2770 = vmatpush1.msra.mxu0 0.0
    %2771 = vmatprep.subr.mxu0 0.0
    %2772 = vmatpush1.msra.mxu0 0.0
    %2773 = vmatprep.subr.mxu0 0.0
    %2774 = vmatpush1.msra.mxu0 0.0
    %2775 = vmatprep.subr.mxu0 0.0
    %2776 = vmatpush1.msra.mxu0 0.0
    %2777 = vmatprep.subr.mxu0 0.0
    %2778 = vmatpush1.msra.mxu0 0.0
    %2779 = vmatprep.mubr.f32.mxu0 0.0
    %2780 = vmatmul.mubr.f32.gmra.mrb[0].mxu0 %v2713
    %v2781 = vpop.f32.mrb[0].mxu0
    %v2782 = vadd.f32 0.0, %v2781
    %v2783 = vpop.f32.mrb[0].mxu0
    %2784 = vdwg.mxu0
    %v2786 = vsel %vm2198, %v2697, 0
    %2788 = vmatprep.subr.mxu0 0.0
    %2789 = vmatpush1.msra.mxu0 %v252
    %2790 = vmatprep.subr.mxu0 0.0
    %2791 = vmatpush1.msra.mxu0 %v257
    %2792 = vmatprep.subr.mxu0 0.0
    %2793 = vmatpush1.msra.mxu0 0.0
    %2794 = vmatprep.subr.mxu0 0.0
    %2795 = vmatpush1.msra.mxu0 0.0
    %2796 = vmatprep.subr.mxu0 0.0
    %2797 = vmatpush1.msra.mxu0 0.0
    %2798 = vmatprep.subr.mxu0 0.0
    %2799 = vmatpush1.msra.mxu0 0.0
    %2800 = vmatprep.subr.mxu0 0.0
    %2801 = vmatpush1.msra.mxu0 0.0
    %2802 = vmatprep.subr.mxu0 0.0
    %2803 = vmatpush1.msra.mxu0 0.0
    %2804 = vmatprep.subr.mxu0 0.0
    %2805 = vmatpush1.msra.mxu0 0.0
    %2806 = vmatprep.subr.mxu0 0.0
    %2807 = vmatpush1.msra.mxu0 0.0
    %2808 = vmatprep.subr.mxu0 0.0
    %2809 = vmatpush1.msra.mxu0 0.0
    %2810 = vmatprep.subr.mxu0 0.0
    %2811 = vmatpush1.msra.mxu0 0.0
    %2812 = vmatprep.subr.mxu0 0.0
    %2813 = vmatpush1.msra.mxu0 0.0
    %2814 = vmatprep.subr.mxu0 0.0
    %2815 = vmatpush1.msra.mxu0 0.0
    %2816 = vmatprep.subr.mxu0 0.0
    %2817 = vmatpush1.msra.mxu0 0.0
    %2818 = vmatprep.subr.mxu0 0.0
    %2819 = vmatpush1.msra.mxu0 0.0
    %2820 = vmatprep.subr.mxu0 0.0
    %2821 = vmatpush1.msra.mxu0 0.0
    %2822 = vmatprep.subr.mxu0 0.0
    %2823 = vmatpush1.msra.mxu0 0.0
    %2824 = vmatprep.subr.mxu0 0.0
    %2825 = vmatpush1.msra.mxu0 0.0
    %2826 = vmatprep.subr.mxu0 0.0
    %2827 = vmatpush1.msra.mxu0 0.0
    %2828 = vmatprep.subr.mxu0 0.0
    %2829 = vmatpush1.msra.mxu0 0.0
    %2830 = vmatprep.subr.mxu0 0.0
    %2831 = vmatpush1.msra.mxu0 0.0
    %2832 = vmatprep.subr.mxu0 0.0
    %2833 = vmatpush1.msra.mxu0 0.0
    %2834 = vmatprep.subr.mxu0 0.0
    %2835 = vmatpush1.msra.mxu0 0.0
    %2836 = vmatprep.subr.mxu0 0.0
    %2837 = vmatpush1.msra.mxu0 0.0
    %2838 = vmatprep.subr.mxu0 0.0
    %2839 = vmatpush1.msra.mxu0 0.0
    %2840 = vmatprep.subr.mxu0 0.0
    %2841 = vmatpush1.msra.mxu0 0.0
    %2842 = vmatprep.subr.mxu0 0.0
    %2843 = vmatpush1.msra.mxu0 0.0
    %2844 = vmatprep.subr.mxu0 0.0
    %2845 = vmatpush1.msra.mxu0 0.0
    %2846 = vmatprep.subr.mxu0 0.0
    %2847 = vmatpush1.msra.mxu0 0.0
    %2848 = vmatprep.subr.mxu0 0.0
    %2849 = vmatpush1.msra.mxu0 0.0
    %2850 = vmatprep.subr.mxu0 0.0
    %2851 = vmatpush1.msra.mxu0 0.0
    %2852 = vmatprep.mubr.f32.mxu0 0.0
    %2853 = vmatmul.mubr.f32.gmra.mrb[0].mxu0 %v2786
    %v2854 = vpop.f32.mrb[0].mxu0
    %v2855 = vadd.f32 0.0, %v2854
    %v2856 = vpop.f32.mrb[0].mxu0
    %2857 = vdwg.mxu0
    %v2859 = vsel %vm2198, %v2698, 0
    %2861 = vmatprep.subr.mxu0 0.0
    %2862 = vmatpush1.msra.mxu0 %v262
    %2863 = vmatprep.subr.mxu0 0.0
    %2864 = vmatpush1.msra.mxu0 %v267
    %2865 = vmatprep.subr.mxu0 0.0
    %2866 = vmatpush1.msra.mxu0 0.0
    %2867 = vmatprep.subr.mxu0 0.0
    %2868 = vmatpush1.msra.mxu0 0.0
    %2869 = vmatprep.subr.mxu0 0.0
    %2870 = vmatpush1.msra.mxu0 0.0
    %2871 = vmatprep.subr.mxu0 0.0
    %2872 = vmatpush1.msra.mxu0 0.0
    %2873 = vmatprep.subr.mxu0 0.0
    %2874 = vmatpush1.msra.mxu0 0.0
    %2875 = vmatprep.subr.mxu0 0.0
    %2876 = vmatpush1.msra.mxu0 0.0
    %2877 = vmatprep.subr.mxu0 0.0
    %2878 = vmatpush1.msra.mxu0 0.0
    %2879 = vmatprep.subr.mxu0 0.0
    %2880 = vmatpush1.msra.mxu0 0.0
    %2881 = vmatprep.subr.mxu0 0.0
    %2882 = vmatpush1.msra.mxu0 0.0
    %2883 = vmatprep.subr.mxu0 0.0
    %2884 = vmatpush1.msra.mxu0 0.0
    %2885 = vmatprep.subr.mxu0 0.0
    %2886 = vmatpush1.msra.mxu0 0.0
    %2887 = vmatprep.subr.mxu0 0.0
    %2888 = vmatpush1.msra.mxu0 0.0
    %2889 = vmatprep.subr.mxu0 0.0
    %2890 = vmatpush1.msra.mxu0 0.0
    %2891 = vmatprep.subr.mxu0 0.0
    %2892 = vmatpush1.msra.mxu0 0.0
    %2893 = vmatprep.subr.mxu0 0.0
    %2894 = vmatpush1.msra.mxu0 0.0
    %2895 = vmatprep.subr.mxu0 0.0
    %2896 = vmatpush1.msra.mxu0 0.0
    %2897 = vmatprep.subr.mxu0 0.0
    %2898 = vmatpush1.msra.mxu0 0.0
    %2899 = vmatprep.subr.mxu0 0.0
    %2900 = vmatpush1.msra.mxu0 0.0
    %2901 = vmatprep.subr.mxu0 0.0
    %2902 = vmatpush1.msra.mxu0 0.0
    %2903 = vmatprep.subr.mxu0 0.0
    %2904 = vmatpush1.msra.mxu0 0.0
    %2905 = vmatprep.subr.mxu0 0.0
    %2906 = vmatpush1.msra.mxu0 0.0
    %2907 = vmatprep.subr.mxu0 0.0
    %2908 = vmatpush1.msra.mxu0 0.0
    %2909 = vmatprep.subr.mxu0 0.0
    %2910 = vmatpush1.msra.mxu0 0.0
    %2911 = vmatprep.subr.mxu0 0.0
    %2912 = vmatpush1.msra.mxu0 0.0
    %2913 = vmatprep.subr.mxu0 0.0
    %2914 = vmatpush1.msra.mxu0 0.0
    %2915 = vmatprep.subr.mxu0 0.0
    %2916 = vmatpush1.msra.mxu0 0.0
    %2917 = vmatprep.subr.mxu0 0.0
    %2918 = vmatpush1.msra.mxu0 0.0
    %2919 = vmatprep.subr.mxu0 0.0
    %2920 = vmatpush1.msra.mxu0 0.0
    %2921 = vmatprep.subr.mxu0 0.0
    %2922 = vmatpush1.msra.mxu0 0.0
    %2923 = vmatprep.subr.mxu0 0.0
    %2924 = vmatpush1.msra.mxu0 0.0
    %2925 = vmatprep.mubr.f32.mxu0 0.0
    %2926 = vmatmul.mubr.f32.gmra.mrb[0].mxu0 %v2859
    %v2927 = vpop.f32.mrb[0].mxu0
    %v2928 = vadd.f32 0.0, %v2927
    %v2929 = vpop.f32.mrb[0].mxu0
    %2930 = vdwg.mxu0
    %v2932 = vsel %vm2198, %v2699, 0
    %2934 = vmatprep.subr.mxu0 0.0
    %2935 = vmatpush1.msra.mxu0 %v272
    %2936 = vmatprep.subr.mxu0 0.0
    %2937 = vmatpush1.msra.mxu0 %v277
    %2938 = vmatprep.subr.mxu0 0.0
    %2939 = vmatpush1.msra.mxu0 0.0
    %2940 = vmatprep.subr.mxu0 0.0
    %2941 = vmatpush1.msra.mxu0 0.0
    %2942 = vmatprep.subr.mxu0 0.0
    %2943 = vmatpush1.msra.mxu0 0.0
    %2944 = vmatprep.subr.mxu0 0.0
    %2945 = vmatpush1.msra.mxu0 0.0
    %2946 = vmatprep.subr.mxu0 0.0
    %2947 = vmatpush1.msra.mxu0 0.0
    %2948 = vmatprep.subr.mxu0 0.0
    %2949 = vmatpush1.msra.mxu0 0.0
    %2950 = vmatprep.subr.mxu0 0.0
    %2951 = vmatpush1.msra.mxu0 0.0
    %2952 = vmatprep.subr.mxu0 0.0
    %2953 = vmatpush1.msra.mxu0 0.0
    %2954 = vmatprep.subr.mxu0 0.0
    %2955 = vmatpush1.msra.mxu0 0.0
    %2956 = vmatprep.subr.mxu0 0.0
    %2957 = vmatpush1.msra.mxu0 0.0
    %2958 = vmatprep.subr.mxu0 0.0
    %2959 = vmatpush1.msra.mxu0 0.0
    %2960 = vmatprep.subr.mxu0 0.0
    %2961 = vmatpush1.msra.mxu0 0.0
    %2962 = vmatprep.subr.mxu0 0.0
    %2963 = vmatpush1.msra.mxu0 0.0
    %2964 = vmatprep.subr.mxu0 0.0
    %2965 = vmatpush1.msra.mxu0 0.0
    %2966 = vmatprep.subr.mxu0 0.0
    %2967 = vmatpush1.msra.mxu0 0.0
    %2968 = vmatprep.subr.mxu0 0.0
    %2969 = vmatpush1.msra.mxu0 0.0
    %2970 = vmatprep.subr.mxu0 0.0
    %2971 = vmatpush1.msra.mxu0 0.0
    %2972 = vmatprep.subr.mxu0 0.0
    %2973 = vmatpush1.msra.mxu0 0.0
    %2974 = vmatprep.subr.mxu0 0.0
    %2975 = vmatpush1.msra.mxu0 0.0
    %2976 = vmatprep.subr.mxu0 0.0
    %2977 = vmatpush1.msra.mxu0 0.0
    %2978 = vmatprep.subr.mxu0 0.0
    %2979 = vmatpush1.msra.mxu0 0.0
    %2980 = vmatprep.subr.mxu0 0.0
    %2981 = vmatpush1.msra.mxu0 0.0
    %2982 = vmatprep.subr.mxu0 0.0
    %2983 = vmatpush1.msra.mxu0 0.0
    %2984 = vmatprep.subr.mxu0 0.0
    %2985 = vmatpush1.msra.mxu0 0.0
    %2986 = vmatprep.subr.mxu0 0.0
    %2987 = vmatpush1.msra.mxu0 0.0
    %2988 = vmatprep.subr.mxu0 0.0
    %2989 = vmatpush1.msra.mxu0 0.0
    %2990 = vmatprep.subr.mxu0 0.0
    %2991 = vmatpush1.msra.mxu0 0.0
    %2992 = vmatprep.subr.mxu0 0.0
    %2993 = vmatpush1.msra.mxu0 0.0
    %2994 = vmatprep.subr.mxu0 0.0
    %2995 = vmatpush1.msra.mxu0 0.0
    %2996 = vmatprep.subr.mxu0 0.0
    %2997 = vmatpush1.msra.mxu0 0.0
    %2998 = vmatprep.mubr.f32.mxu0 0.0
    %2999 = vmatmul.mubr.f32.gmra.mrb[0].mxu0 %v2932
    %v3000 = vpop.f32.mrb[0].mxu0
    %v3001 = vadd.f32 0.0, %v3000
    %v3002 = vpop.f32.mrb[0].mxu0
    %3003 = vdwg.mxu0
    %v3005 = vsel %vm2198, %v2700, 0
    %3007 = vmatprep.subr.mxu0 0.0
    %3008 = vmatpush1.msra.mxu0 %v282
    %3009 = vmatprep.subr.mxu0 0.0
    %3010 = vmatpush1.msra.mxu0 %v287
    %3011 = vmatprep.subr.mxu0 0.0
    %3012 = vmatpush1.msra.mxu0 0.0
    %3013 = vmatprep.subr.mxu0 0.0
    %3014 = vmatpush1.msra.mxu0 0.0
    %3015 = vmatprep.subr.mxu0 0.0
    %3016 = vmatpush1.msra.mxu0 0.0
    %3017 = vmatprep.subr.mxu0 0.0
    %3018 = vmatpush1.msra.mxu0 0.0
    %3019 = vmatprep.subr.mxu0 0.0
    %3020 = vmatpush1.msra.mxu0 0.0
    %3021 = vmatprep.subr.mxu0 0.0
    %3022 = vmatpush1.msra.mxu0 0.0
    %3023 = vmatprep.subr.mxu0 0.0
    %3024 = vmatpush1.msra.mxu0 0.0
    %3025 = vmatprep.subr.mxu0 0.0
    %3026 = vmatpush1.msra.mxu0 0.0
    %3027 = vmatprep.subr.mxu0 0.0
    %3028 = vmatpush1.msra.mxu0 0.0
    %3029 = vmatprep.subr.mxu0 0.0
    %3030 = vmatpush1.msra.mxu0 0.0
    %3031 = vmatprep.subr.mxu0 0.0
    %3032 = vmatpush1.msra.mxu0 0.0
    %3033 = vmatprep.subr.mxu0 0.0
    %3034 = vmatpush1.msra.mxu0 0.0
    %3035 = vmatprep.subr.mxu0 0.0
    %3036 = vmatpush1.msra.mxu0 0.0
    %3037 = vmatprep.subr.mxu0 0.0
    %3038 = vmatpush1.msra.mxu0 0.0
    %3039 = vmatprep.subr.mxu0 0.0
    %3040 = vmatpush1.msra.mxu0 0.0
    %3041 = vmatprep.subr.mxu0 0.0
    %3042 = vmatpush1.msra.mxu0 0.0
    %3043 = vmatprep.subr.mxu0 0.0
    %3044 = vmatpush1.msra.mxu0 0.0
    %3045 = vmatprep.subr.mxu0 0.0
    %3046 = vmatpush1.msra.mxu0 0.0
    %3047 = vmatprep.subr.mxu0 0.0
    %3048 = vmatpush1.msra.mxu0 0.0
    %3049 = vmatprep.subr.mxu0 0.0
    %3050 = vmatpush1.msra.mxu0 0.0
    %3051 = vmatprep.subr.mxu0 0.0
    %3052 = vmatpush1.msra.mxu0 0.0
    %3053 = vmatprep.subr.mxu0 0.0
    %3054 = vmatpush1.msra.mxu0 0.0
    %3055 = vmatprep.subr.mxu0 0.0
    %3056 = vmatpush1.msra.mxu0 0.0
    %3057 = vmatprep.subr.mxu0 0.0
    %3058 = vmatpush1.msra.mxu0 0.0
    %3059 = vmatprep.subr.mxu0 0.0
    %3060 = vmatpush1.msra.mxu0 0.0
    %3061 = vmatprep.subr.mxu0 0.0
    %3062 = vmatpush1.msra.mxu0 0.0
    %3063 = vmatprep.subr.mxu0 0.0
    %3064 = vmatpush1.msra.mxu0 0.0
    %3065 = vmatprep.subr.mxu0 0.0
    %3066 = vmatpush1.msra.mxu0 0.0
    %3067 = vmatprep.subr.mxu0 0.0
    %3068 = vmatpush1.msra.mxu0 0.0
    %3069 = vmatprep.subr.mxu0 0.0
    %3070 = vmatpush1.msra.mxu0 0.0
    %3071 = vmatprep.mubr.f32.mxu0 0.0
    %3072 = vmatmul.mubr.f32.gmra.mrb[0].mxu0 %v3005
    %v3073 = vpop.f32.mrb[0].mxu0
    %v3074 = vadd.f32 0.0, %v3073
    %v3075 = vpop.f32.mrb[0].mxu0
    %3076 = vdwg.mxu0
    %v3078 = vsel %vm2198, %v2701, 0
    %3080 = vmatprep.subr.mxu0 0.0
    %3081 = vmatpush1.msra.mxu0 %v292
    %3082 = vmatprep.subr.mxu0 0.0
    %3083 = vmatpush1.msra.mxu0 %v297
    %3084 = vmatprep.subr.mxu0 0.0
    %3085 = vmatpush1.msra.mxu0 0.0
    %3086 = vmatprep.subr.mxu0 0.0
    %3087 = vmatpush1.msra.mxu0 0.0
    %3088 = vmatprep.subr.mxu0 0.0
    %3089 = vmatpush1.msra.mxu0 0.0
    %3090 = vmatprep.subr.mxu0 0.0
    %3091 = vmatpush1.msra.mxu0 0.0
    %3092 = vmatprep.subr.mxu0 0.0
    %3093 = vmatpush1.msra.mxu0 0.0
    %3094 = vmatprep.subr.mxu0 0.0
    %3095 = vmatpush1.msra.mxu0 0.0
    %3096 = vmatprep.subr.mxu0 0.0
    %3097 = vmatpush1.msra.mxu0 0.0
    %3098 = vmatprep.subr.mxu0 0.0
    %3099 = vmatpush1.msra.mxu0 0.0
    %3100 = vmatprep.subr.mxu0 0.0
    %3101 = vmatpush1.msra.mxu0 0.0
    %3102 = vmatprep.subr.mxu0 0.0
    %3103 = vmatpush1.msra.mxu0 0.0
    %3104 = vmatprep.subr.mxu0 0.0
    %3105 = vmatpush1.msra.mxu0 0.0
    %3106 = vmatprep.subr.mxu0 0.0
    %3107 = vmatpush1.msra.mxu0 0.0
    %3108 = vmatprep.subr.mxu0 0.0
    %3109 = vmatpush1.msra.mxu0 0.0
    %3110 = vmatprep.subr.mxu0 0.0
    %3111 = vmatpush1.msra.mxu0 0.0
    %3112 = vmatprep.subr.mxu0 0.0
    %3113 = vmatpush1.msra.mxu0 0.0
    %3114 = vmatprep.subr.mxu0 0.0
    %3115 = vmatpush1.msra.mxu0 0.0
    %3116 = vmatprep.subr.mxu0 0.0
    %3117 = vmatpush1.msra.mxu0 0.0
    %3118 = vmatprep.subr.mxu0 0.0
    %3119 = vmatpush1.msra.mxu0 0.0
    %3120 = vmatprep.subr.mxu0 0.0
    %3121 = vmatpush1.msra.mxu0 0.0
    %3122 = vmatprep.subr.mxu0 0.0
    %3123 = vmatpush1.msra.mxu0 0.0
    %3124 = vmatprep.subr.mxu0 0.0
    %3125 = vmatpush1.msra.mxu0 0.0
    %3126 = vmatprep.subr.mxu0 0.0
    %3127 = vmatpush1.msra.mxu0 0.0
    %3128 = vmatprep.subr.mxu0 0.0
    %3129 = vmatpush1.msra.mxu0 0.0
    %3130 = vmatprep.subr.mxu0 0.0
    %3131 = vmatpush1.msra.mxu0 0.0
    %3132 = vmatprep.subr.mxu0 0.0
    %3133 = vmatpush1.msra.mxu0 0.0
    %3134 = vmatprep.subr.mxu0 0.0
    %3135 = vmatpush1.msra.mxu0 0.0
    %3136 = vmatprep.subr.mxu0 0.0
    %3137 = vmatpush1.msra.mxu0 0.0
    %3138 = vmatprep.subr.mxu0 0.0
    %3139 = vmatpush1.msra.mxu0 0.0
    %3140 = vmatprep.subr.mxu0 0.0
    %3141 = vmatpush1.msra.mxu0 0.0
    %3142 = vmatprep.subr.mxu0 0.0
    %3143 = vmatpush1.msra.mxu0 0.0
    %3144 = vmatprep.mubr.f32.mxu0 0.0
    %3145 = vmatmul.mubr.f32.gmra.mrb[0].mxu0 %v3078
    %v3146 = vpop.f32.mrb[0].mxu0
    %v3147 = vadd.f32 0.0, %v3146
    %v3148 = vpop.f32.mrb[0].mxu0
    %3149 = vdwg.mxu0
    %v3151 = vsel %vm2198, %v2702, 0
    %3153 = vmatprep.subr.mxu0 0.0
    %3154 = vmatpush1.msra.mxu0 %v302
    %3155 = vmatprep.subr.mxu0 0.0
    %3156 = vmatpush1.msra.mxu0 %v307
    %3157 = vmatprep.subr.mxu0 0.0
    %3158 = vmatpush1.msra.mxu0 0.0
    %3159 = vmatprep.subr.mxu0 0.0
    %3160 = vmatpush1.msra.mxu0 0.0
    %3161 = vmatprep.subr.mxu0 0.0
    %3162 = vmatpush1.msra.mxu0 0.0
    %3163 = vmatprep.subr.mxu0 0.0
    %3164 = vmatpush1.msra.mxu0 0.0
    %3165 = vmatprep.subr.mxu0 0.0
    %3166 = vmatpush1.msra.mxu0 0.0
    %3167 = vmatprep.subr.mxu0 0.0
    %3168 = vmatpush1.msra.mxu0 0.0
    %3169 = vmatprep.subr.mxu0 0.0
    %3170 = vmatpush1.msra.mxu0 0.0
    %3171 = vmatprep.subr.mxu0 0.0
    %3172 = vmatpush1.msra.mxu0 0.0
    %3173 = vmatprep.subr.mxu0 0.0
    %3174 = vmatpush1.msra.mxu0 0.0
    %3175 = vmatprep.subr.mxu0 0.0
    %3176 = vmatpush1.msra.mxu0 0.0
    %3177 = vmatprep.subr.mxu0 0.0
    %3178 = vmatpush1.msra.mxu0 0.0
    %3179 = vmatprep.subr.mxu0 0.0
    %3180 = vmatpush1.msra.mxu0 0.0
    %3181 = vmatprep.subr.mxu0 0.0
    %3182 = vmatpush1.msra.mxu0 0.0
    %3183 = vmatprep.subr.mxu0 0.0
    %3184 = vmatpush1.msra.mxu0 0.0
    %3185 = vmatprep.subr.mxu0 0.0
    %3186 = vmatpush1.msra.mxu0 0.0
    %3187 = vmatprep.subr.mxu0 0.0
    %3188 = vmatpush1.msra.mxu0 0.0
    %3189 = vmatprep.subr.mxu0 0.0
    %3190 = vmatpush1.msra.mxu0 0.0
    %3191 = vmatprep.subr.mxu0 0.0
    %3192 = vmatpush1.msra.mxu0 0.0
    %3193 = vmatprep.subr.mxu0 0.0
    %3194 = vmatpush1.msra.mxu0 0.0
    %3195 = vmatprep.subr.mxu0 0.0
    %3196 = vmatpush1.msra.mxu0 0.0
    %3197 = vmatprep.subr.mxu0 0.0
    %3198 = vmatpush1.msra.mxu0 0.0
    %3199 = vmatprep.subr.mxu0 0.0
    %3200 = vmatpush1.msra.mxu0 0.0
    %3201 = vmatprep.subr.mxu0 0.0
    %3202 = vmatpush1.msra.mxu0 0.0
    %3203 = vmatprep.subr.mxu0 0.0
    %3204 = vmatpush1.msra.mxu0 0.0
    %3205 = vmatprep.subr.mxu0 0.0
    %3206 = vmatpush1.msra.mxu0 0.0
    %3207 = vmatprep.subr.mxu0 0.0
    %3208 = vmatpush1.msra.mxu0 0.0
    %3209 = vmatprep.subr.mxu0 0.0
    %3210 = vmatpush1.msra.mxu0 0.0
    %3211 = vmatprep.subr.mxu0 0.0
    %3212 = vmatpush1.msra.mxu0 0.0
    %3213 = vmatprep.subr.mxu0 0.0
    %3214 = vmatpush1.msra.mxu0 0.0
    %3215 = vmatprep.subr.mxu0 0.0
    %3216 = vmatpush1.msra.mxu0 0.0
    %3217 = vmatprep.mubr.f32.mxu0 0.0
    %3218 = vmatmul.mubr.f32.gmra.mrb[0].mxu0 %v3151
    %v3219 = vpop.f32.mrb[0].mxu0
    %v3220 = vadd.f32 0.0, %v3219
    %v3221 = vpop.f32.mrb[0].mxu0
    %3222 = vdwg.mxu0
    %v3224 = vsel %vm2198, %v2703, 0
    %3226 = vmatprep.subr.mxu0 0.0
    %3227 = vmatpush1.msra.mxu0 %v312
    %3228 = vmatprep.subr.mxu0 0.0
    %3229 = vmatpush1.msra.mxu0 %v317
    %3230 = vmatprep.subr.mxu0 0.0
    %3231 = vmatpush1.msra.mxu0 0.0
    %3232 = vmatprep.subr.mxu0 0.0
    %3233 = vmatpush1.msra.mxu0 0.0
    %3234 = vmatprep.subr.mxu0 0.0
    %3235 = vmatpush1.msra.mxu0 0.0
    %3236 = vmatprep.subr.mxu0 0.0
    %3237 = vmatpush1.msra.mxu0 0.0
    %3238 = vmatprep.subr.mxu0 0.0
    %3239 = vmatpush1.msra.mxu0 0.0
    %3240 = vmatprep.subr.mxu0 0.0
    %3241 = vmatpush1.msra.mxu0 0.0
    %3242 = vmatprep.subr.mxu0 0.0
    %3243 = vmatpush1.msra.mxu0 0.0
    %3244 = vmatprep.subr.mxu0 0.0
    %3245 = vmatpush1.msra.mxu0 0.0
    %3246 = vmatprep.subr.mxu0 0.0
    %3247 = vmatpush1.msra.mxu0 0.0
    %3248 = vmatprep.subr.mxu0 0.0
    %3249 = vmatpush1.msra.mxu0 0.0
    %3250 = vmatprep.subr.mxu0 0.0
    %3251 = vmatpush1.msra.mxu0 0.0
    %3252 = vmatprep.subr.mxu0 0.0
    %3253 = vmatpush1.msra.mxu0 0.0
    %3254 = vmatprep.subr.mxu0 0.0
    %3255 = vmatpush1.msra.mxu0 0.0
    %3256 = vmatprep.subr.mxu0 0.0
    %3257 = vmatpush1.msra.mxu0 0.0
    %3258 = vmatprep.subr.mxu0 0.0
    %3259 = vmatpush1.msra.mxu0 0.0
    %3260 = vmatprep.subr.mxu0 0.0
    %3261 = vmatpush1.msra.mxu0 0.0
    %3262 = vmatprep.subr.mxu0 0.0
    %3263 = vmatpush1.msra.mxu0 0.0
    %3264 = vmatprep.subr.mxu0 0.0
    %3265 = vmatpush1.msra.mxu0 0.0
    %3266 = vmatprep.subr.mxu0 0.0
    %3267 = vmatpush1.msra.mxu0 0.0
    %3268 = vmatprep.subr.mxu0 0.0
    %3269 = vmatpush1.msra.mxu0 0.0
    %3270 = vmatprep.subr.mxu0 0.0
    %3271 = vmatpush1.msra.mxu0 0.0
    %3272 = vmatprep.subr.mxu0 0.0
    %3273 = vmatpush1.msra.mxu0 0.0
    %3274 = vmatprep.subr.mxu0 0.0
    %3275 = vmatpush1.msra.mxu0 0.0
    %3276 = vmatprep.subr.mxu0 0.0
    %3277 = vmatpush1.msra.mxu0 0.0
    %3278 = vmatprep.subr.mxu0 0.0
    %3279 = vmatpush1.msra.mxu0 0.0
    %3280 = vmatprep.subr.mxu0 0.0
    %3281 = vmatpush1.msra.mxu0 0.0
    %3282 = vmatprep.subr.mxu0 0.0
    %3283 = vmatpush1.msra.mxu0 0.0
    %3284 = vmatprep.subr.mxu0 0.0
    %3285 = vmatpush1.msra.mxu0 0.0
    %3286 = vmatprep.subr.mxu0 0.0
    %3287 = vmatpush1.msra.mxu0 0.0
    %3288 = vmatprep.subr.mxu0 0.0
    %3289 = vmatpush1.msra.mxu0 0.0
    %3290 = vmatprep.mubr.f32.mxu0 0.0
    %3291 = vmatmul.mubr.f32.gmra.mrb[0].mxu0 %v3224
    %v3292 = vpop.f32.mrb[0].mxu0
    %v3293 = vadd.f32 0.0, %v3292
    %v3294 = vpop.f32.mrb[0].mxu0
    %3295 = vdwg.mxu0
    %v3297 = vsel %vm2198, %v2704, 0
    %3299 = vmatprep.subr.mxu0 0.0
    %3300 = vmatpush1.msra.mxu0 %v322
    %3301 = vmatprep.subr.mxu0 0.0
    %3302 = vmatpush1.msra.mxu0 %v327
    %3303 = vmatprep.subr.mxu0 0.0
    %3304 = vmatpush1.msra.mxu0 0.0
    %3305 = vmatprep.subr.mxu0 0.0
    %3306 = vmatpush1.msra.mxu0 0.0
    %3307 = vmatprep.subr.mxu0 0.0
    %3308 = vmatpush1.msra.mxu0 0.0
    %3309 = vmatprep.subr.mxu0 0.0
    %3310 = vmatpush1.msra.mxu0 0.0
    %3311 = vmatprep.subr.mxu0 0.0
    %3312 = vmatpush1.msra.mxu0 0.0
    %3313 = vmatprep.subr.mxu0 0.0
    %3314 = vmatpush1.msra.mxu0 0.0
    %3315 = vmatprep.subr.mxu0 0.0
    %3316 = vmatpush1.msra.mxu0 0.0
    %3317 = vmatprep.subr.mxu0 0.0
    %3318 = vmatpush1.msra.mxu0 0.0
    %3319 = vmatprep.subr.mxu0 0.0
    %3320 = vmatpush1.msra.mxu0 0.0
    %3321 = vmatprep.subr.mxu0 0.0
    %3322 = vmatpush1.msra.mxu0 0.0
    %3323 = vmatprep.subr.mxu0 0.0
    %3324 = vmatpush1.msra.mxu0 0.0
    %3325 = vmatprep.subr.mxu0 0.0
    %3326 = vmatpush1.msra.mxu0 0.0
    %3327 = vmatprep.subr.mxu0 0.0
    %3328 = vmatpush1.msra.mxu0 0.0
    %3329 = vmatprep.subr.mxu0 0.0
    %3330 = vmatpush1.msra.mxu0 0.0
    %3331 = vmatprep.subr.mxu0 0.0
    %3332 = vmatpush1.msra.mxu0 0.0
    %3333 = vmatprep.subr.mxu0 0.0
    %3334 = vmatpush1.msra.mxu0 0.0
    %3335 = vmatprep.subr.mxu0 0.0
    %3336 = vmatpush1.msra.mxu0 0.0
    %3337 = vmatprep.subr.mxu0 0.0
    %3338 = vmatpush1.msra.mxu0 0.0
    %3339 = vmatprep.subr.mxu0 0.0
    %3340 = vmatpush1.msra.mxu0 0.0
    %3341 = vmatprep.subr.mxu0 0.0
    %3342 = vmatpush1.msra.mxu0 0.0
    %3343 = vmatprep.subr.mxu0 0.0
    %3344 = vmatpush1.msra.mxu0 0.0
    %3345 = vmatprep.subr.mxu0 0.0
    %3346 = vmatpush1.msra.mxu0 0.0
    %3347 = vmatprep.subr.mxu0 0.0
    %3348 = vmatpush1.msra.mxu0 0.0
    %3349 = vmatprep.subr.mxu0 0.0
    %3350 = vmatpush1.msra.mxu0 0.0
    %3351 = vmatprep.subr.mxu0 0.0
    %3352 = vmatpush1.msra.mxu0 0.0
    %3353 = vmatprep.subr.mxu0 0.0
    %3354 = vmatpush1.msra.mxu0 0.0
    %3355 = vmatprep.subr.mxu0 0.0
    %3356 = vmatpush1.msra.mxu0 0.0
    %3357 = vmatprep.subr.mxu0 0.0
    %3358 = vmatpush1.msra.mxu0 0.0
    %3359 = vmatprep.subr.mxu0 0.0
    %3360 = vmatpush1.msra.mxu0 0.0
    %3361 = vmatprep.subr.mxu0 0.0
    %3362 = vmatpush1.msra.mxu0 0.0
    %3363 = vmatprep.mubr.f32.mxu0 0.0
    %3364 = vmatmul.mubr.f32.gmra.mrb[0].mxu0 %v3297
    %v3365 = vpop.f32.mrb[0].mxu0
    %v3366 = vadd.f32 0.0, %v3365
    %v3367 = vpop.f32.mrb[0].mxu0
    %3368 = vdwg.mxu0
    %v3370 = vsel %vm2198, %v2705, 0
    %3372 = vmatprep.subr.mxu0 0.0
    %3373 = vmatpush1.msra.mxu0 %v332
    %3374 = vmatprep.subr.mxu0 0.0
    %3375 = vmatpush1.msra.mxu0 %v337
    %3376 = vmatprep.subr.mxu0 0.0
    %3377 = vmatpush1.msra.mxu0 0.0
    %3378 = vmatprep.subr.mxu0 0.0
    %3379 = vmatpush1.msra.mxu0 0.0
    %3380 = vmatprep.subr.mxu0 0.0
    %3381 = vmatpush1.msra.mxu0 0.0
    %3382 = vmatprep.subr.mxu0 0.0
    %3383 = vmatpush1.msra.mxu0 0.0
    %3384 = vmatprep.subr.mxu0 0.0
    %3385 = vmatpush1.msra.mxu0 0.0
    %3386 = vmatprep.subr.mxu0 0.0
    %3387 = vmatpush1.msra.mxu0 0.0
    %3388 = vmatprep.subr.mxu0 0.0
    %3389 = vmatpush1.msra.mxu0 0.0
    %3390 = vmatprep.subr.mxu0 0.0
    %3391 = vmatpush1.msra.mxu0 0.0
    %3392 = vmatprep.subr.mxu0 0.0
    %3393 = vmatpush1.msra.mxu0 0.0
    %3394 = vmatprep.subr.mxu0 0.0
    %3395 = vmatpush1.msra.mxu0 0.0
    %3396 = vmatprep.subr.mxu0 0.0
    %3397 = vmatpush1.msra.mxu0 0.0
    %3398 = vmatprep.subr.mxu0 0.0
    %3399 = vmatpush1.msra.mxu0 0.0
    %3400 = vmatprep.subr.mxu0 0.0
    %3401 = vmatpush1.msra.mxu0 0.0
    %3402 = vmatprep.subr.mxu0 0.0
    %3403 = vmatpush1.msra.mxu0 0.0
    %3404 = vmatprep.subr.mxu0 0.0
    %3405 = vmatpush1.msra.mxu0 0.0
    %3406 = vmatprep.subr.mxu0 0.0
    %3407 = vmatpush1.msra.mxu0 0.0
    %3408 = vmatprep.subr.mxu0 0.0
    %3409 = vmatpush1.msra.mxu0 0.0
    %3410 = vmatprep.subr.mxu0 0.0
    %3411 = vmatpush1.msra.mxu0 0.0
    %3412 = vmatprep.subr.mxu0 0.0
    %3413 = vmatpush1.msra.mxu0 0.0
    %3414 = vmatprep.subr.mxu0 0.0
    %3415 = vmatpush1.msra.mxu0 0.0
    %3416 = vmatprep.subr.mxu0 0.0
    %3417 = vmatpush1.msra.mxu0 0.0
    %3418 = vmatprep.subr.mxu0 0.0
    %3419 = vmatpush1.msra.mxu0 0.0
    %3420 = vmatprep.subr.mxu0 0.0
    %3421 = vmatpush1.msra.mxu0 0.0
    %3422 = vmatprep.subr.mxu0 0.0
    %3423 = vmatpush1.msra.mxu0 0.0
    %3424 = vmatprep.subr.mxu0 0.0
    %3425 = vmatpush1.msra.mxu0 0.0
    %3426 = vmatprep.subr.mxu0 0.0
    %3427 = vmatpush1.msra.mxu0 0.0
    %3428 = vmatprep.subr.mxu0 0.0
    %3429 = vmatpush1.msra.mxu0 0.0
    %3430 = vmatprep.subr.mxu0 0.0
    %3431 = vmatpush1.msra.mxu0 0.0
    %3432 = vmatprep.subr.mxu0 0.0
    %3433 = vmatpush1.msra.mxu0 0.0
    %3434 = vmatprep.subr.mxu0 0.0
    %3435 = vmatpush1.msra.mxu0 0.0
    %3436 = vmatprep.mubr.f32.mxu0 0.0
    %3437 = vmatmul.mubr.f32.gmra.mrb[0].mxu0 %v3370
    %v3438 = vpop.f32.mrb[0].mxu0
    %v3439 = vadd.f32 0.0, %v3438
    %v3440 = vpop.f32.mrb[0].mxu0
    %3441 = vdwg.mxu0
    %v3443 = vsel %vm2198, %v2706, 0
    %3445 = vmatprep.subr.mxu0 0.0
    %3446 = vmatpush1.msra.mxu0 %v342
    %3447 = vmatprep.subr.mxu0 0.0
    %3448 = vmatpush1.msra.mxu0 %v347
    %3449 = vmatprep.subr.mxu0 0.0
    %3450 = vmatpush1.msra.mxu0 0.0
    %3451 = vmatprep.subr.mxu0 0.0
    %3452 = vmatpush1.msra.mxu0 0.0
    %3453 = vmatprep.subr.mxu0 0.0
    %3454 = vmatpush1.msra.mxu0 0.0
    %3455 = vmatprep.subr.mxu0 0.0
    %3456 = vmatpush1.msra.mxu0 0.0
    %3457 = vmatprep.subr.mxu0 0.0
    %3458 = vmatpush1.msra.mxu0 0.0
    %3459 = vmatprep.subr.mxu0 0.0
    %3460 = vmatpush1.msra.mxu0 0.0
    %3461 = vmatprep.subr.mxu0 0.0
    %3462 = vmatpush1.msra.mxu0 0.0
    %3463 = vmatprep.subr.mxu0 0.0
    %3464 = vmatpush1.msra.mxu0 0.0
    %3465 = vmatprep.subr.mxu0 0.0
    %3466 = vmatpush1.msra.mxu0 0.0
    %3467 = vmatprep.subr.mxu0 0.0
    %3468 = vmatpush1.msra.mxu0 0.0
    %3469 = vmatprep.subr.mxu0 0.0
    %3470 = vmatpush1.msra.mxu0 0.0
    %3471 = vmatprep.subr.mxu0 0.0
    %3472 = vmatpush1.msra.mxu0 0.0
    %3473 = vmatprep.subr.mxu0 0.0
    %3474 = vmatpush1.msra.mxu0 0.0
    %3475 = vmatprep.subr.mxu0 0.0
    %3476 = vmatpush1.msra.mxu0 0.0
    %3477 = vmatprep.subr.mxu0 0.0
    %3478 = vmatpush1.msra.mxu0 0.0
    %3479 = vmatprep.subr.mxu0 0.0
    %3480 = vmatpush1.msra.mxu0 0.0
    %3481 = vmatprep.subr.mxu0 0.0
    %3482 = vmatpush1.msra.mxu0 0.0
    %3483 = vmatprep.subr.mxu0 0.0
    %3484 = vmatpush1.msra.mxu0 0.0
    %3485 = vmatprep.subr.mxu0 0.0
    %3486 = vmatpush1.msra.mxu0 0.0
    %3487 = vmatprep.subr.mxu0 0.0
    %3488 = vmatpush1.msra.mxu0 0.0
    %3489 = vmatprep.subr.mxu0 0.0
    %3490 = vmatpush1.msra.mxu0 0.0
    %3491 = vmatprep.subr.mxu0 0.0
    %3492 = vmatpush1.msra.mxu0 0.0
    %3493 = vmatprep.subr.mxu0 0.0
    %3494 = vmatpush1.msra.mxu0 0.0
    %3495 = vmatprep.subr.mxu0 0.0
    %3496 = vmatpush1.msra.mxu0 0.0
    %3497 = vmatprep.subr.mxu0 0.0
    %3498 = vmatpush1.msra.mxu0 0.0
    %3499 = vmatprep.subr.mxu0 0.0
    %3500 = vmatpush1.msra.mxu0 0.0
    %3501 = vmatprep.subr.mxu0 0.0
    %3502 = vmatpush1.msra.mxu0 0.0
    %3503 = vmatprep.subr.mxu0 0.0
    %3504 = vmatpush1.msra.mxu0 0.0
    %3505 = vmatprep.subr.mxu0 0.0
    %3506 = vmatpush1.msra.mxu0 0.0
    %3507 = vmatprep.subr.mxu0 0.0
    %3508 = vmatpush1.msra.mxu0 0.0
    %3509 = vmatprep.mubr.f32.mxu0 0.0
    %3510 = vmatmul.mubr.f32.gmra.mrb[0].mxu0 %v3443
    %v3511 = vpop.f32.mrb[0].mxu0
    %v3512 = vadd.f32 0.0, %v3511
    %v3513 = vpop.f32.mrb[0].mxu0
    %3514 = vdwg.mxu0
    %v3516 = vsel %vm2198, %v2707, 0
    %3518 = vmatprep.subr.mxu0 0.0
    %3519 = vmatpush1.msra.mxu0 %v352
    %3520 = vmatprep.subr.mxu0 0.0
    %3521 = vmatpush1.msra.mxu0 %v357
    %3522 = vmatprep.subr.mxu0 0.0
    %3523 = vmatpush1.msra.mxu0 0.0
    %3524 = vmatprep.subr.mxu0 0.0
    %3525 = vmatpush1.msra.mxu0 0.0
    %3526 = vmatprep.subr.mxu0 0.0
    %3527 = vmatpush1.msra.mxu0 0.0
    %3528 = vmatprep.subr.mxu0 0.0
    %3529 = vmatpush1.msra.mxu0 0.0
    %3530 = vmatprep.subr.mxu0 0.0
    %3531 = vmatpush1.msra.mxu0 0.0
    %3532 = vmatprep.subr.mxu0 0.0
    %3533 = vmatpush1.msra.mxu0 0.0
    %3534 = vmatprep.subr.mxu0 0.0
    %3535 = vmatpush1.msra.mxu0 0.0
    %3536 = vmatprep.subr.mxu0 0.0
    %3537 = vmatpush1.msra.mxu0 0.0
    %3538 = vmatprep.subr.mxu0 0.0
    %3539 = vmatpush1.msra.mxu0 0.0
    %3540 = vmatprep.subr.mxu0 0.0
    %3541 = vmatpush1.msra.mxu0 0.0
    %3542 = vmatprep.subr.mxu0 0.0
    %3543 = vmatpush1.msra.mxu0 0.0
    %3544 = vmatprep.subr.mxu0 0.0
    %3545 = vmatpush1.msra.mxu0 0.0
    %3546 = vmatprep.subr.mxu0 0.0
    %3547 = vmatpush1.msra.mxu0 0.0
    %3548 = vmatprep.subr.mxu0 0.0
    %3549 = vmatpush1.msra.mxu0 0.0
    %3550 = vmatprep.subr.mxu0 0.0
    %3551 = vmatpush1.msra.mxu0 0.0
    %3552 = vmatprep.subr.mxu0 0.0
    %3553 = vmatpush1.msra.mxu0 0.0
    %3554 = vmatprep.subr.mxu0 0.0
    %3555 = vmatpush1.msra.mxu0 0.0
    %3556 = vmatprep.subr.mxu0 0.0
    %3557 = vmatpush1.msra.mxu0 0.0
    %3558 = vmatprep.subr.mxu0 0.0
    %3559 = vmatpush1.msra.mxu0 0.0
    %3560 = vmatprep.subr.mxu0 0.0
    %3561 = vmatpush1.msra.mxu0 0.0
    %3562 = vmatprep.subr.mxu0 0.0
    %3563 = vmatpush1.msra.mxu0 0.0
    %3564 = vmatprep.subr.mxu0 0.0
    %3565 = vmatpush1.msra.mxu0 0.0
    %3566 = vmatprep.subr.mxu0 0.0
    %3567 = vmatpush1.msra.mxu0 0.0
    %3568 = vmatprep.subr.mxu0 0.0
    %3569 = vmatpush1.msra.mxu0 0.0
    %3570 = vmatprep.subr.mxu0 0.0
    %3571 = vmatpush1.msra.mxu0 0.0
    %3572 = vmatprep.subr.mxu0 0.0
    %3573 = vmatpush1.msra.mxu0 0.0
    %3574 = vmatprep.subr.mxu0 0.0
    %3575 = vmatpush1.msra.mxu0 0.0
    %3576 = vmatprep.subr.mxu0 0.0
    %3577 = vmatpush1.msra.mxu0 0.0
    %3578 = vmatprep.subr.mxu0 0.0
    %3579 = vmatpush1.msra.mxu0 0.0
    %3580 = vmatprep.subr.mxu0 0.0
    %3581 = vmatpush1.msra.mxu0 0.0
    %3582 = vmatprep.mubr.f32.mxu0 0.0
    %3583 = vmatmul.mubr.f32.gmra.mrb[0].mxu0 %v3516
    %v3584 = vpop.f32.mrb[0].mxu0
    %v3585 = vadd.f32 0.0, %v3584
    %v3586 = vpop.f32.mrb[0].mxu0
    %3587 = vdwg.mxu0
    %v3589 = vsel %vm2198, %v2708, 0
    %3591 = vmatprep.subr.mxu0 0.0
    %3592 = vmatpush1.msra.mxu0 %v362
    %3593 = vmatprep.subr.mxu0 0.0
    %3594 = vmatpush1.msra.mxu0 %v367
    %3595 = vmatprep.subr.mxu0 0.0
    %3596 = vmatpush1.msra.mxu0 0.0
    %3597 = vmatprep.subr.mxu0 0.0
    %3598 = vmatpush1.msra.mxu0 0.0
    %3599 = vmatprep.subr.mxu0 0.0
    %3600 = vmatpush1.msra.mxu0 0.0
    %3601 = vmatprep.subr.mxu0 0.0
    %3602 = vmatpush1.msra.mxu0 0.0
    %3603 = vmatprep.subr.mxu0 0.0
    %3604 = vmatpush1.msra.mxu0 0.0
    %3605 = vmatprep.subr.mxu0 0.0
    %3606 = vmatpush1.msra.mxu0 0.0
    %3607 = vmatprep.subr.mxu0 0.0
    %3608 = vmatpush1.msra.mxu0 0.0
    %3609 = vmatprep.subr.mxu0 0.0
    %3610 = vmatpush1.msra.mxu0 0.0
    %3611 = vmatprep.subr.mxu0 0.0
    %3612 = vmatpush1.msra.mxu0 0.0
    %3613 = vmatprep.subr.mxu0 0.0
    %3614 = vmatpush1.msra.mxu0 0.0
    %3615 = vmatprep.subr.mxu0 0.0
    %3616 = vmatpush1.msra.mxu0 0.0
    %3617 = vmatprep.subr.mxu0 0.0
    %3618 = vmatpush1.msra.mxu0 0.0
    %3619 = vmatprep.subr.mxu0 0.0
    %3620 = vmatpush1.msra.mxu0 0.0
    %3621 = vmatprep.subr.mxu0 0.0
    %3622 = vmatpush1.msra.mxu0 0.0
    %3623 = vmatprep.subr.mxu0 0.0
    %3624 = vmatpush1.msra.mxu0 0.0
    %3625 = vmatprep.subr.mxu0 0.0
    %3626 = vmatpush1.msra.mxu0 0.0
    %3627 = vmatprep.subr.mxu0 0.0
    %3628 = vmatpush1.msra.mxu0 0.0
    %3629 = vmatprep.subr.mxu0 0.0
    %3630 = vmatpush1.msra.mxu0 0.0
    %3631 = vmatprep.subr.mxu0 0.0
    %3632 = vmatpush1.msra.mxu0 0.0
    %3633 = vmatprep.subr.mxu0 0.0
    %3634 = vmatpush1.msra.mxu0 0.0
    %3635 = vmatprep.subr.mxu0 0.0
    %3636 = vmatpush1.msra.mxu0 0.0
    %3637 = vmatprep.subr.mxu0 0.0
    %3638 = vmatpush1.msra.mxu0 0.0
    %3639 = vmatprep.subr.mxu0 0.0
    %3640 = vmatpush1.msra.mxu0 0.0
    %3641 = vmatprep.subr.mxu0 0.0
    %3642 = vmatpush1.msra.mxu0 0.0
    %3643 = vmatprep.subr.mxu0 0.0
    %3644 = vmatpush1.msra.mxu0 0.0
    %3645 = vmatprep.subr.mxu0 0.0
    %3646 = vmatpush1.msra.mxu0 0.0
    %3647 = vmatprep.subr.mxu0 0.0
    %3648 = vmatpush1.msra.mxu0 0.0
    %3649 = vmatprep.subr.mxu0 0.0
    %3650 = vmatpush1.msra.mxu0 0.0
    %3651 = vmatprep.subr.mxu0 0.0
    %3652 = vmatpush1.msra.mxu0 0.0
    %3653 = vmatprep.subr.mxu0 0.0
    %3654 = vmatpush1.msra.mxu0 0.0
    %3655 = vmatprep.mubr.f32.mxu0 0.0
    %3656 = vmatmul.mubr.f32.gmra.mrb[0].mxu0 %v3589
    %v3657 = vpop.f32.mrb[0].mxu0
    %v3658 = vadd.f32 0.0, %v3657
    %v3659 = vpop.f32.mrb[0].mxu0
    %3660 = vdwg.mxu0
    %v3662 = vsel %vm2198, %v2709, 0
    %3664 = vmatprep.subr.mxu0 0.0
    %3665 = vmatpush1.msra.mxu0 %v372
    %3666 = vmatprep.subr.mxu0 0.0
    %3667 = vmatpush1.msra.mxu0 %v377
    %3668 = vmatprep.subr.mxu0 0.0
    %3669 = vmatpush1.msra.mxu0 0.0
    %3670 = vmatprep.subr.mxu0 0.0
    %3671 = vmatpush1.msra.mxu0 0.0
    %3672 = vmatprep.subr.mxu0 0.0
    %3673 = vmatpush1.msra.mxu0 0.0
    %3674 = vmatprep.subr.mxu0 0.0
    %3675 = vmatpush1.msra.mxu0 0.0
    %3676 = vmatprep.subr.mxu0 0.0
    %3677 = vmatpush1.msra.mxu0 0.0
    %3678 = vmatprep.subr.mxu0 0.0
    %3679 = vmatpush1.msra.mxu0 0.0
    %3680 = vmatprep.subr.mxu0 0.0
    %3681 = vmatpush1.msra.mxu0 0.0
    %3682 = vmatprep.subr.mxu0 0.0
    %3683 = vmatpush1.msra.mxu0 0.0
    %3684 = vmatprep.subr.mxu0 0.0
    %3685 = vmatpush1.msra.mxu0 0.0
    %3686 = vmatprep.subr.mxu0 0.0
    %3687 = vmatpush1.msra.mxu0 0.0
    %3688 = vmatprep.subr.mxu0 0.0
    %3689 = vmatpush1.msra.mxu0 0.0
    %3690 = vmatprep.subr.mxu0 0.0
    %3691 = vmatpush1.msra.mxu0 0.0
    %3692 = vmatprep.subr.mxu0 0.0
    %3693 = vmatpush1.msra.mxu0 0.0
    %3694 = vmatprep.subr.mxu0 0.0
    %3695 = vmatpush1.msra.mxu0 0.0
    %3696 = vmatprep.subr.mxu0 0.0
    %3697 = vmatpush1.msra.mxu0 0.0
    %3698 = vmatprep.subr.mxu0 0.0
    %3699 = vmatpush1.msra.mxu0 0.0
    %3700 = vmatprep.subr.mxu0 0.0
    %3701 = vmatpush1.msra.mxu0 0.0
    %3702 = vmatprep.subr.mxu0 0.0
    %3703 = vmatpush1.msra.mxu0 0.0
    %3704 = vmatprep.subr.mxu0 0.0
    %3705 = vmatpush1.msra.mxu0 0.0
    %3706 = vmatprep.subr.mxu0 0.0
    %3707 = vmatpush1.msra.mxu0 0.0
    %3708 = vmatprep.subr.mxu0 0.0
    %3709 = vmatpush1.msra.mxu0 0.0
    %3710 = vmatprep.subr.mxu0 0.0
    %3711 = vmatpush1.msra.mxu0 0.0
    %3712 = vmatprep.subr.mxu0 0.0
    %3713 = vmatpush1.msra.mxu0 0.0
    %3714 = vmatprep.subr.mxu0 0.0
    %3715 = vmatpush1.msra.mxu0 0.0
    %3716 = vmatprep.subr.mxu0 0.0
    %3717 = vmatpush1.msra.mxu0 0.0
    %3718 = vmatprep.subr.mxu0 0.0
    %3719 = vmatpush1.msra.mxu0 0.0
    %3720 = vmatprep.subr.mxu0 0.0
    %3721 = vmatpush1.msra.mxu0 0.0
    %3722 = vmatprep.subr.mxu0 0.0
    %3723 = vmatpush1.msra.mxu0 0.0
    %3724 = vmatprep.subr.mxu0 0.0
    %3725 = vmatpush1.msra.mxu0 0.0
    %3726 = vmatprep.subr.mxu0 0.0
    %3727 = vmatpush1.msra.mxu0 0.0
    %3728 = vmatprep.mubr.f32.mxu0 0.0
    %3729 = vmatmul.mubr.f32.gmra.mrb[0].mxu0 %v3662
    %v3730 = vpop.f32.mrb[0].mxu0
    %v3731 = vadd.f32 0.0, %v3730
    %v3732 = vpop.f32.mrb[0].mxu0
    %3733 = vdwg.mxu0
    %v3735 = vsel %vm2198, %v2710, 0
    %3737 = vmatprep.subr.mxu0 0.0
    %3738 = vmatpush1.msra.mxu0 %v382
    %3739 = vmatprep.subr.mxu0 0.0
    %3740 = vmatpush1.msra.mxu0 %v387
    %3741 = vmatprep.subr.mxu0 0.0
    %3742 = vmatpush1.msra.mxu0 0.0
    %3743 = vmatprep.subr.mxu0 0.0
    %3744 = vmatpush1.msra.mxu0 0.0
    %3745 = vmatprep.subr.mxu0 0.0
    %3746 = vmatpush1.msra.mxu0 0.0
    %3747 = vmatprep.subr.mxu0 0.0
    %3748 = vmatpush1.msra.mxu0 0.0
    %3749 = vmatprep.subr.mxu0 0.0
    %3750 = vmatpush1.msra.mxu0 0.0
    %3751 = vmatprep.subr.mxu0 0.0
    %3752 = vmatpush1.msra.mxu0 0.0
    %3753 = vmatprep.subr.mxu0 0.0
    %3754 = vmatpush1.msra.mxu0 0.0
    %3755 = vmatprep.subr.mxu0 0.0
    %3756 = vmatpush1.msra.mxu0 0.0
    %3757 = vmatprep.subr.mxu0 0.0
    %3758 = vmatpush1.msra.mxu0 0.0
    %3759 = vmatprep.subr.mxu0 0.0
    %3760 = vmatpush1.msra.mxu0 0.0
    %3761 = vmatprep.subr.mxu0 0.0
    %3762 = vmatpush1.msra.mxu0 0.0
    %3763 = vmatprep.subr.mxu0 0.0
    %3764 = vmatpush1.msra.mxu0 0.0
    %3765 = vmatprep.subr.mxu0 0.0
    %3766 = vmatpush1.msra.mxu0 0.0
    %3767 = vmatprep.subr.mxu0 0.0
    %3768 = vmatpush1.msra.mxu0 0.0
    %3769 = vmatprep.subr.mxu0 0.0
    %3770 = vmatpush1.msra.mxu0 0.0
    %3771 = vmatprep.subr.mxu0 0.0
    %3772 = vmatpush1.msra.mxu0 0.0
    %3773 = vmatprep.subr.mxu0 0.0
    %3774 = vmatpush1.msra.mxu0 0.0
    %3775 = vmatprep.subr.mxu0 0.0
    %3776 = vmatpush1.msra.mxu0 0.0
    %3777 = vmatprep.subr.mxu0 0.0
    %3778 = vmatpush1.msra.mxu0 0.0
    %3779 = vmatprep.subr.mxu0 0.0
    %3780 = vmatpush1.msra.mxu0 0.0
    %3781 = vmatprep.subr.mxu0 0.0
    %3782 = vmatpush1.msra.mxu0 0.0
    %3783 = vmatprep.subr.mxu0 0.0
    %3784 = vmatpush1.msra.mxu0 0.0
    %3785 = vmatprep.subr.mxu0 0.0
    %3786 = vmatpush1.msra.mxu0 0.0
    %3787 = vmatprep.subr.mxu0 0.0
    %3788 = vmatpush1.msra.mxu0 0.0
    %3789 = vmatprep.subr.mxu0 0.0
    %3790 = vmatpush1.msra.mxu0 0.0
    %3791 = vmatprep.subr.mxu0 0.0
    %3792 = vmatpush1.msra.mxu0 0.0
    %3793 = vmatprep.subr.mxu0 0.0
    %3794 = vmatpush1.msra.mxu0 0.0
    %3795 = vmatprep.subr.mxu0 0.0
    %3796 = vmatpush1.msra.mxu0 0.0
    %3797 = vmatprep.subr.mxu0 0.0
    %3798 = vmatpush1.msra.mxu0 0.0
    %3799 = vmatprep.subr.mxu0 0.0
    %3800 = vmatpush1.msra.mxu0 0.0
    %3801 = vmatprep.mubr.f32.mxu0 0.0
    %3802 = vmatmul.mubr.f32.gmra.mrb[0].mxu0 %v3735
    %v3803 = vpop.f32.mrb[0].mxu0
    %v3804 = vadd.f32 0.0, %v3803
    %v3805 = vpop.f32.mrb[0].mxu0
    %3806 = vdwg.mxu0
    %v3808 = vsel %vm2198, %v2711, 0
    %3810 = vmatprep.subr.mxu0 0.0
    %3811 = vmatpush1.msra.mxu0 %v392
    %3812 = vmatprep.subr.mxu0 0.0
    %3813 = vmatpush1.msra.mxu0 %v397
    %3814 = vmatprep.subr.mxu0 0.0
    %3815 = vmatpush1.msra.mxu0 0.0
    %3816 = vmatprep.subr.mxu0 0.0
    %3817 = vmatpush1.msra.mxu0 0.0
    %3818 = vmatprep.subr.mxu0 0.0
    %3819 = vmatpush1.msra.mxu0 0.0
    %3820 = vmatprep.subr.mxu0 0.0
    %3821 = vmatpush1.msra.mxu0 0.0
    %3822 = vmatprep.subr.mxu0 0.0
    %3823 = vmatpush1.msra.mxu0 0.0
    %3824 = vmatprep.subr.mxu0 0.0
    %3825 = vmatpush1.msra.mxu0 0.0
    %3826 = vmatprep.subr.mxu0 0.0
    %3827 = vmatpush1.msra.mxu0 0.0
    %3828 = vmatprep.subr.mxu0 0.0
    %3829 = vmatpush1.msra.mxu0 0.0
    %3830 = vmatprep.subr.mxu0 0.0
    %3831 = vmatpush1.msra.mxu0 0.0
    %3832 = vmatprep.subr.mxu0 0.0
    %3833 = vmatpush1.msra.mxu0 0.0
    %3834 = vmatprep.subr.mxu0 0.0
    %3835 = vmatpush1.msra.mxu0 0.0
    %3836 = vmatprep.subr.mxu0 0.0
    %3837 = vmatpush1.msra.mxu0 0.0
    %3838 = vmatprep.subr.mxu0 0.0
    %3839 = vmatpush1.msra.mxu0 0.0
    %3840 = vmatprep.subr.mxu0 0.0
    %3841 = vmatpush1.msra.mxu0 0.0
    %3842 = vmatprep.subr.mxu0 0.0
    %3843 = vmatpush1.msra.mxu0 0.0
    %3844 = vmatprep.subr.mxu0 0.0
    %3845 = vmatpush1.msra.mxu0 0.0
    %3846 = vmatprep.subr.mxu0 0.0
    %3847 = vmatpush1.msra.mxu0 0.0
    %3848 = vmatprep.subr.mxu0 0.0
    %3849 = vmatpush1.msra.mxu0 0.0
    %3850 = vmatprep.subr.mxu0 0.0
    %3851 = vmatpush1.msra.mxu0 0.0
    %3852 = vmatprep.subr.mxu0 0.0
    %3853 = vmatpush1.msra.mxu0 0.0
    %3854 = vmatprep.subr.mxu0 0.0
    %3855 = vmatpush1.msra.mxu0 0.0
    %3856 = vmatprep.subr.mxu0 0.0
    %3857 = vmatpush1.msra.mxu0 0.0
    %3858 = vmatprep.subr.mxu0 0.0
    %3859 = vmatpush1.msra.mxu0 0.0
    %3860 = vmatprep.subr.mxu0 0.0
    %3861 = vmatpush1.msra.mxu0 0.0
    %3862 = vmatprep.subr.mxu0 0.0
    %3863 = vmatpush1.msra.mxu0 0.0
    %3864 = vmatprep.subr.mxu0 0.0
    %3865 = vmatpush1.msra.mxu0 0.0
    %3866 = vmatprep.subr.mxu0 0.0
    %3867 = vmatpush1.msra.mxu0 0.0
    %3868 = vmatprep.subr.mxu0 0.0
    %3869 = vmatpush1.msra.mxu0 0.0
    %3870 = vmatprep.subr.mxu0 0.0
    %3871 = vmatpush1.msra.mxu0 0.0
    %3872 = vmatprep.subr.mxu0 0.0
    %3873 = vmatpush1.msra.mxu0 0.0
    %3874 = vmatprep.mubr.f32.mxu0 0.0
    %3875 = vmatmul.mubr.f32.gmra.mrb[0].mxu0 %v3808
    %v3876 = vpop.f32.mrb[0].mxu0
    %v3877 = vadd.f32 0.0, %v3876
    %v3878 = vpop.f32.mrb[0].mxu0
    %3879 = vdwg.mxu0
    %v3880 = vld [vmem:[%s5] sm:$0x1]
    %v3882 = vlaneseq
    %v3883 = vshrl.u32 %v3882, 7
    %v3884 = vsub.s32 0, %v3883
    %v3885 = vrot.slane %v3880, %v3884
    %v3887 = vadd.f32 %v2782, %v3885
    %v3888 = vadd.f32 %v2855, %v3885
    %v3889 = vadd.f32 %v2928, %v3885
    %v3890 = vadd.f32 %v3001, %v3885
    %v3891 = vadd.f32 %v3074, %v3885
    %v3892 = vadd.f32 %v3147, %v3885
    %v3893 = vadd.f32 %v3220, %v3885
    %v3894 = vadd.f32 %v3293, %v3885
    %v3895 = vadd.f32 %v3366, %v3885
    %v3896 = vadd.f32 %v3439, %v3885
    %v3897 = vadd.f32 %v3512, %v3885
    %v3898 = vadd.f32 %v3585, %v3885
    %v3899 = vadd.f32 %v3658, %v3885
    %v3900 = vadd.f32 %v3731, %v3885
    %v3901 = vadd.f32 %v3804, %v3885
    %v3902 = vadd.f32 %v3877, %v3885
    %v3903 = vld [vmem:[%s6] sm:$0xff]
    %v3904 = vld [vmem:[%s6 + $0x8] sm:$0xff]
    %v3905 = vld [vmem:[%s6 + $0x10] sm:$0xff]
    %v3906 = vld [vmem:[%s6 + $0x18] sm:$0xff]
    %v3907 = vld [vmem:[%s7] sm:$0x1]
    %v3909 = vlaneseq
    %v3910 = vshrl.u32 %v3909, 7
    %v3911 = vsub.s32 0, %v3910
    %v3912 = vrot.slane %v3907, %v3911
    %v3930 = vrot.slane %v3888, 7
    %vm3931 = vcmask 1041409
    %v3932 = vsel %vm3931, %v3930, %v3887
    %v3933 = vrot.slane %v3889, 6
    %vm3934 = vcmask 1042434
    %v3935 = vsel %vm3934, %v3933, %v3932
    %v3936 = vrot.slane %v3890, 5
    %vm3937 = vcmask 1043459
    %v3938 = vsel %vm3937, %v3936, %v3935
    %v3939 = vrot.slane %v3891, 4
    %vm3940 = vcmask 1044484
    %v3941 = vsel %vm3940, %v3939, %v3938
    %v3942 = vrot.slane %v3892, 3
    %vm3943 = vcmask 1045509
    %v3944 = vsel %vm3943, %v3942, %v3941
    %v3945 = vrot.slane %v3893, 2
    %vm3946 = vcmask 1046534
    %v3947 = vsel %vm3946, %v3945, %v3944
    %v3948 = vrot.slane %v3894, 1
    %vm3949 = vcmask 1047559
    %v3950 = vsel %vm3949, %v3948, %v3947
    %v3951 = vrot.slane %v3896, 7
    %v3952 = vsel %vm3931, %v3951, %v3895
    %v3953 = vrot.slane %v3897, 6
    %v3954 = vsel %vm3934, %v3953, %v3952
    %v3955 = vrot.slane %v3898, 5
    %v3956 = vsel %vm3937, %v3955, %v3954
    %v3957 = vrot.slane %v3899, 4
    %v3958 = vsel %vm3940, %v3957, %v3956
    %v3959 = vrot.slane %v3900, 3
    %v3960 = vsel %vm3943, %v3959, %v3958
    %v3961 = vrot.slane %v3901, 2
    %v3962 = vsel %vm3946, %v3961, %v3960
    %v3963 = vrot.slane %v3902, 1
    %v3964 = vsel %vm3949, %v3963, %v3962
    %vm3965 = vcmask 261120
    %v3966 = vsel %vm3965, %v3950, 0
    %v3968 = vsel %vm3965, %v3964, 0
    %3970 = vmatprep.subr.mxu0 0.0
    %3971 = vmatpush1.msra.mxu0 %v3903
    %3972 = vmatprep.subr.mxu0 0.0
    %3973 = vmatpush1.msra.mxu0 %v3904
    %3974 = vmatprep.subr.mxu0 0.0
    %3975 = vmatpush1.msra.mxu0 %v3905
    %3976 = vmatprep.subr.mxu0 0.0
    %3977 = vmatpush1.msra.mxu0 %v3906
    %3978 = vmatprep.subr.mxu0 0.0
    %3979 = vmatpush1.msra.mxu0 0.0
    %3980 = vmatprep.subr.mxu0 0.0
    %3981 = vmatpush1.msra.mxu0 0.0
    %3982 = vmatprep.subr.mxu0 0.0
    %3983 = vmatpush1.msra.mxu0 0.0
    %3984 = vmatprep.subr.mxu0 0.0
    %3985 = vmatpush1.msra.mxu0 0.0
    %3986 = vmatprep.subr.mxu0 0.0
    %3987 = vmatpush1.msra.mxu0 0.0
    %3988 = vmatprep.subr.mxu0 0.0
    %3989 = vmatpush1.msra.mxu0 0.0
    %3990 = vmatprep.subr.mxu0 0.0
    %3991 = vmatpush1.msra.mxu0 0.0
    %3992 = vmatprep.subr.mxu0 0.0
    %3993 = vmatpush1.msra.mxu0 0.0
    %3994 = vmatprep.subr.mxu0 0.0
    %3995 = vmatpush1.msra.mxu0 0.0
    %3996 = vmatprep.subr.mxu0 0.0
    %3997 = vmatpush1.msra.mxu0 0.0
    %3998 = vmatprep.subr.mxu0 0.0
    %3999 = vmatpush1.msra.mxu0 0.0
    %4000 = vmatprep.subr.mxu0 0.0
    %4001 = vmatpush1.msra.mxu0 0.0
    %4002 = vmatprep.subr.mxu0 0.0
    %4003 = vmatpush1.msra.mxu0 0.0
    %4004 = vmatprep.subr.mxu0 0.0
    %4005 = vmatpush1.msra.mxu0 0.0
    %4006 = vmatprep.subr.mxu0 0.0
    %4007 = vmatpush1.msra.mxu0 0.0
    %4008 = vmatprep.subr.mxu0 0.0
    %4009 = vmatpush1.msra.mxu0 0.0
    %4010 = vmatprep.subr.mxu0 0.0
    %4011 = vmatpush1.msra.mxu0 0.0
    %4012 = vmatprep.subr.mxu0 0.0
    %4013 = vmatpush1.msra.mxu0 0.0
    %4014 = vmatprep.subr.mxu0 0.0
    %4015 = vmatpush1.msra.mxu0 0.0
    %4016 = vmatprep.subr.mxu0 0.0
    %4017 = vmatpush1.msra.mxu0 0.0
    %4018 = vmatprep.subr.mxu0 0.0
    %4019 = vmatpush1.msra.mxu0 0.0
    %4020 = vmatprep.subr.mxu0 0.0
    %4021 = vmatpush1.msra.mxu0 0.0
    %4022 = vmatprep.subr.mxu0 0.0
    %4023 = vmatpush1.msra.mxu0 0.0
    %4024 = vmatprep.subr.mxu0 0.0
    %4025 = vmatpush1.msra.mxu0 0.0
    %4026 = vmatprep.subr.mxu0 0.0
    %4027 = vmatpush1.msra.mxu0 0.0
    %4028 = vmatprep.subr.mxu0 0.0
    %4029 = vmatpush1.msra.mxu0 0.0
    %4030 = vmatprep.subr.mxu0 0.0
    %4031 = vmatpush1.msra.mxu0 0.0
    %4032 = vmatprep.subr.mxu0 0.0
    %4033 = vmatpush1.msra.mxu0 0.0
    %4034 = vmatprep.mubr.f32.mxu0 0.0
    %4035 = vmatmul.mubr.f32.gmra.mrb[0].mxu0 %v3966
    %v4036 = vpop.f32.mrb[0].mxu0
    %v4037 = vadd.f32 %v3912, %v4036
    %v4038 = vpop.f32.mrb[0].mxu0
    %4039 = vmatprep.mubr.f32.mxu0 0.0
    %4040 = vmatmul.mubr.f32.gmra.mrb[0].mxu0 %v3968
    %v4041 = vpop.f32.mrb[0].mxu0
    %v4042 = vadd.f32 %v3912, %v4041
    %v4043 = vpop.f32.mrb[0].mxu0
    %4044 = vdwg.mxu0
    %v4045 = vld [vmem:[%s8] sm:$0xff]
    %v4046 = vld [vmem:[%s8 + $0x8] sm:$0xff]
    %v4047 = vld [vmem:[%s8 + $0x10] sm:$0xff]
    %v4048 = vld [vmem:[%s8 + $0x18] sm:$0xff]
    %v4050 = vsel %vm3965, 0.0, 0
    %4052 = vmatprep.subr.mxu0 0.0
    %4053 = vmatpush1.msra.mxu0 %v4045
    %4054 = vmatprep.subr.mxu0 0.0
    %4055 = vmatpush1.msra.mxu0 %v4046
    %4056 = vmatprep.subr.mxu0 0.0
    %4057 = vmatpush1.msra.mxu0 %v4047
    %4058 = vmatprep.subr.mxu0 0.0
    %4059 = vmatpush1.msra.mxu0 %v4048
    %4060 = vmatprep.subr.mxu0 0.0
    %4061 = vmatpush1.msra.mxu0 0.0
    %4062 = vmatprep.subr.mxu0 0.0
    %4063 = vmatpush1.msra.mxu0 0.0
    %4064 = vmatprep.subr.mxu0 0.0
    %4065 = vmatpush1.msra.mxu0 0.0
    %4066 = vmatprep.subr.mxu0 0.0
    %4067 = vmatpush1.msra.mxu0 0.0
    %4068 = vmatprep.subr.mxu0 0.0
    %4069 = vmatpush1.msra.mxu0 0.0
    %4070 = vmatprep.subr.mxu0 0.0
    %4071 = vmatpush1.msra.mxu0 0.0
    %4072 = vmatprep.subr.mxu0 0.0
    %4073 = vmatpush1.msra.mxu0 0.0
    %4074 = vmatprep.subr.mxu0 0.0
    %4075 = vmatpush1.msra.mxu0 0.0
    %4076 = vmatprep.subr.mxu0 0.0
    %4077 = vmatpush1.msra.mxu0 0.0
    %4078 = vmatprep.subr.mxu0 0.0
    %4079 = vmatpush1.msra.mxu0 0.0
    %4080 = vmatprep.subr.mxu0 0.0
    %4081 = vmatpush1.msra.mxu0 0.0
    %4082 = vmatprep.subr.mxu0 0.0
    %4083 = vmatpush1.msra.mxu0 0.0
    %4084 = vmatprep.subr.mxu0 0.0
    %4085 = vmatpush1.msra.mxu0 0.0
    %4086 = vmatprep.subr.mxu0 0.0
    %4087 = vmatpush1.msra.mxu0 0.0
    %4088 = vmatprep.subr.mxu0 0.0
    %4089 = vmatpush1.msra.mxu0 0.0
    %4090 = vmatprep.subr.mxu0 0.0
    %4091 = vmatpush1.msra.mxu0 0.0
    %4092 = vmatprep.subr.mxu0 0.0
    %4093 = vmatpush1.msra.mxu0 0.0
    %4094 = vmatprep.subr.mxu0 0.0
    %4095 = vmatpush1.msra.mxu0 0.0
    %4096 = vmatprep.subr.mxu0 0.0
    %4097 = vmatpush1.msra.mxu0 0.0
    %4098 = vmatprep.subr.mxu0 0.0
    %4099 = vmatpush1.msra.mxu0 0.0
    %4100 = vmatprep.subr.mxu0 0.0
    %4101 = vmatpush1.msra.mxu0 0.0
    %4102 = vmatprep.subr.mxu0 0.0
    %4103 = vmatpush1.msra.mxu0 0.0
    %4104 = vmatprep.subr.mxu0 0.0
    %4105 = vmatpush1.msra.mxu0 0.0
    %4106 = vmatprep.subr.mxu0 0.0
    %4107 = vmatpush1.msra.mxu0 0.0
    %4108 = vmatprep.subr.mxu0 0.0
    %4109 = vmatpush1.msra.mxu0 0.0
    %4110 = vmatprep.subr.mxu0 0.0
    %4111 = vmatpush1.msra.mxu0 0.0
    %4112 = vmatprep.subr.mxu0 0.0
    %4113 = vmatpush1.msra.mxu0 0.0
    %4114 = vmatprep.subr.mxu0 0.0
    %4115 = vmatpush1.msra.mxu0 0.0
    %4116 = vmatprep.mubr.f32.mxu0 0.0
    %4117 = vmatmul.mubr.f32.gmra.mrb[0].mxu0 %v4050
    %v4118 = vpop.f32.mrb[0].mxu0
    %v4119 = vadd.f32 0.0, %v4118
    %v4120 = vpop.f32.mrb[0].mxu0
    %4121 = vdwg.mxu0
    %v4122 = vadd.f32 %v4037, %v4119
    %v4123 = vxor.u32 %v4122, 2147483648
    %v4124 = vmul.f32 %v4123, 1.442695
    %v4125 = vpow.pop %v4124
    %v4126 = vadd.f32 %v4125, 1.0
    %v4127 = vrcp.pop %v4126
    %v4128 = vmul.f32 1.0, %v4127
    %v4129 = vtanh.pop %v4122
    %v4130 = vmul.f32 %v4128, 0.0
    %4132 = vrot.lane.b32.xlu0 %v4129, 64
    %v4133 = vpop.permute.xlu0 %4132
    %v4135 = vmul.f32 %v4128, %v4133
    %4137 = vrot.lane.b32.xlu0 %v4135, 32
    %v4138 = vpop.permute.xlu0 %4137
    %v4140 = vadd.f32 %v4130, %v4138
    %v4141 = vtanh.pop %v4140
    %4143 = vrot.lane.b32.xlu0 %v4141, 64
    %v4144 = vpop.permute.xlu0 %4143
    %v4146 = vmul.f32 %v4128, %v4144
    %4148 = vrot.lane.b32.xlu0 %v4146, 32
    %v4149 = vpop.permute.xlu0 %4148
    %v4150 = vsel %vm3965, %v4149, 0
    %4152 = vmatprep.subr.mxu0 0.0
    %4153 = vmatpush1.msra.mxu0 %v4045
    %4154 = vmatprep.subr.mxu0 0.0
    %4155 = vmatpush1.msra.mxu0 %v4046
    %4156 = vmatprep.subr.mxu0 0.0
    %4157 = vmatpush1.msra.mxu0 %v4047
    %4158 = vmatprep.subr.mxu0 0.0
    %4159 = vmatpush1.msra.mxu0 %v4048
    %4160 = vmatprep.subr.mxu0 0.0
    %4161 = vmatpush1.msra.mxu0 0.0
    %4162 = vmatprep.subr.mxu0 0.0
    %4163 = vmatpush1.msra.mxu0 0.0
    %4164 = vmatprep.subr.mxu0 0.0
    %4165 = vmatpush1.msra.mxu0 0.0
    %4166 = vmatprep.subr.mxu0 0.0
    %4167 = vmatpush1.msra.mxu0 0.0
    %4168 = vmatprep.subr.mxu0 0.0
    %4169 = vmatpush1.msra.mxu0 0.0
    %4170 = vmatprep.subr.mxu0 0.0
    %4171 = vmatpush1.msra.mxu0 0.0
    %4172 = vmatprep.subr.mxu0 0.0
    %4173 = vmatpush1.msra.mxu0 0.0
    %4174 = vmatprep.subr.mxu0 0.0
    %4175 = vmatpush1.msra.mxu0 0.0
    %4176 = vmatprep.subr.mxu0 0.0
    %4177 = vmatpush1.msra.mxu0 0.0
    %4178 = vmatprep.subr.mxu0 0.0
    %4179 = vmatpush1.msra.mxu0 0.0
    %4180 = vmatprep.subr.mxu0 0.0
    %4181 = vmatpush1.msra.mxu0 0.0
    %4182 = vmatprep.subr.mxu0 0.0
    %4183 = vmatpush1.msra.mxu0 0.0
    %4184 = vmatprep.subr.mxu0 0.0
    %4185 = vmatpush1.msra.mxu0 0.0
    %4186 = vmatprep.subr.mxu0 0.0
    %4187 = vmatpush1.msra.mxu0 0.0
    %4188 = vmatprep.subr.mxu0 0.0
    %4189 = vmatpush1.msra.mxu0 0.0
    %4190 = vmatprep.subr.mxu0 0.0
    %4191 = vmatpush1.msra.mxu0 0.0
    %4192 = vmatprep.subr.mxu0 0.0
    %4193 = vmatpush1.msra.mxu0 0.0
    %4194 = vmatprep.subr.mxu0 0.0
    %4195 = vmatpush1.msra.mxu0 0.0
    %4196 = vmatprep.subr.mxu0 0.0
    %4197 = vmatpush1.msra.mxu0 0.0
    %4198 = vmatprep.subr.mxu0 0.0
    %4199 = vmatpush1.msra.mxu0 0.0
    %4200 = vmatprep.subr.mxu0 0.0
    %4201 = vmatpush1.msra.mxu0 0.0
    %4202 = vmatprep.subr.mxu0 0.0
    %4203 = vmatpush1.msra.mxu0 0.0
    %4204 = vmatprep.subr.mxu0 0.0
    %4205 = vmatpush1.msra.mxu0 0.0
    %4206 = vmatprep.subr.mxu0 0.0
    %4207 = vmatpush1.msra.mxu0 0.0
    %4208 = vmatprep.subr.mxu0 0.0
    %4209 = vmatpush1.msra.mxu0 0.0
    %4210 = vmatprep.subr.mxu0 0.0
    %4211 = vmatpush1.msra.mxu0 0.0
    %4212 = vmatprep.subr.mxu0 0.0
    %4213 = vmatpush1.msra.mxu0 0.0
    %4214 = vmatprep.subr.mxu0 0.0
    %4215 = vmatpush1.msra.mxu0 0.0
    %4216 = vmatprep.mubr.f32.mxu0 0.0
    %4217 = vmatmul.mubr.f32.gmra.mrb[0].mxu0 %v4150
    %v4218 = vpop.f32.mrb[0].mxu0
    %v4219 = vadd.f32 0.0, %v4218
    %v4220 = vpop.f32.mrb[0].mxu0
    %4221 = vdwg.mxu0
    %v4223 = vrot.slane %v4219, 6
    %v4225 = vadd.f32 %v4037, %v4223
    %v4226 = vxor.u32 %v4225, 2147483648
    %v4227 = vmul.f32 %v4226, 1.442695
    %v4228 = vpow.pop %v4227
    %v4229 = vadd.f32 %v4228, 1.0
    %v4230 = vrcp.pop %v4229
    %v4231 = vmul.f32 1.0, %v4230
    %v4232 = vtanh.pop %v4225
    %v4234 = vrot.slane %v4140, 6
    %v4236 = vmul.f32 %v4231, %v4234
    %4238 = vrot.lane.b32.xlu0 %v4232, 64
    %v4239 = vpop.permute.xlu0 %4238
    %v4241 = vmul.f32 %v4231, %v4239
    %4243 = vrot.lane.b32.xlu0 %v4241, 32
    %v4244 = vpop.permute.xlu0 %4243
    %v4246 = vadd.f32 %v4236, %v4244
    %v4247 = vtanh.pop %v4246
    %4249 = vrot.lane.b32.xlu0 %v4247, 64
    %v4250 = vpop.permute.xlu0 %4249
    %v4252 = vmul.f32 %v4231, %v4250
    %v4254 = vrot.slane %v4252, 2
    %4255 = vrot.lane.b32.xlu0 %v4254, 32
    %v4256 = vpop.permute.xlu0 %4255
    %v4257 = vsel %vm3965, %v4256, 0
    %4259 = vmatprep.subr.mxu0 0.0
    %4260 = vmatpush1.msra.mxu0 %v4045
    %4261 = vmatprep.subr.mxu0 0.0
    %4262 = vmatpush1.msra.mxu0 %v4046
    %4263 = vmatprep.subr.mxu0 0.0
    %4264 = vmatpush1.msra.mxu0 %v4047
    %4265 = vmatprep.subr.mxu0 0.0
    %4266 = vmatpush1.msra.mxu0 %v4048
    %4267 = vmatprep.subr.mxu0 0.0
    %4268 = vmatpush1.msra.mxu0 0.0
    %4269 = vmatprep.subr.mxu0 0.0
    %4270 = vmatpush1.msra.mxu0 0.0
    %4271 = vmatprep.subr.mxu0 0.0
    %4272 = vmatpush1.msra.mxu0 0.0
    %4273 = vmatprep.subr.mxu0 0.0
    %4274 = vmatpush1.msra.mxu0 0.0
    %4275 = vmatprep.subr.mxu0 0.0
    %4276 = vmatpush1.msra.mxu0 0.0
    %4277 = vmatprep.subr.mxu0 0.0
    %4278 = vmatpush1.msra.mxu0 0.0
    %4279 = vmatprep.subr.mxu0 0.0
    %4280 = vmatpush1.msra.mxu0 0.0
    %4281 = vmatprep.subr.mxu0 0.0
    %4282 = vmatpush1.msra.mxu0 0.0
    %4283 = vmatprep.subr.mxu0 0.0
    %4284 = vmatpush1.msra.mxu0 0.0
    %4285 = vmatprep.subr.mxu0 0.0
    %4286 = vmatpush1.msra.mxu0 0.0
    %4287 = vmatprep.subr.mxu0 0.0
    %4288 = vmatpush1.msra.mxu0 0.0
    %4289 = vmatprep.subr.mxu0 0.0
    %4290 = vmatpush1.msra.mxu0 0.0
    %4291 = vmatprep.subr.mxu0 0.0
    %4292 = vmatpush1.msra.mxu0 0.0
    %4293 = vmatprep.subr.mxu0 0.0
    %4294 = vmatpush1.msra.mxu0 0.0
    %4295 = vmatprep.subr.mxu0 0.0
    %4296 = vmatpush1.msra.mxu0 0.0
    %4297 = vmatprep.subr.mxu0 0.0
    %4298 = vmatpush1.msra.mxu0 0.0
    %4299 = vmatprep.subr.mxu0 0.0
    %4300 = vmatpush1.msra.mxu0 0.0
    %4301 = vmatprep.subr.mxu0 0.0
    %4302 = vmatpush1.msra.mxu0 0.0
    %4303 = vmatprep.subr.mxu0 0.0
    %4304 = vmatpush1.msra.mxu0 0.0
    %4305 = vmatprep.subr.mxu0 0.0
    %4306 = vmatpush1.msra.mxu0 0.0
    %4307 = vmatprep.subr.mxu0 0.0
    %4308 = vmatpush1.msra.mxu0 0.0
    %4309 = vmatprep.subr.mxu0 0.0
    %4310 = vmatpush1.msra.mxu0 0.0
    %4311 = vmatprep.subr.mxu0 0.0
    %4312 = vmatpush1.msra.mxu0 0.0
    %4313 = vmatprep.subr.mxu0 0.0
    %4314 = vmatpush1.msra.mxu0 0.0
    %4315 = vmatprep.subr.mxu0 0.0
    %4316 = vmatpush1.msra.mxu0 0.0
    %4317 = vmatprep.subr.mxu0 0.0
    %4318 = vmatpush1.msra.mxu0 0.0
    %4319 = vmatprep.subr.mxu0 0.0
    %4320 = vmatpush1.msra.mxu0 0.0
    %4321 = vmatprep.subr.mxu0 0.0
    %4322 = vmatpush1.msra.mxu0 0.0
    %4323 = vmatprep.mubr.f32.mxu0 0.0
    %4324 = vmatmul.mubr.f32.gmra.mrb[0].mxu0 %v4257
    %v4325 = vpop.f32.mrb[0].mxu0
    %v4326 = vadd.f32 0.0, %v4325
    %v4327 = vpop.f32.mrb[0].mxu0
    %4328 = vdwg.mxu0
    %v4330 = vrot.slane %v4326, 4
    %v4332 = vadd.f32 %v4037, %v4330
    %v4333 = vxor.u32 %v4332, 2147483648
    %v4334 = vmul.f32 %v4333, 1.442695
    %v4335 = vpow.pop %v4334
    %v4336 = vadd.f32 %v4335, 1.0
    %v4337 = vrcp.pop %v4336
    %v4338 = vmul.f32 1.0, %v4337
    %v4339 = vtanh.pop %v4332
    %v4341 = vrot.slane %v4246, 6
    %v4343 = vmul.f32 %v4338, %v4341
    %4345 = vrot.lane.b32.xlu0 %v4339, 64
    %v4346 = vpop.permute.xlu0 %4345
    %v4348 = vmul.f32 %v4338, %v4346
    %4350 = vrot.lane.b32.xlu0 %v4348, 32
    %v4351 = vpop.permute.xlu0 %4350
    %v4353 = vadd.f32 %v4343, %v4351
    %v4354 = vtanh.pop %v4353
    %4356 = vrot.lane.b32.xlu0 %v4354, 64
    %v4357 = vpop.permute.xlu0 %4356
    %v4359 = vmul.f32 %v4338, %v4357
    %v4361 = vrot.slane %v4359, 4
    %4362 = vrot.lane.b32.xlu0 %v4361, 32
    %v4363 = vpop.permute.xlu0 %4362
    %v4364 = vsel %vm3965, %v4363, 0
    %4366 = vmatprep.subr.mxu0 0.0
    %4367 = vmatpush1.msra.mxu0 %v4045
    %4368 = vmatprep.subr.mxu0 0.0
    %4369 = vmatpush1.msra.mxu0 %v4046
    %4370 = vmatprep.subr.mxu0 0.0
    %4371 = vmatpush1.msra.mxu0 %v4047
    %4372 = vmatprep.subr.mxu0 0.0
    %4373 = vmatpush1.msra.mxu0 %v4048
    %4374 = vmatprep.subr.mxu0 0.0
    %4375 = vmatpush1.msra.mxu0 0.0
    %4376 = vmatprep.subr.mxu0 0.0
    %4377 = vmatpush1.msra.mxu0 0.0
    %4378 = vmatprep.subr.mxu0 0.0
    %4379 = vmatpush1.msra.mxu0 0.0
    %4380 = vmatprep.subr.mxu0 0.0
    %4381 = vmatpush1.msra.mxu0 0.0
    %4382 = vmatprep.subr.mxu0 0.0
    %4383 = vmatpush1.msra.mxu0 0.0
    %4384 = vmatprep.subr.mxu0 0.0
    %4385 = vmatpush1.msra.mxu0 0.0
    %4386 = vmatprep.subr.mxu0 0.0
    %4387 = vmatpush1.msra.mxu0 0.0
    %4388 = vmatprep.subr.mxu0 0.0
    %4389 = vmatpush1.msra.mxu0 0.0
    %4390 = vmatprep.subr.mxu0 0.0
    %4391 = vmatpush1.msra.mxu0 0.0
    %4392 = vmatprep.subr.mxu0 0.0
    %4393 = vmatpush1.msra.mxu0 0.0
    %4394 = vmatprep.subr.mxu0 0.0
    %4395 = vmatpush1.msra.mxu0 0.0
    %4396 = vmatprep.subr.mxu0 0.0
    %4397 = vmatpush1.msra.mxu0 0.0
    %4398 = vmatprep.subr.mxu0 0.0
    %4399 = vmatpush1.msra.mxu0 0.0
    %4400 = vmatprep.subr.mxu0 0.0
    %4401 = vmatpush1.msra.mxu0 0.0
    %4402 = vmatprep.subr.mxu0 0.0
    %4403 = vmatpush1.msra.mxu0 0.0
    %4404 = vmatprep.subr.mxu0 0.0
    %4405 = vmatpush1.msra.mxu0 0.0
    %4406 = vmatprep.subr.mxu0 0.0
    %4407 = vmatpush1.msra.mxu0 0.0
    %4408 = vmatprep.subr.mxu0 0.0
    %4409 = vmatpush1.msra.mxu0 0.0
    %4410 = vmatprep.subr.mxu0 0.0
    %4411 = vmatpush1.msra.mxu0 0.0
    %4412 = vmatprep.subr.mxu0 0.0
    %4413 = vmatpush1.msra.mxu0 0.0
    %4414 = vmatprep.subr.mxu0 0.0
    %4415 = vmatpush1.msra.mxu0 0.0
    %4416 = vmatprep.subr.mxu0 0.0
    %4417 = vmatpush1.msra.mxu0 0.0
    %4418 = vmatprep.subr.mxu0 0.0
    %4419 = vmatpush1.msra.mxu0 0.0
    %4420 = vmatprep.subr.mxu0 0.0
    %4421 = vmatpush1.msra.mxu0 0.0
    %4422 = vmatprep.subr.mxu0 0.0
    %4423 = vmatpush1.msra.mxu0 0.0
    %4424 = vmatprep.subr.mxu0 0.0
    %4425 = vmatpush1.msra.mxu0 0.0
    %4426 = vmatprep.subr.mxu0 0.0
    %4427 = vmatpush1.msra.mxu0 0.0
    %4428 = vmatprep.subr.mxu0 0.0
    %4429 = vmatpush1.msra.mxu0 0.0
    %4430 = vmatprep.mubr.f32.mxu0 0.0
    %4431 = vmatmul.mubr.f32.gmra.mrb[0].mxu0 %v4364
    %v4432 = vpop.f32.mrb[0].mxu0
    %v4433 = vadd.f32 0.0, %v4432
    %v4434 = vpop.f32.mrb[0].mxu0
    %4435 = vdwg.mxu0
    %v4437 = vrot.slane %v4433, 2
    %v4439 = vadd.f32 %v4037, %v4437
    %v4440 = vxor.u32 %v4439, 2147483648
    %v4441 = vmul.f32 %v4440, 1.442695
    %v4442 = vpow.pop %v4441
    %v4443 = vadd.f32 %v4442, 1.0
    %v4444 = vrcp.pop %v4443
    %v4445 = vmul.f32 1.0, %v4444
    %v4446 = vtanh.pop %v4439
    %v4448 = vrot.slane %v4353, 6
    %v4450 = vmul.f32 %v4445, %v4448
    %4452 = vrot.lane.b32.xlu0 %v4446, 64
    %v4453 = vpop.permute.xlu0 %4452
    %v4455 = vmul.f32 %v4445, %v4453
    %4457 = vrot.lane.b32.xlu0 %v4455, 32
    %v4458 = vpop.permute.xlu0 %4457
    %v4460 = vadd.f32 %v4450, %v4458
    %v4461 = vtanh.pop %v4460
    %4463 = vrot.lane.b32.xlu0 %v4461, 64
    %v4464 = vpop.permute.xlu0 %4463
    %v4466 = vmul.f32 %v4445, %v4464
    %v4468 = vrot.slane %v4466, 6
    %4469 = vrot.lane.b32.xlu0 %v4468, 32
    %v4470 = vpop.permute.xlu0 %4469
    %v4471 = vsel %vm3965, %v4470, 0
    %4473 = vmatprep.subr.mxu0 0.0
    %4474 = vmatpush1.msra.mxu0 %v4045
    %4475 = vmatprep.subr.mxu0 0.0
    %4476 = vmatpush1.msra.mxu0 %v4046
    %4477 = vmatprep.subr.mxu0 0.0
    %4478 = vmatpush1.msra.mxu0 %v4047
    %4479 = vmatprep.subr.mxu0 0.0
    %4480 = vmatpush1.msra.mxu0 %v4048
    %4481 = vmatprep.subr.mxu0 0.0
    %4482 = vmatpush1.msra.mxu0 0.0
    %4483 = vmatprep.subr.mxu0 0.0
    %4484 = vmatpush1.msra.mxu0 0.0
    %4485 = vmatprep.subr.mxu0 0.0
    %4486 = vmatpush1.msra.mxu0 0.0
    %4487 = vmatprep.subr.mxu0 0.0
    %4488 = vmatpush1.msra.mxu0 0.0
    %4489 = vmatprep.subr.mxu0 0.0
    %4490 = vmatpush1.msra.mxu0 0.0
    %4491 = vmatprep.subr.mxu0 0.0
    %4492 = vmatpush1.msra.mxu0 0.0
    %4493 = vmatprep.subr.mxu0 0.0
    %4494 = vmatpush1.msra.mxu0 0.0
    %4495 = vmatprep.subr.mxu0 0.0
    %4496 = vmatpush1.msra.mxu0 0.0
    %4497 = vmatprep.subr.mxu0 0.0
    %4498 = vmatpush1.msra.mxu0 0.0
    %4499 = vmatprep.subr.mxu0 0.0
    %4500 = vmatpush1.msra.mxu0 0.0
    %4501 = vmatprep.subr.mxu0 0.0
    %4502 = vmatpush1.msra.mxu0 0.0
    %4503 = vmatprep.subr.mxu0 0.0
    %4504 = vmatpush1.msra.mxu0 0.0
    %4505 = vmatprep.subr.mxu0 0.0
    %4506 = vmatpush1.msra.mxu0 0.0
    %4507 = vmatprep.subr.mxu0 0.0
    %4508 = vmatpush1.msra.mxu0 0.0
    %4509 = vmatprep.subr.mxu0 0.0
    %4510 = vmatpush1.msra.mxu0 0.0
    %4511 = vmatprep.subr.mxu0 0.0
    %4512 = vmatpush1.msra.mxu0 0.0
    %4513 = vmatprep.subr.mxu0 0.0
    %4514 = vmatpush1.msra.mxu0 0.0
    %4515 = vmatprep.subr.mxu0 0.0
    %4516 = vmatpush1.msra.mxu0 0.0
    %4517 = vmatprep.subr.mxu0 0.0
    %4518 = vmatpush1.msra.mxu0 0.0
    %4519 = vmatprep.subr.mxu0 0.0
    %4520 = vmatpush1.msra.mxu0 0.0
    %4521 = vmatprep.subr.mxu0 0.0
    %4522 = vmatpush1.msra.mxu0 0.0
    %4523 = vmatprep.subr.mxu0 0.0
    %4524 = vmatpush1.msra.mxu0 0.0
    %4525 = vmatprep.subr.mxu0 0.0
    %4526 = vmatpush1.msra.mxu0 0.0
    %4527 = vmatprep.subr.mxu0 0.0
    %4528 = vmatpush1.msra.mxu0 0.0
    %4529 = vmatprep.subr.mxu0 0.0
    %4530 = vmatpush1.msra.mxu0 0.0
    %4531 = vmatprep.subr.mxu0 0.0
    %4532 = vmatpush1.msra.mxu0 0.0
    %4533 = vmatprep.subr.mxu0 0.0
    %4534 = vmatpush1.msra.mxu0 0.0
    %4535 = vmatprep.subr.mxu0 0.0
    %4536 = vmatpush1.msra.mxu0 0.0
    %4537 = vmatprep.mubr.f32.mxu0 0.0
    %4538 = vmatmul.mubr.f32.gmra.mrb[0].mxu0 %v4471
    %v4539 = vpop.f32.mrb[0].mxu0
    %v4540 = vadd.f32 0.0, %v4539
    %v4541 = vpop.f32.mrb[0].mxu0
    %4542 = vdwg.mxu0
    %v4543 = vadd.f32 %v4042, %v4540
    %v4544 = vxor.u32 %v4543, 2147483648
    %v4545 = vmul.f32 %v4544, 1.442695
    %v4546 = vpow.pop %v4545
    %v4547 = vadd.f32 %v4546, 1.0
    %v4548 = vrcp.pop %v4547
    %v4549 = vmul.f32 1.0, %v4548
    %v4550 = vtanh.pop %v4543
    %v4552 = vrot.slane %v4460, 6
    %v4554 = vmul.f32 %v4549, %v4552
    %4556 = vrot.lane.b32.xlu0 %v4550, 64
    %v4557 = vpop.permute.xlu0 %4556
    %v4559 = vmul.f32 %v4549, %v4557
    %4561 = vrot.lane.b32.xlu0 %v4559, 32
    %v4562 = vpop.permute.xlu0 %4561
    %v4564 = vadd.f32 %v4554, %v4562
    %v4565 = vtanh.pop %v4564
    %4567 = vrot.lane.b32.xlu0 %v4565, 64
    %v4568 = vpop.permute.xlu0 %4567
    %v4570 = vmul.f32 %v4549, %v4568
    %4572 = vrot.lane.b32.xlu0 %v4570, 32
    %v4573 = vpop.permute.xlu0 %4572
    %v4574 = vsel %vm3965, %v4573, 0
    %4576 = vmatprep.subr.mxu0 0.0
    %4577 = vmatpush1.msra.mxu0 %v4045
    %4578 = vmatprep.subr.mxu0 0.0
    %4579 = vmatpush1.msra.mxu0 %v4046
    %4580 = vmatprep.subr.mxu0 0.0
    %4581 = vmatpush1.msra.mxu0 %v4047
    %4582 = vmatprep.subr.mxu0 0.0
    %4583 = vmatpush1.msra.mxu0 %v4048
    %4584 = vmatprep.subr.mxu0 0.0
    %4585 = vmatpush1.msra.mxu0 0.0
    %4586 = vmatprep.subr.mxu0 0.0
    %4587 = vmatpush1.msra.mxu0 0.0
    %4588 = vmatprep.subr.mxu0 0.0
    %4589 = vmatpush1.msra.mxu0 0.0
    %4590 = vmatprep.subr.mxu0 0.0
    %4591 = vmatpush1.msra.mxu0 0.0
    %4592 = vmatprep.subr.mxu0 0.0
    %4593 = vmatpush1.msra.mxu0 0.0
    %4594 = vmatprep.subr.mxu0 0.0
    %4595 = vmatpush1.msra.mxu0 0.0
    %4596 = vmatprep.subr.mxu0 0.0
    %4597 = vmatpush1.msra.mxu0 0.0
    %4598 = vmatprep.subr.mxu0 0.0
    %4599 = vmatpush1.msra.mxu0 0.0
    %4600 = vmatprep.subr.mxu0 0.0
    %4601 = vmatpush1.msra.mxu0 0.0
    %4602 = vmatprep.subr.mxu0 0.0
    %4603 = vmatpush1.msra.mxu0 0.0
    %4604 = vmatprep.subr.mxu0 0.0
    %4605 = vmatpush1.msra.mxu0 0.0
    %4606 = vmatprep.subr.mxu0 0.0
    %4607 = vmatpush1.msra.mxu0 0.0
    %4608 = vmatprep.subr.mxu0 0.0
    %4609 = vmatpush1.msra.mxu0 0.0
    %4610 = vmatprep.subr.mxu0 0.0
    %4611 = vmatpush1.msra.mxu0 0.0
    %4612 = vmatprep.subr.mxu0 0.0
    %4613 = vmatpush1.msra.mxu0 0.0
    %4614 = vmatprep.subr.mxu0 0.0
    %4615 = vmatpush1.msra.mxu0 0.0
    %4616 = vmatprep.subr.mxu0 0.0
    %4617 = vmatpush1.msra.mxu0 0.0
    %4618 = vmatprep.subr.mxu0 0.0
    %4619 = vmatpush1.msra.mxu0 0.0
    %4620 = vmatprep.subr.mxu0 0.0
    %4621 = vmatpush1.msra.mxu0 0.0
    %4622 = vmatprep.subr.mxu0 0.0
    %4623 = vmatpush1.msra.mxu0 0.0
    %4624 = vmatprep.subr.mxu0 0.0
    %4625 = vmatpush1.msra.mxu0 0.0
    %4626 = vmatprep.subr.mxu0 0.0
    %4627 = vmatpush1.msra.mxu0 0.0
    %4628 = vmatprep.subr.mxu0 0.0
    %4629 = vmatpush1.msra.mxu0 0.0
    %4630 = vmatprep.subr.mxu0 0.0
    %4631 = vmatpush1.msra.mxu0 0.0
    %4632 = vmatprep.subr.mxu0 0.0
    %4633 = vmatpush1.msra.mxu0 0.0
    %4634 = vmatprep.subr.mxu0 0.0
    %4635 = vmatpush1.msra.mxu0 0.0
    %4636 = vmatprep.subr.mxu0 0.0
    %4637 = vmatpush1.msra.mxu0 0.0
    %4638 = vmatprep.subr.mxu0 0.0
    %4639 = vmatpush1.msra.mxu0 0.0
    %4640 = vmatprep.mubr.f32.mxu0 0.0
    %4641 = vmatmul.mubr.f32.gmra.mrb[0].mxu0 %v4574
    %v4642 = vpop.f32.mrb[0].mxu0
    %v4643 = vadd.f32 0.0, %v4642
    %v4644 = vpop.f32.mrb[0].mxu0
    %4645 = vdwg.mxu0
    %v4647 = vrot.slane %v4643, 6
    %v4649 = vadd.f32 %v4042, %v4647
    %v4650 = vxor.u32 %v4649, 2147483648
    %v4651 = vmul.f32 %v4650, 1.442695
    %v4652 = vpow.pop %v4651
    %v4653 = vadd.f32 %v4652, 1.0
    %v4654 = vrcp.pop %v4653
    %v4655 = vmul.f32 1.0, %v4654
    %v4656 = vtanh.pop %v4649
    %v4658 = vrot.slane %v4564, 6
    %v4660 = vmul.f32 %v4655, %v4658
    %4662 = vrot.lane.b32.xlu0 %v4656, 64
    %v4663 = vpop.permute.xlu0 %4662
    %v4665 = vmul.f32 %v4655, %v4663
    %4667 = vrot.lane.b32.xlu0 %v4665, 32
    %v4668 = vpop.permute.xlu0 %4667
    %v4670 = vadd.f32 %v4660, %v4668
    %v4671 = vtanh.pop %v4670
    %4673 = vrot.lane.b32.xlu0 %v4671, 64
    %v4674 = vpop.permute.xlu0 %4673
    %v4676 = vmul.f32 %v4655, %v4674
    %v4678 = vrot.slane %v4676, 2
    %4679 = vrot.lane.b32.xlu0 %v4678, 32
    %v4680 = vpop.permute.xlu0 %4679
    %v4681 = vsel %vm3965, %v4680, 0
    %4683 = vmatprep.subr.mxu0 0.0
    %4684 = vmatpush1.msra.mxu0 %v4045
    %4685 = vmatprep.subr.mxu0 0.0
    %4686 = vmatpush1.msra.mxu0 %v4046
    %4687 = vmatprep.subr.mxu0 0.0
    %4688 = vmatpush1.msra.mxu0 %v4047
    %4689 = vmatprep.subr.mxu0 0.0
    %4690 = vmatpush1.msra.mxu0 %v4048
    %4691 = vmatprep.subr.mxu0 0.0
    %4692 = vmatpush1.msra.mxu0 0.0
    %4693 = vmatprep.subr.mxu0 0.0
    %4694 = vmatpush1.msra.mxu0 0.0
    %4695 = vmatprep.subr.mxu0 0.0
    %4696 = vmatpush1.msra.mxu0 0.0
    %4697 = vmatprep.subr.mxu0 0.0
    %4698 = vmatpush1.msra.mxu0 0.0
    %4699 = vmatprep.subr.mxu0 0.0
    %4700 = vmatpush1.msra.mxu0 0.0
    %4701 = vmatprep.subr.mxu0 0.0
    %4702 = vmatpush1.msra.mxu0 0.0
    %4703 = vmatprep.subr.mxu0 0.0
    %4704 = vmatpush1.msra.mxu0 0.0
    %4705 = vmatprep.subr.mxu0 0.0
    %4706 = vmatpush1.msra.mxu0 0.0
    %4707 = vmatprep.subr.mxu0 0.0
    %4708 = vmatpush1.msra.mxu0 0.0
    %4709 = vmatprep.subr.mxu0 0.0
    %4710 = vmatpush1.msra.mxu0 0.0
    %4711 = vmatprep.subr.mxu0 0.0
    %4712 = vmatpush1.msra.mxu0 0.0
    %4713 = vmatprep.subr.mxu0 0.0
    %4714 = vmatpush1.msra.mxu0 0.0
    %4715 = vmatprep.subr.mxu0 0.0
    %4716 = vmatpush1.msra.mxu0 0.0
    %4717 = vmatprep.subr.mxu0 0.0
    %4718 = vmatpush1.msra.mxu0 0.0
    %4719 = vmatprep.subr.mxu0 0.0
    %4720 = vmatpush1.msra.mxu0 0.0
    %4721 = vmatprep.subr.mxu0 0.0
    %4722 = vmatpush1.msra.mxu0 0.0
    %4723 = vmatprep.subr.mxu0 0.0
    %4724 = vmatpush1.msra.mxu0 0.0
    %4725 = vmatprep.subr.mxu0 0.0
    %4726 = vmatpush1.msra.mxu0 0.0
    %4727 = vmatprep.subr.mxu0 0.0
    %4728 = vmatpush1.msra.mxu0 0.0
    %4729 = vmatprep.subr.mxu0 0.0
    %4730 = vmatpush1.msra.mxu0 0.0
    %4731 = vmatprep.subr.mxu0 0.0
    %4732 = vmatpush1.msra.mxu0 0.0
    %4733 = vmatprep.subr.mxu0 0.0
    %4734 = vmatpush1.msra.mxu0 0.0
    %4735 = vmatprep.subr.mxu0 0.0
    %4736 = vmatpush1.msra.mxu0 0.0
    %4737 = vmatprep.subr.mxu0 0.0
    %4738 = vmatpush1.msra.mxu0 0.0
    %4739 = vmatprep.subr.mxu0 0.0
    %4740 = vmatpush1.msra.mxu0 0.0
    %4741 = vmatprep.subr.mxu0 0.0
    %4742 = vmatpush1.msra.mxu0 0.0
    %4743 = vmatprep.subr.mxu0 0.0
    %4744 = vmatpush1.msra.mxu0 0.0
    %4745 = vmatprep.subr.mxu0 0.0
    %4746 = vmatpush1.msra.mxu0 0.0
    %4747 = vmatprep.mubr.f32.mxu0 0.0
    %4748 = vmatmul.mubr.f32.gmra.mrb[0].mxu0 %v4681
    %v4749 = vpop.f32.mrb[0].mxu0
    %v4750 = vadd.f32 0.0, %v4749
    %v4751 = vpop.f32.mrb[0].mxu0
    %4752 = vdwg.mxu0
    %v4754 = vrot.slane %v4750, 4
    %v4756 = vadd.f32 %v4042, %v4754
    %v4757 = vxor.u32 %v4756, 2147483648
    %v4758 = vmul.f32 %v4757, 1.442695
    %v4759 = vpow.pop %v4758
    %v4760 = vadd.f32 %v4759, 1.0
    %v4761 = vrcp.pop %v4760
    %v4762 = vmul.f32 1.0, %v4761
    %v4763 = vtanh.pop %v4756
    %v4765 = vrot.slane %v4670, 6
    %v4767 = vmul.f32 %v4762, %v4765
    %4769 = vrot.lane.b32.xlu0 %v4763, 64
    %v4770 = vpop.permute.xlu0 %4769
    %v4772 = vmul.f32 %v4762, %v4770
    %4774 = vrot.lane.b32.xlu0 %v4772, 32
    %v4775 = vpop.permute.xlu0 %4774
    %v4777 = vadd.f32 %v4767, %v4775
    %v4778 = vtanh.pop %v4777
    %4780 = vrot.lane.b32.xlu0 %v4778, 64
    %v4781 = vpop.permute.xlu0 %4780
    %v4783 = vmul.f32 %v4762, %v4781
    %v4785 = vrot.slane %v4783, 4
    %4786 = vrot.lane.b32.xlu0 %v4785, 32
    %v4787 = vpop.permute.xlu0 %4786
    %v4788 = vsel %vm3965, %v4787, 0
    %4790 = vmatprep.subr.mxu0 0.0
    %4791 = vmatpush1.msra.mxu0 %v4045
    %4792 = vmatprep.subr.mxu0 0.0
    %4793 = vmatpush1.msra.mxu0 %v4046
    %4794 = vmatprep.subr.mxu0 0.0
    %4795 = vmatpush1.msra.mxu0 %v4047
    %4796 = vmatprep.subr.mxu0 0.0
    %4797 = vmatpush1.msra.mxu0 %v4048
    %4798 = vmatprep.subr.mxu0 0.0
    %4799 = vmatpush1.msra.mxu0 0.0
    %4800 = vmatprep.subr.mxu0 0.0
    %4801 = vmatpush1.msra.mxu0 0.0
    %4802 = vmatprep.subr.mxu0 0.0
    %4803 = vmatpush1.msra.mxu0 0.0
    %4804 = vmatprep.subr.mxu0 0.0
    %4805 = vmatpush1.msra.mxu0 0.0
    %4806 = vmatprep.subr.mxu0 0.0
    %4807 = vmatpush1.msra.mxu0 0.0
    %4808 = vmatprep.subr.mxu0 0.0
    %4809 = vmatpush1.msra.mxu0 0.0
    %4810 = vmatprep.subr.mxu0 0.0
    %4811 = vmatpush1.msra.mxu0 0.0
    %4812 = vmatprep.subr.mxu0 0.0
    %4813 = vmatpush1.msra.mxu0 0.0
    %4814 = vmatprep.subr.mxu0 0.0
    %4815 = vmatpush1.msra.mxu0 0.0
    %4816 = vmatprep.subr.mxu0 0.0
    %4817 = vmatpush1.msra.mxu0 0.0
    %4818 = vmatprep.subr.mxu0 0.0
    %4819 = vmatpush1.msra.mxu0 0.0
    %4820 = vmatprep.subr.mxu0 0.0
    %4821 = vmatpush1.msra.mxu0 0.0
    %4822 = vmatprep.subr.mxu0 0.0
    %4823 = vmatpush1.msra.mxu0 0.0
    %4824 = vmatprep.subr.mxu0 0.0
    %4825 = vmatpush1.msra.mxu0 0.0
    %4826 = vmatprep.subr.mxu0 0.0
    %4827 = vmatpush1.msra.mxu0 0.0
    %4828 = vmatprep.subr.mxu0 0.0
    %4829 = vmatpush1.msra.mxu0 0.0
    %4830 = vmatprep.subr.mxu0 0.0
    %4831 = vmatpush1.msra.mxu0 0.0
    %4832 = vmatprep.subr.mxu0 0.0
    %4833 = vmatpush1.msra.mxu0 0.0
    %4834 = vmatprep.subr.mxu0 0.0
    %4835 = vmatpush1.msra.mxu0 0.0
    %4836 = vmatprep.subr.mxu0 0.0
    %4837 = vmatpush1.msra.mxu0 0.0
    %4838 = vmatprep.subr.mxu0 0.0
    %4839 = vmatpush1.msra.mxu0 0.0
    %4840 = vmatprep.subr.mxu0 0.0
    %4841 = vmatpush1.msra.mxu0 0.0
    %4842 = vmatprep.subr.mxu0 0.0
    %4843 = vmatpush1.msra.mxu0 0.0
    %4844 = vmatprep.subr.mxu0 0.0
    %4845 = vmatpush1.msra.mxu0 0.0
    %4846 = vmatprep.subr.mxu0 0.0
    %4847 = vmatpush1.msra.mxu0 0.0
    %4848 = vmatprep.subr.mxu0 0.0
    %4849 = vmatpush1.msra.mxu0 0.0
    %4850 = vmatprep.subr.mxu0 0.0
    %4851 = vmatpush1.msra.mxu0 0.0
    %4852 = vmatprep.subr.mxu0 0.0
    %4853 = vmatpush1.msra.mxu0 0.0
    %4854 = vmatprep.mubr.f32.mxu0 0.0
    %4855 = vmatmul.mubr.f32.gmra.mrb[0].mxu0 %v4788
    %v4856 = vpop.f32.mrb[0].mxu0
    %v4857 = vadd.f32 0.0, %v4856
    %v4858 = vpop.f32.mrb[0].mxu0
    %4859 = vdwg.mxu0
    %v4861 = vrot.slane %v4857, 2
    %v4863 = vadd.f32 %v4042, %v4861
    %v4864 = vxor.u32 %v4863, 2147483648
    %v4865 = vmul.f32 %v4864, 1.442695
    %v4866 = vpow.pop %v4865
    %v4867 = vadd.f32 %v4866, 1.0
    %v4868 = vrcp.pop %v4867
    %v4869 = vmul.f32 1.0, %v4868
    %v4870 = vtanh.pop %v4863
    %v4872 = vrot.slane %v4777, 6
    %v4874 = vmul.f32 %v4869, %v4872
    %4876 = vrot.lane.b32.xlu0 %v4870, 64
    %v4877 = vpop.permute.xlu0 %4876
    %v4879 = vmul.f32 %v4869, %v4877
    %4881 = vrot.lane.b32.xlu0 %v4879, 32
    %v4882 = vpop.permute.xlu0 %4881
    %v4884 = vadd.f32 %v4874, %v4882
    %v4885 = vtanh.pop %v4884
    %4887 = vrot.lane.b32.xlu0 %v4885, 64
    %v4888 = vpop.permute.xlu0 %4887
    %v4890 = vmul.f32 %v4869, %v4888
    %v4891 = vld [vmem:[%s10] sm:$0xff]
    %v4892 = vld [vmem:[%s10 + $0x8] sm:$0xff]
    %v4893 = vld [vmem:[%s10 + $0x10] sm:$0xff]
    %v4894 = vld [vmem:[%s10 + $0x18] sm:$0xff]
    %v4895 = vld [vmem:[%s9] sm:$0x3]
    %v4896 = vld [vmem:[%s11] sm:$0xff]
    %v4897 = vld [vmem:[%s11 + $0x8] sm:$0xff]
    %v4898 = vld [vmem:[%s11 + $0x10] sm:$0xff]
    %v4899 = vld [vmem:[%s11 + $0x18] sm:$0xff]
    %v4901 = vsel %vm3965, %v4895, 0
    %4903 = vmatprep.subr.mxu0 0.0
    %4904 = vmatpush1.msra.mxu0 %v4896
    %4905 = vmatprep.subr.mxu0 0.0
    %4906 = vmatpush1.msra.mxu0 %v4897
    %4907 = vmatprep.subr.mxu0 0.0
    %4908 = vmatpush1.msra.mxu0 %v4898
    %4909 = vmatprep.subr.mxu0 0.0
    %4910 = vmatpush1.msra.mxu0 %v4899
    %4911 = vmatprep.subr.mxu0 0.0
    %4912 = vmatpush1.msra.mxu0 0.0
    %4913 = vmatprep.subr.mxu0 0.0
    %4914 = vmatpush1.msra.mxu0 0.0
    %4915 = vmatprep.subr.mxu0 0.0
    %4916 = vmatpush1.msra.mxu0 0.0
    %4917 = vmatprep.subr.mxu0 0.0
    %4918 = vmatpush1.msra.mxu0 0.0
    %4919 = vmatprep.subr.mxu0 0.0
    %4920 = vmatpush1.msra.mxu0 0.0
    %4921 = vmatprep.subr.mxu0 0.0
    %4922 = vmatpush1.msra.mxu0 0.0
    %4923 = vmatprep.subr.mxu0 0.0
    %4924 = vmatpush1.msra.mxu0 0.0
    %4925 = vmatprep.subr.mxu0 0.0
    %4926 = vmatpush1.msra.mxu0 0.0
    %4927 = vmatprep.subr.mxu0 0.0
    %4928 = vmatpush1.msra.mxu0 0.0
    %4929 = vmatprep.subr.mxu0 0.0
    %4930 = vmatpush1.msra.mxu0 0.0
    %4931 = vmatprep.subr.mxu0 0.0
    %4932 = vmatpush1.msra.mxu0 0.0
    %4933 = vmatprep.subr.mxu0 0.0
    %4934 = vmatpush1.msra.mxu0 0.0
    %4935 = vmatprep.subr.mxu0 0.0
    %4936 = vmatpush1.msra.mxu0 0.0
    %4937 = vmatprep.subr.mxu0 0.0
    %4938 = vmatpush1.msra.mxu0 0.0
    %4939 = vmatprep.subr.mxu0 0.0
    %4940 = vmatpush1.msra.mxu0 0.0
    %4941 = vmatprep.subr.mxu0 0.0
    %4942 = vmatpush1.msra.mxu0 0.0
    %4943 = vmatprep.subr.mxu0 0.0
    %4944 = vmatpush1.msra.mxu0 0.0
    %4945 = vmatprep.subr.mxu0 0.0
    %4946 = vmatpush1.msra.mxu0 0.0
    %4947 = vmatprep.subr.mxu0 0.0
    %4948 = vmatpush1.msra.mxu0 0.0
    %4949 = vmatprep.subr.mxu0 0.0
    %4950 = vmatpush1.msra.mxu0 0.0
    %4951 = vmatprep.subr.mxu0 0.0
    %4952 = vmatpush1.msra.mxu0 0.0
    %4953 = vmatprep.subr.mxu0 0.0
    %4954 = vmatpush1.msra.mxu0 0.0
    %4955 = vmatprep.subr.mxu0 0.0
    %4956 = vmatpush1.msra.mxu0 0.0
    %4957 = vmatprep.subr.mxu0 0.0
    %4958 = vmatpush1.msra.mxu0 0.0
    %4959 = vmatprep.subr.mxu0 0.0
    %4960 = vmatpush1.msra.mxu0 0.0
    %4961 = vmatprep.subr.mxu0 0.0
    %4962 = vmatpush1.msra.mxu0 0.0
    %4963 = vmatprep.subr.mxu0 0.0
    %4964 = vmatpush1.msra.mxu0 0.0
    %4965 = vmatprep.subr.mxu0 0.0
    %4966 = vmatpush1.msra.mxu0 0.0
    %4967 = vmatprep.mubr.f32.mxu0 0.0
    %4968 = vmatmul.mubr.f32.gmra.mrb[0].mxu0 %v4901
    %v4969 = vpop.f32.mrb[0].mxu0
    %v4970 = vadd.f32 0.0, %v4969
    %v4971 = vpop.f32.mrb[0].mxu0
    %4972 = vdwg.mxu0
    %v4974 = vrot.slane %v4890, 6
    %4975 = vrot.lane.b32.xlu0 %v4974, 32
    %v4976 = vpop.permute.xlu0 %4975
    %v4977 = vsel %vm3965, %v4976, 0
    %4979 = vmatprep.subr.mxu0 0.0
    %4980 = vmatpush1.msra.mxu0 %v4891
    %4981 = vmatprep.subr.mxu0 0.0
    %4982 = vmatpush1.msra.mxu0 %v4892
    %4983 = vmatprep.subr.mxu0 0.0
    %4984 = vmatpush1.msra.mxu0 %v4893
    %4985 = vmatprep.subr.mxu0 0.0
    %4986 = vmatpush1.msra.mxu0 %v4894
    %4987 = vmatprep.subr.mxu0 0.0
    %4988 = vmatpush1.msra.mxu0 0.0
    %4989 = vmatprep.subr.mxu0 0.0
    %4990 = vmatpush1.msra.mxu0 0.0
    %4991 = vmatprep.subr.mxu0 0.0
    %4992 = vmatpush1.msra.mxu0 0.0
    %4993 = vmatprep.subr.mxu0 0.0
    %4994 = vmatpush1.msra.mxu0 0.0
    %4995 = vmatprep.subr.mxu0 0.0
    %4996 = vmatpush1.msra.mxu0 0.0
    %4997 = vmatprep.subr.mxu0 0.0
    %4998 = vmatpush1.msra.mxu0 0.0
    %4999 = vmatprep.subr.mxu0 0.0
    %5000 = vmatpush1.msra.mxu0 0.0
    %5001 = vmatprep.subr.mxu0 0.0
    %5002 = vmatpush1.msra.mxu0 0.0
    %5003 = vmatprep.subr.mxu0 0.0
    %5004 = vmatpush1.msra.mxu0 0.0
    %5005 = vmatprep.subr.mxu0 0.0
    %5006 = vmatpush1.msra.mxu0 0.0
    %5007 = vmatprep.subr.mxu0 0.0
    %5008 = vmatpush1.msra.mxu0 0.0
    %5009 = vmatprep.subr.mxu0 0.0
    %5010 = vmatpush1.msra.mxu0 0.0
    %5011 = vmatprep.subr.mxu0 0.0
    %5012 = vmatpush1.msra.mxu0 0.0
    %5013 = vmatprep.subr.mxu0 0.0
    %5014 = vmatpush1.msra.mxu0 0.0
    %5015 = vmatprep.subr.mxu0 0.0
    %5016 = vmatpush1.msra.mxu0 0.0
    %5017 = vmatprep.subr.mxu0 0.0
    %5018 = vmatpush1.msra.mxu0 0.0
    %5019 = vmatprep.subr.mxu0 0.0
    %5020 = vmatpush1.msra.mxu0 0.0
    %5021 = vmatprep.subr.mxu0 0.0
    %5022 = vmatpush1.msra.mxu0 0.0
    %5023 = vmatprep.subr.mxu0 0.0
    %5024 = vmatpush1.msra.mxu0 0.0
    %5025 = vmatprep.subr.mxu0 0.0
    %5026 = vmatpush1.msra.mxu0 0.0
    %5027 = vmatprep.subr.mxu0 0.0
    %5028 = vmatpush1.msra.mxu0 0.0
    %5029 = vmatprep.subr.mxu0 0.0
    %5030 = vmatpush1.msra.mxu0 0.0
    %5031 = vmatprep.subr.mxu0 0.0
    %5032 = vmatpush1.msra.mxu0 0.0
    %5033 = vmatprep.subr.mxu0 0.0
    %5034 = vmatpush1.msra.mxu0 0.0
    %5035 = vmatprep.subr.mxu0 0.0
    %5036 = vmatpush1.msra.mxu0 0.0
    %5037 = vmatprep.subr.mxu0 0.0
    %5038 = vmatpush1.msra.mxu0 0.0
    %5039 = vmatprep.subr.mxu0 0.0
    %5040 = vmatpush1.msra.mxu0 0.0
    %5041 = vmatprep.subr.mxu0 0.0
    %5042 = vmatpush1.msra.mxu0 0.0
    %5043 = vmatprep.mubr.f32.mxu0 0.0
    %5044 = vmatmul.mubr.f32.gmra.mrb[0].mxu0 %v4977
    %v5045 = vpop.f32.mrb[0].mxu0
    %v5046 = vadd.f32 %v4970, %v5045
    %v5047 = vpop.f32.mrb[0].mxu0
    %5048 = vdwg.mxu0
    %v5049 = vld [vmem:[%s12] sm:$0x1]
    %v5051 = vlaneseq
    %v5052 = vshrl.u32 %v5051, 7
    %v5053 = vsub.s32 0, %v5052
    %v5054 = vrot.slane %v5049, %v5053
    %v5056 = vadd.f32 %v5046, %v5054
    %vm5057 = vcmask 25600
    %5058 = vst.msk [vmem:[#allocation2] sm:$0x3] %vm5057, %v5056
    // Predicated region
    $region54: #{tpu_custom_call.1} parent=1 // pred_check
      _
    $region55: #{tpu_custom_call.1} parent=1 // pred_check_branch
      %5060 = sbr.rel (0) target = $region57
    $region56: #{tpu_custom_call.1} parent=1 // pred_region
      %s5062 = ssub.s32 32, 32
      %5063 = vsyncadd [#allocation3], %s5062
      %s5065 = sshll.u32 [#allocation2], 4
      %s5066 = int_to_ptr.vmem [resolvable:$true] %s5065
      %5068 = dma.vmem_to_hbm [thread:$0]  %s5066, 32, %s13, [#allocation3]
    $region57: #{tpu_custom_call.1} parent=1 // pred_fallthru
      _
    // Predicated region
    $region58: #{tpu_custom_call.1} parent=1 // pred_check
      _
    $region59: #{tpu_custom_call.1} parent=1 // pred_check_branch
      %5070 = sbr.rel (0) target = $region61
    $region60: #{tpu_custom_call.1} parent=1 // pred_region
      %5071 = dma.done [#allocation3], 32
    $region61: #{tpu_custom_call.1} parent=1 // pred_fallthru
      _
    %5072 = vsyncpa [#allocation3], 1

</llo_original>
